<compile_context>
chip_gen: v5e
topology: v5e:2x2
jax: 0.10.0
libtpu: 0.0.40
codegen_flags: <defaults>
</compile_context>

<pallas_src>
import functools

import jax
import jax.numpy as jnp
from jax.experimental import pallas as pl
from jax.experimental.pallas import tpu as pltpu


# ------------------------------ dot helpers ---------------------------------

def _bf16_dot(a, b):
    """a @ b with bf16 operands, f32 accumulation (MXU-native)."""
    return jnp.dot(a.astype(jnp.bfloat16), b.astype(jnp.bfloat16),
                   preferred_element_type=jnp.float32)


def _bf16_dot_t(a, b):
    """a @ b.T (rhs-transposed dot_general) with bf16 operands, f32 accum."""
    return jax.lax.dot_general(
        a.astype(jnp.bfloat16), b.astype(jnp.bfloat16),
        (((1,), (1,)), ((), ())), preferred_element_type=jnp.float32)


# ------------------------------ GATConv kernel ------------------------------

def _gat_layer_kernel(h_full_ref, h_tile_ref, adj_ref, w_ref, al_t_ref, ar_ref,
                      b_ref, o_ref, *, num_heads, out_feats, negative_slope,
                      apply_relu):
    h_all = h_full_ref[...]          # (N, Din)  all source nodes
    h_dst = h_tile_ref[...]          # (T, Din)  destination-row tile
    adj   = adj_ref[...]             # (T, N)    adj[dst, src]
    w     = w_ref[...]               # (Din, H*F)
    al_t  = al_t_ref[...]            # (HP, H*F) block-diag attn_l (row-major heads)
    ar    = ar_ref[...]              # (H*F, HP) block-diag attn_r
    bias  = b_ref[...]               # (1, H*F)

    # shared linear projection (fc has no bias in DGL GATConv)
    z_src = _bf16_dot(h_all, w)      # (N, H*F)
    z_dst = _bf16_dot(h_dst, w)      # (T, H*F)

    # per-head attention logits:
    #   el_rows[h, s] = <a_l[h], z_src[s, h*F:(h+1)*F]>   (source along lanes)
    #   er[t, h]      = <a_r[h], z_dst[t, h*F:(h+1)*F]>   (dest along sublanes)
    el_rows = _bf16_dot_t(al_t, z_src)   # (HP, N)
    er      = _bf16_dot(z_dst, ar)       # (T, HP)

    edge_mask = adj > 0.5
    edge_f = edge_mask.astype(jnp.float32)

    for hd in range(num_heads):
        e = er[:, hd:hd + 1] + el_rows[hd:hd + 1, :]          # (T, N)
        e = jnp.where(e >= 0.0, e, negative_slope * e)        # LeakyReLU
        e = jnp.where(edge_mask, e, jnp.float32(-1e30))       # mask non-edges
        e = e - jnp.max(e, axis=-1, keepdims=True)
        p = jnp.exp(e) * edge_f
        denom = jnp.sum(p, axis=-1, keepdims=True)
        p = p * pl.reciprocal(denom + jnp.float32(1e-20), approx=True)

        lo = hd * out_feats
        hi = lo + out_feats
        out_h = _bf16_dot(p, z_src[:, lo:hi])                 # (T, F)
        out_h = out_h + bias[:, lo:hi]
        if apply_relu:
            out_h = jnp.maximum(out_h, 0.0)
        o_ref[:, lo:hi] = out_h


def gat_conv(h, adj, p, *, num_heads, out_feats, tile_n, apply_relu=True,
             negative_slope=0.2):
    N, din = h.shape
    hf = num_heads * out_feats
    hp = p['attn_l_t'].shape[0]
    assert N % tile_n == 0 and (tile_n % 8 == 0 or tile_n == N)
    grid = (N // tile_n,)

    kernel = functools.partial(
        _gat_layer_kernel, num_heads=num_heads, out_feats=out_feats,
        negative_slope=negative_slope, apply_relu=apply_relu)

    return pl.pallas_call(
        kernel,
        out_shape=jax.ShapeDtypeStruct((N, hf), jnp.float32),
        grid=grid,
        in_specs=[
            pl.BlockSpec((N, din),     lambda i: (0, 0)),   # h (all sources)
            pl.BlockSpec((tile_n, din), lambda i: (i, 0)),  # h (dst tile)
            pl.BlockSpec((tile_n, N),  lambda i: (i, 0)),   # adj rows for dst tile
            pl.BlockSpec((din, hf),    lambda i: (0, 0)),   # W
            pl.BlockSpec((hp, hf),     lambda i: (0, 0)),   # attn_l (block, transposed)
            pl.BlockSpec((hf, hp),     lambda i: (0, 0)),   # attn_r (block)
            pl.BlockSpec((1, hf),      lambda i: (0, 0)),   # bias
        ],
        out_specs=pl.BlockSpec((tile_n, hf), lambda i: (i, 0)),
        compiler_params=pltpu.CompilerParams(
            dimension_semantics=("parallel",)),
    )(h, h, adj, p['w'], p['attn_l_t'], p['attn_r'], p['bias'])


# ------------------------------ GraphConv kernel ----------------------------

def _graphconv_kernel(h_ref, adj_full_ref, adj_tile_ref, w_ref, b_ref, o_ref):
    h        = h_ref[...]          # (N, Din)
    adj_full = adj_full_ref[...]   # (N, N)   for source out-degrees
    adj      = adj_tile_ref[...]   # (T, N)   rows for this dst tile
    w        = w_ref[...]          # (Din, C)
    bias     = b_ref[...]          # (1, C)

    # DGL GraphConv, norm='both': D_dst^{-1/2} A D_src^{-1/2} (h W) + b
    deg_out = jnp.sum(adj_full, axis=0, keepdims=True)          # (1, N)
    norm_src = jax.lax.rsqrt(jnp.maximum(deg_out, 1.0))
    deg_in = jnp.sum(adj, axis=1, keepdims=True)                 # (T, 1)
    norm_dst = jax.lax.rsqrt(jnp.maximum(deg_in, 1.0))

    hw = _bf16_dot(h, w)                                         # (N, C)
    agg = _bf16_dot(adj * norm_src, hw)                          # (T, C)
    o_ref[...] = agg * norm_dst + bias


def graph_conv(h, adj, w, b, *, tile_n):
    N, din = h.shape
    c = w.shape[1]
    assert N % tile_n == 0 and (tile_n % 8 == 0 or tile_n == N)
    grid = (N // tile_n,)
    return pl.pallas_call(
        _graphconv_kernel,
        out_shape=jax.ShapeDtypeStruct((N, c), jnp.float32),
        grid=grid,
        in_specs=[
            pl.BlockSpec((N, din),      lambda i: (0, 0)),
            pl.BlockSpec((N, N),        lambda i: (0, 0)),
            pl.BlockSpec((tile_n, N),   lambda i: (i, 0)),
            pl.BlockSpec((din, c),      lambda i: (0, 0)),
            pl.BlockSpec((1, c),        lambda i: (0, 0)),
        ],
        out_specs=pl.BlockSpec((tile_n, c), lambda i: (i, 0)),
        compiler_params=pltpu.CompilerParams(
            dimension_semantics=("parallel",)),
    )(h, adj, adj, w, b)


# ------------------------------ parameters ----------------------------------

def init_params(key, in_feats, h_feats, num_classes, num_heads, n_hidden):
    hf = num_heads * h_feats
    hp = ((num_heads + 7) // 8) * 8          # pad head axis to a full sublane group
    gat_in_dims = [in_feats] + [hf] * n_hidden
    keys = jax.random.split(key, len(gat_in_dims) + 1)
    eye_h = jnp.eye(num_heads, dtype=jnp.float32)

    gat_layers = []
    for li, din in enumerate(gat_in_dims):
        k_w, k_al, k_ar = jax.random.split(keys[li], 3)
        w = (2.0 / (din + hf)) ** 0.5 * jax.random.normal(k_w, (din, hf), jnp.float32)
        a_l = 0.2 * jax.random.normal(k_al, (num_heads, h_feats), jnp.float32)
        a_r = 0.2 * jax.random.normal(k_ar, (num_heads, h_feats), jnp.float32)
        # block-diagonal layouts: per-head <a, z_head> reductions become MXU matmuls
        al_block = (eye_h[:, None, :] * a_l[:, :, None]).reshape(hf, num_heads)  # (HF, H)
        ar_block = (eye_h[:, None, :] * a_r[:, :, None]).reshape(hf, num_heads)  # (HF, H)
        attn_l_t = jnp.zeros((hp, hf), jnp.float32).at[:num_heads, :].set(al_block.T)
        attn_r = jnp.zeros((hf, hp), jnp.float32).at[:, :num_heads].set(ar_block)
        bias = jnp.zeros((1, hf), jnp.float32)
        gat_layers.append({'w': w, 'attn_l_t': attn_l_t, 'attn_r': attn_r,
                           'bias': bias})

    k_gc = keys[-1]
    gc_w = (2.0 / (hf + num_classes)) ** 0.5 * jax.random.normal(
        k_gc, (hf, num_classes), jnp.float32)
    gc_b = jnp.zeros((1, num_classes), jnp.float32)
    return {'gat': gat_layers, 'gc_w': gc_w, 'gc_b': gc_b}


# ------------------------------ forward pass --------------------------------

def gat_forward(params, adj, feat, *, num_heads, h_feats, tile_n):
    # feat_drop is a no-op at inference.
    h = feat
    for lp in params['gat']:
        h = gat_conv(h, adj, lp, num_heads=num_heads, out_feats=h_feats,
                     tile_n=tile_n, apply_relu=True)
    # final GraphConv, returned without activation (matches reference)
    return graph_conv(h, adj, params['gc_w'], params['gc_b'], tile_n=tile_n)


# ---------------------------------- main ------------------------------------

if __name__ == "__main__":
    key = jax.random.PRNGKey(0)
    N = 64                 # nodes
    IN_FEATS = 16
    H_FEATS = 8
    NUM_HEADS = 4
    NUM_CLASSES = 8
    N_HIDDEN = 2
    TILE_N = 32            # destination-row tile (parallel grid axis)

    kp, ka, kf = jax.random.split(key, 3)
    params = init_params(kp, IN_FEATS, H_FEATS, NUM_CLASSES, NUM_HEADS, N_HIDDEN)

    # random undirected graph + self-loops (every node has in-degree >= 1)
    u = jax.random.uniform(ka, (N, N))
    adj = (u < 0.15).astype(jnp.float32)
    adj = jnp.maximum(adj, adj.T)
    adj = jnp.maximum(adj, jnp.eye(N, dtype=jnp.float32))

    feat = jax.random.normal(kf, (N, IN_FEATS), jnp.float32)

    fwd = jax.jit(functools.partial(gat_forward, num_heads=NUM_HEADS,
                                    h_feats=H_FEATS, tile_n=TILE_N))
    out = fwd(params, adj, feat)
    out = jax.block_until_ready(out)
    assert out.shape == (N, NUM_CLASSES) and out.dtype == jnp.float32
    print("KERNEL_OK")
</pallas_src>

<mosaic_0001>
module attributes {stable_mosaic.version = 11 : i64} {
  func.func @_gat_layer_kernel(%arg0: i32, %arg1: memref<64x16xf32, #tpu.memory_space<vmem>>, %arg2: memref<32x16xf32, #tpu.memory_space<vmem>>, %arg3: memref<32x64xf32, #tpu.memory_space<vmem>>, %arg4: memref<16x32xf32, #tpu.memory_space<vmem>>, %arg5: memref<8x32xf32, #tpu.memory_space<vmem>>, %arg6: memref<32x8xf32, #tpu.memory_space<vmem>>, %arg7: memref<1x32xf32, #tpu.memory_space<vmem>>, %arg8: memref<32x32xf32, #tpu.memory_space<vmem>>) attributes {dimension_semantics = [#tpu.dimension_semantics<parallel>], iteration_bounds = array<i64: 2>, scalar_prefetch = 0 : i64, scratch_operands = 0 : i64, tpu.core_type = #tpu.core_type<tc>, window_params = [{pipeline_mode = #tpu.pipeline_mode<synchronous>, transform_indices = @transform_0, window_bounds = array<i64: 64, 16>}, {transform_indices = @transform_1, window_bounds = array<i64: 32, 16>}, {transform_indices = @transform_2, window_bounds = array<i64: 32, 64>}, {pipeline_mode = #tpu.pipeline_mode<synchronous>, transform_indices = @transform_3, window_bounds = array<i64: 16, 32>}, {pipeline_mode = #tpu.pipeline_mode<synchronous>, transform_indices = @transform_4, window_bounds = array<i64: 8, 32>}, {pipeline_mode = #tpu.pipeline_mode<synchronous>, transform_indices = @transform_5, window_bounds = array<i64: 32, 8>}, {pipeline_mode = #tpu.pipeline_mode<synchronous>, transform_indices = @transform_6, window_bounds = array<i64: 1, 32>}, {transform_indices = @transform_7, window_bounds = array<i64: 32, 32>}]} {
    %c0 = arith.constant 0 : index
    %c0_0 = arith.constant 0 : index
    %0 = vector.load %arg1[%c0, %c0_0] : memref<64x16xf32, #tpu.memory_space<vmem>>, vector<64x16xf32>
    %c0_1 = arith.constant 0 : index
    %c0_2 = arith.constant 0 : index
    %1 = vector.load %arg2[%c0_1, %c0_2] : memref<32x16xf32, #tpu.memory_space<vmem>>, vector<32x16xf32>
    %c0_3 = arith.constant 0 : index
    %c0_4 = arith.constant 0 : index
    %2 = vector.load %arg3[%c0_3, %c0_4] : memref<32x64xf32, #tpu.memory_space<vmem>>, vector<32x64xf32>
    %c0_5 = arith.constant 0 : index
    %c0_6 = arith.constant 0 : index
    %3 = vector.load %arg4[%c0_5, %c0_6] : memref<16x32xf32, #tpu.memory_space<vmem>>, vector<16x32xf32>
    %c0_7 = arith.constant 0 : index
    %c0_8 = arith.constant 0 : index
    %4 = vector.load %arg5[%c0_7, %c0_8] : memref<8x32xf32, #tpu.memory_space<vmem>>, vector<8x32xf32>
    %c0_9 = arith.constant 0 : index
    %c0_10 = arith.constant 0 : index
    %5 = vector.load %arg6[%c0_9, %c0_10] : memref<32x8xf32, #tpu.memory_space<vmem>>, vector<32x8xf32>
    %c0_11 = arith.constant 0 : index
    %c0_12 = arith.constant 0 : index
    %6 = vector.load %arg7[%c0_11, %c0_12] : memref<1x32xf32, #tpu.memory_space<vmem>>, vector<1x32xf32>
    %7 = arith.truncf %0 : vector<64x16xf32> to vector<64x16xbf16>
    %8 = arith.truncf %3 : vector<16x32xf32> to vector<16x32xbf16>
    %cst = arith.constant dense<0.000000e+00> : vector<64x32xf32>
    %9 = tpu.matmul %7, %8, %cst {dimension_numbers = #tpu.dot_dimension_numbers<[1], [0], [0], [1], [0, 0, 1, 1], [], []>} : vector<64x16xbf16>, vector<16x32xbf16>, vector<64x32xf32> -> vector<64x32xf32>
    %10 = arith.truncf %1 : vector<32x16xf32> to vector<32x16xbf16>
    %11 = arith.truncf %3 : vector<16x32xf32> to vector<16x32xbf16>
    %cst_13 = arith.constant dense<0.000000e+00> : vector<32x32xf32>
    %12 = tpu.matmul %10, %11, %cst_13 {dimension_numbers = #tpu.dot_dimension_numbers<[1], [0], [0], [1], [0, 0, 1, 1], [], []>} : vector<32x16xbf16>, vector<16x32xbf16>, vector<32x32xf32> -> vector<32x32xf32>
    %13 = arith.truncf %4 : vector<8x32xf32> to vector<8x32xbf16>
    %14 = arith.truncf %9 : vector<64x32xf32> to vector<64x32xbf16>
    %cst_14 = arith.constant dense<0.000000e+00> : vector<8x64xf32>
    %15 = tpu.matmul %13, %14, %cst_14 {dimension_numbers = #tpu.dot_dimension_numbers<[1], [1], [0], [0], [0, 0, 1, 0], [], []>} : vector<8x32xbf16>, vector<64x32xbf16>, vector<8x64xf32> -> vector<8x64xf32>
    %16 = arith.truncf %12 : vector<32x32xf32> to vector<32x32xbf16>
    %17 = arith.truncf %5 : vector<32x8xf32> to vector<32x8xbf16>
    %cst_15 = arith.constant dense<0.000000e+00> : vector<32x8xf32>
    %18 = tpu.matmul %16, %17, %cst_15 {dimension_numbers = #tpu.dot_dimension_numbers<[1], [0], [0], [1], [0, 0, 1, 1], [], []>} : vector<32x32xbf16>, vector<32x8xbf16>, vector<32x8xf32> -> vector<32x8xf32>
    %cst_16 = arith.constant 5.000000e-01 : f32
    %19 = vector.broadcast %cst_16 : f32 to vector<32x64xf32>
    %20 = arith.cmpf ogt, %2, %19 : vector<32x64xf32>
    %21 = arith.extui %20 : vector<32x64xi1> to vector<32x64xi32>
    %22 = arith.sitofp %21 : vector<32x64xi32> to vector<32x64xf32>
    %23 = vector.extract_strided_slice %18 {offsets = [0, 0], sizes = [32, 1], strides = [1, 1]} : vector<32x8xf32> to vector<32x1xf32>
    %24 = vector.extract_strided_slice %15 {offsets = [0, 0], sizes = [1, 64], strides = [1, 1]} : vector<8x64xf32> to vector<1x64xf32>
    %25 = vector.broadcast %23 : vector<32x1xf32> to vector<32x64xf32>
    %26 = vector.broadcast %24 : vector<1x64xf32> to vector<32x64xf32>
    %27 = arith.addf %25, %26 : vector<32x64xf32>
    %cst_17 = arith.constant 0.000000e+00 : f32
    %28 = vector.broadcast %cst_17 : f32 to vector<32x64xf32>
    %29 = arith.cmpf oge, %27, %28 : vector<32x64xf32>
    %cst_18 = arith.constant 2.000000e-01 : f32
    %30 = vector.broadcast %cst_18 : f32 to vector<32x64xf32>
    %31 = arith.mulf %30, %27 : vector<32x64xf32>
    %32 = arith.select %29, %27, %31 : vector<32x64xi1>, vector<32x64xf32>
    %cst_19 = arith.constant -1.000000e+30 : f32
    %33 = vector.broadcast %cst_19 : f32 to vector<32x64xf32>
    %34 = arith.select %20, %32, %33 : vector<32x64xi1>, vector<32x64xf32>
    %cst_20 = arith.constant dense<0xFF800000> : vector<32xf32>
    %35 = vector.multi_reduction <maximumf>, %34, %cst_20 [1] : vector<32x64xf32> to vector<32xf32>
    %36 = vector.shape_cast %35 : vector<32xf32> to vector<32x1xf32>
    %37 = vector.broadcast %36 : vector<32x1xf32> to vector<32x64xf32>
    %38 = arith.subf %34, %37 : vector<32x64xf32>
    %39 = math.exp %38 : vector<32x64xf32>
    %40 = arith.mulf %39, %22 : vector<32x64xf32>
    %cst_21 = arith.constant dense<0.000000e+00> : vector<32xf32>
    %41 = vector.multi_reduction <add>, %40, %cst_21 [1] : vector<32x64xf32> to vector<32xf32>
    %42 = vector.shape_cast %41 : vector<32xf32> to vector<32x1xf32>
    %cst_22 = arith.constant 9.99999968E-21 : f32
    %43 = vector.broadcast %cst_22 : f32 to vector<32x1xf32>
    %44 = arith.addf %42, %43 : vector<32x1xf32>
    %45 = tpu.reciprocal %44 {approx = true} : vector<32x1xf32> -> vector<32x1xf32>
    %46 = vector.broadcast %45 : vector<32x1xf32> to vector<32x64xf32>
    %47 = arith.mulf %40, %46 : vector<32x64xf32>
    %48 = vector.extract_strided_slice %9 {offsets = [0, 0], sizes = [64, 8], strides = [1, 1]} : vector<64x32xf32> to vector<64x8xf32>
    %49 = arith.truncf %47 : vector<32x64xf32> to vector<32x64xbf16>
    %50 = arith.truncf %48 : vector<64x8xf32> to vector<64x8xbf16>
    %cst_23 = arith.constant dense<0.000000e+00> : vector<32x8xf32>
    %51 = tpu.matmul %49, %50, %cst_23 {dimension_numbers = #tpu.dot_dimension_numbers<[1], [0], [0], [1], [0, 0, 1, 1], [], []>} : vector<32x64xbf16>, vector<64x8xbf16>, vector<32x8xf32> -> vector<32x8xf32>
    %52 = vector.extract_strided_slice %6 {offsets = [0, 0], sizes = [1, 8], strides = [1, 1]} : vector<1x32xf32> to vector<1x8xf32>
    %53 = vector.broadcast %52 : vector<1x8xf32> to vector<32x8xf32>
    %54 = arith.addf %51, %53 : vector<32x8xf32>
    %cst_24 = arith.constant 0.000000e+00 : f32
    %55 = vector.broadcast %cst_24 : f32 to vector<32x8xf32>
    %56 = arith.maximumf %54, %55 : vector<32x8xf32>
    %c0_25 = arith.constant 0 : index
    %c0_26 = arith.constant 0 : index
    %57 = vector.load %arg8[%c0_25, %c0_26] : memref<32x32xf32, #tpu.memory_space<vmem>>, vector<32x8xf32>
    tpu.vector_store %arg8[%c0_25, %c0_26], %56 {strides = array<i32>} : memref<32x32xf32, #tpu.memory_space<vmem>>, vector<32x8xf32>,
    %58 = vector.extract_strided_slice %18 {offsets = [0, 1], sizes = [32, 1], strides = [1, 1]} : vector<32x8xf32> to vector<32x1xf32>
    %59 = vector.extract_strided_slice %15 {offsets = [1, 0], sizes = [1, 64], strides = [1, 1]} : vector<8x64xf32> to vector<1x64xf32>
    %60 = vector.broadcast %58 : vector<32x1xf32> to vector<32x64xf32>
    %61 = vector.broadcast %59 : vector<1x64xf32> to vector<32x64xf32>
    %62 = arith.addf %60, %61 : vector<32x64xf32>
    %cst_27 = arith.constant 0.000000e+00 : f32
    %63 = vector.broadcast %cst_27 : f32 to vector<32x64xf32>
    %64 = arith.cmpf oge, %62, %63 : vector<32x64xf32>
    %cst_28 = arith.constant 2.000000e-01 : f32
    %65 = vector.broadcast %cst_28 : f32 to vector<32x64xf32>
    %66 = arith.mulf %65, %62 : vector<32x64xf32>
    %67 = arith.select %64, %62, %66 : vector<32x64xi1>, vector<32x64xf32>
    %cst_29 = arith.constant -1.000000e+30 : f32
    %68 = vector.broadcast %cst_29 : f32 to vector<32x64xf32>
    %69 = arith.select %20, %67, %68 : vector<32x64xi1>, vector<32x64xf32>
    %cst_30 = arith.constant dense<0xFF800000> : vector<32xf32>
    %70 = vector.multi_reduction <maximumf>, %69, %cst_30 [1] : vector<32x64xf32> to vector<32xf32>
    %71 = vector.shape_cast %70 : vector<32xf32> to vector<32x1xf32>
    %72 = vector.broadcast %71 : vector<32x1xf32> to vector<32x64xf32>
    %73 = arith.subf %69, %72 : vector<32x64xf32>
    %74 = math.exp %73 : vector<32x64xf32>
    %75 = arith.mulf %74, %22 : vector<32x64xf32>
    %cst_31 = arith.constant dense<0.000000e+00> : vector<32xf32>
    %76 = vector.multi_reduction <add>, %75, %cst_31 [1] : vector<32x64xf32> to vector<32xf32>
    %77 = vector.shape_cast %76 : vector<32xf32> to vector<32x1xf32>
    %cst_32 = arith.constant 9.99999968E-21 : f32
    %78 = vector.broadcast %cst_32 : f32 to vector<32x1xf32>
    %79 = arith.addf %77, %78 : vector<32x1xf32>
    %80 = tpu.reciprocal %79 {approx = true} : vector<32x1xf32> -> vector<32x1xf32>
    %81 = vector.broadcast %80 : vector<32x1xf32> to vector<32x64xf32>
    %82 = arith.mulf %75, %81 : vector<32x64xf32>
    %83 = vector.extract_strided_slice %9 {offsets = [0, 8], sizes = [64, 8], strides = [1, 1]} : vector<64x32xf32> to vector<64x8xf32>
    %84 = arith.truncf %82 : vector<32x64xf32> to vector<32x64xbf16>
    %85 = arith.truncf %83 : vector<64x8xf32> to vector<64x8xbf16>
    %cst_33 = arith.constant dense<0.000000e+00> : vector<32x8xf32>
    %86 = tpu.matmul %84, %85, %cst_33 {dimension_numbers = #tpu.dot_dimension_numbers<[1], [0], [0], [1], [0, 0, 1, 1], [], []>} : vector<32x64xbf16>, vector<64x8xbf16>, vector<32x8xf32> -> vector<32x8xf32>
    %87 = vector.extract_strided_slice %6 {offsets = [0, 8], sizes = [1, 8], strides = [1, 1]} : vector<1x32xf32> to vector<1x8xf32>
    %88 = vector.broadcast %87 : vector<1x8xf32> to vector<32x8xf32>
    %89 = arith.addf %86, %88 : vector<32x8xf32>
    %cst_34 = arith.constant 0.000000e+00 : f32
    %90 = vector.broadcast %cst_34 : f32 to vector<32x8xf32>
    %91 = arith.maximumf %89, %90 : vector<32x8xf32>
    %c0_35 = arith.constant 0 : index
    %c8 = arith.constant 8 : index
    %92 = vector.load %arg8[%c0_35, %c8] : memref<32x32xf32, #tpu.memory_space<vmem>>, vector<32x8xf32>
    tpu.vector_store %arg8[%c0_35, %c8], %91 {strides = array<i32>} : memref<32x32xf32, #tpu.memory_space<vmem>>, vector<32x8xf32>,
    %93 = vector.extract_strided_slice %18 {offsets = [0, 2], sizes = [32, 1], strides = [1, 1]} : vector<32x8xf32> to vector<32x1xf32>
    %94 = vector.extract_strided_slice %15 {offsets = [2, 0], sizes = [1, 64], strides = [1, 1]} : vector<8x64xf32> to vector<1x64xf32>
    %95 = vector.broadcast %93 : vector<32x1xf32> to vector<32x64xf32>
    %96 = vector.broadcast %94 : vector<1x64xf32> to vector<32x64xf32>
    %97 = arith.addf %95, %96 : vector<32x64xf32>
    %cst_36 = arith.constant 0.000000e+00 : f32
    %98 = vector.broadcast %cst_36 : f32 to vector<32x64xf32>
    %99 = arith.cmpf oge, %97, %98 : vector<32x64xf32>
    %cst_37 = arith.constant 2.000000e-01 : f32
    %100 = vector.broadcast %cst_37 : f32 to vector<32x64xf32>
    %101 = arith.mulf %100, %97 : vector<32x64xf32>
    %102 = arith.select %99, %97, %101 : vector<32x64xi1>, vector<32x64xf32>
    %cst_38 = arith.constant -1.000000e+30 : f32
    %103 = vector.broadcast %cst_38 : f32 to vector<32x64xf32>
    %104 = arith.select %20, %102, %103 : vector<32x64xi1>, vector<32x64xf32>
    %cst_39 = arith.constant dense<0xFF800000> : vector<32xf32>
    %105 = vector.multi_reduction <maximumf>, %104, %cst_39 [1] : vector<32x64xf32> to vector<32xf32>
    %106 = vector.shape_cast %105 : vector<32xf32> to vector<32x1xf32>
    %107 = vector.broadcast %106 : vector<32x1xf32> to vector<32x64xf32>
    %108 = arith.subf %104, %107 : vector<32x64xf32>
    %109 = math.exp %108 : vector<32x64xf32>
    %110 = arith.mulf %109, %22 : vector<32x64xf32>
    %cst_40 = arith.constant dense<0.000000e+00> : vector<32xf32>
    %111 = vector.multi_reduction <add>, %110, %cst_40 [1] : vector<32x64xf32> to vector<32xf32>
    %112 = vector.shape_cast %111 : vector<32xf32> to vector<32x1xf32>
    %cst_41 = arith.constant 9.99999968E-21 : f32
    %113 = vector.broadcast %cst_41 : f32 to vector<32x1xf32>
    %114 = arith.addf %112, %113 : vector<32x1xf32>
    %115 = tpu.reciprocal %114 {approx = true} : vector<32x1xf32> -> vector<32x1xf32>
    %116 = vector.broadcast %115 : vector<32x1xf32> to vector<32x64xf32>
    %117 = arith.mulf %110, %116 : vector<32x64xf32>
    %118 = vector.extract_strided_slice %9 {offsets = [0, 16], sizes = [64, 8], strides = [1, 1]} : vector<64x32xf32> to vector<64x8xf32>
    %119 = arith.truncf %117 : vector<32x64xf32> to vector<32x64xbf16>
    %120 = arith.truncf %118 : vector<64x8xf32> to vector<64x8xbf16>
    %cst_42 = arith.constant dense<0.000000e+00> : vector<32x8xf32>
    %121 = tpu.matmul %119, %120, %cst_42 {dimension_numbers = #tpu.dot_dimension_numbers<[1], [0], [0], [1], [0, 0, 1, 1], [], []>} : vector<32x64xbf16>, vector<64x8xbf16>, vector<32x8xf32> -> vector<32x8xf32>
    %122 = vector.extract_strided_slice %6 {offsets = [0, 16], sizes = [1, 8], strides = [1, 1]} : vector<1x32xf32> to vector<1x8xf32>
    %123 = vector.broadcast %122 : vector<1x8xf32> to vector<32x8xf32>
    %124 = arith.addf %121, %123 : vector<32x8xf32>
    %cst_43 = arith.constant 0.000000e+00 : f32
    %125 = vector.broadcast %cst_43 : f32 to vector<32x8xf32>
    %126 = arith.maximumf %124, %125 : vector<32x8xf32>
    %c0_44 = arith.constant 0 : index
    %c16 = arith.constant 16 : index
    %127 = vector.load %arg8[%c0_44, %c16] : memref<32x32xf32, #tpu.memory_space<vmem>>, vector<32x8xf32>
    tpu.vector_store %arg8[%c0_44, %c16], %126 {strides = array<i32>} : memref<32x32xf32, #tpu.memory_space<vmem>>, vector<32x8xf32>,
    %128 = vector.extract_strided_slice %18 {offsets = [0, 3], sizes = [32, 1], strides = [1, 1]} : vector<32x8xf32> to vector<32x1xf32>
    %129 = vector.extract_strided_slice %15 {offsets = [3, 0], sizes = [1, 64], strides = [1, 1]} : vector<8x64xf32> to vector<1x64xf32>
    %130 = vector.broadcast %128 : vector<32x1xf32> to vector<32x64xf32>
    %131 = vector.broadcast %129 : vector<1x64xf32> to vector<32x64xf32>
    %132 = arith.addf %130, %131 : vector<32x64xf32>
    %cst_45 = arith.constant 0.000000e+00 : f32
    %133 = vector.broadcast %cst_45 : f32 to vector<32x64xf32>
    %134 = arith.cmpf oge, %132, %133 : vector<32x64xf32>
    %cst_46 = arith.constant 2.000000e-01 : f32
    %135 = vector.broadcast %cst_46 : f32 to vector<32x64xf32>
    %136 = arith.mulf %135, %132 : vector<32x64xf32>
    %137 = arith.select %134, %132, %136 : vector<32x64xi1>, vector<32x64xf32>
    %cst_47 = arith.constant -1.000000e+30 : f32
    %138 = vector.broadcast %cst_47 : f32 to vector<32x64xf32>
    %139 = arith.select %20, %137, %138 : vector<32x64xi1>, vector<32x64xf32>
    %cst_48 = arith.constant dense<0xFF800000> : vector<32xf32>
    %140 = vector.multi_reduction <maximumf>, %139, %cst_48 [1] : vector<32x64xf32> to vector<32xf32>
    %141 = vector.shape_cast %140 : vector<32xf32> to vector<32x1xf32>
    %142 = vector.broadcast %141 : vector<32x1xf32> to vector<32x64xf32>
    %143 = arith.subf %139, %142 : vector<32x64xf32>
    %144 = math.exp %143 : vector<32x64xf32>
    %145 = arith.mulf %144, %22 : vector<32x64xf32>
    %cst_49 = arith.constant dense<0.000000e+00> : vector<32xf32>
    %146 = vector.multi_reduction <add>, %145, %cst_49 [1] : vector<32x64xf32> to vector<32xf32>
    %147 = vector.shape_cast %146 : vector<32xf32> to vector<32x1xf32>
    %cst_50 = arith.constant 9.99999968E-21 : f32
    %148 = vector.broadcast %cst_50 : f32 to vector<32x1xf32>
    %149 = arith.addf %147, %148 : vector<32x1xf32>
    %150 = tpu.reciprocal %149 {approx = true} : vector<32x1xf32> -> vector<32x1xf32>
    %151 = vector.broadcast %150 : vector<32x1xf32> to vector<32x64xf32>
    %152 = arith.mulf %145, %151 : vector<32x64xf32>
    %153 = vector.extract_strided_slice %9 {offsets = [0, 24], sizes = [64, 8], strides = [1, 1]} : vector<64x32xf32> to vector<64x8xf32>
    %154 = arith.truncf %152 : vector<32x64xf32> to vector<32x64xbf16>
    %155 = arith.truncf %153 : vector<64x8xf32> to vector<64x8xbf16>
    %cst_51 = arith.constant dense<0.000000e+00> : vector<32x8xf32>
    %156 = tpu.matmul %154, %155, %cst_51 {dimension_numbers = #tpu.dot_dimension_numbers<[1], [0], [0], [1], [0, 0, 1, 1], [], []>} : vector<32x64xbf16>, vector<64x8xbf16>, vector<32x8xf32> -> vector<32x8xf32>
    %157 = vector.extract_strided_slice %6 {offsets = [0, 24], sizes = [1, 8], strides = [1, 1]} : vector<1x32xf32> to vector<1x8xf32>
    %158 = vector.broadcast %157 : vector<1x8xf32> to vector<32x8xf32>
    %159 = arith.addf %156, %158 : vector<32x8xf32>
    %cst_52 = arith.constant 0.000000e+00 : f32
    %160 = vector.broadcast %cst_52 : f32 to vector<32x8xf32>
    %161 = arith.maximumf %159, %160 : vector<32x8xf32>
    %c0_53 = arith.constant 0 : index
    %c24 = arith.constant 24 : index
    %162 = vector.load %arg8[%c0_53, %c24] : memref<32x32xf32, #tpu.memory_space<vmem>>, vector<32x8xf32>
    tpu.vector_store %arg8[%c0_53, %c24], %161 {strides = array<i32>} : memref<32x32xf32, #tpu.memory_space<vmem>>, vector<32x8xf32>,
    return
  }
  func.func @transform_0(%arg0: i32) -> (i32, i32) {
    %c0_i32 = arith.constant 0 : i32
    %c0_i32_0 = arith.constant 0 : i32
    %c0_i32_1 = arith.constant 0 : i32
    return %c0_i32, %c0_i32_0 : i32, i32
  }
  func.func @transform_1(%arg0: i32) -> (i32, i32) {
    %c0_i32 = arith.constant 0 : i32
    %c0_i32_0 = arith.constant 0 : i32
    return %arg0, %c0_i32 : i32, i32
  }
  func.func @transform_2(%arg0: i32) -> (i32, i32) {
    %c0_i32 = arith.constant 0 : i32
    %c0_i32_0 = arith.constant 0 : i32
    return %arg0, %c0_i32 : i32, i32
  }
  func.func @transform_3(%arg0: i32) -> (i32, i32) {
    %c0_i32 = arith.constant 0 : i32
    %c0_i32_0 = arith.constant 0 : i32
    %c0_i32_1 = arith.constant 0 : i32
    return %c0_i32, %c0_i32_0 : i32, i32
  }
  func.func @transform_4(%arg0: i32) -> (i32, i32) {
    %c0_i32 = arith.constant 0 : i32
    %c0_i32_0 = arith.constant 0 : i32
    %c0_i32_1 = arith.constant 0 : i32
    return %c0_i32, %c0_i32_0 : i32, i32
  }
  func.func @transform_5(%arg0: i32) -> (i32, i32) {
    %c0_i32 = arith.constant 0 : i32
    %c0_i32_0 = arith.constant 0 : i32
    %c0_i32_1 = arith.constant 0 : i32
    return %c0_i32, %c0_i32_0 : i32, i32
  }
  func.func @transform_6(%arg0: i32) -> (i32, i32) {
    %c0_i32 = arith.constant 0 : i32
    %c0_i32_0 = arith.constant 0 : i32
    %c0_i32_1 = arith.constant 0 : i32
    return %c0_i32, %c0_i32_0 : i32, i32
  }
  func.func @transform_7(%arg0: i32) -> (i32, i32) {
    %c0_i32 = arith.constant 0 : i32
    %c0_i32_0 = arith.constant 0 : i32
    return %arg0, %c0_i32 : i32, i32
  }
}

module attributes {stable_mosaic.version = 11 : i64} {
  func.func @_gat_layer_kernel(%arg0: i32, %arg1: memref<64x32xf32, #tpu.memory_space<vmem>>, %arg2: memref<32x32xf32, #tpu.memory_space<vmem>>, %arg3: memref<32x64xf32, #tpu.memory_space<vmem>>, %arg4: memref<32x32xf32, #tpu.memory_space<vmem>>, %arg5: memref<8x32xf32, #tpu.memory_space<vmem>>, %arg6: memref<32x8xf32, #tpu.memory_space<vmem>>, %arg7: memref<1x32xf32, #tpu.memory_space<vmem>>, %arg8: memref<32x32xf32, #tpu.memory_space<vmem>>) attributes {dimension_semantics = [#tpu.dimension_semantics<parallel>], iteration_bounds = array<i64: 2>, scalar_prefetch = 0 : i64, scratch_operands = 0 : i64, tpu.core_type = #tpu.core_type<tc>, window_params = [{pipeline_mode = #tpu.pipeline_mode<synchronous>, transform_indices = @transform_0, window_bounds = array<i64: 64, 32>}, {transform_indices = @transform_1, window_bounds = array<i64: 32, 32>}, {transform_indices = @transform_2, window_bounds = array<i64: 32, 64>}, {pipeline_mode = #tpu.pipeline_mode<synchronous>, transform_indices = @transform_3, window_bounds = array<i64: 32, 32>}, {pipeline_mode = #tpu.pipeline_mode<synchronous>, transform_indices = @transform_4, window_bounds = array<i64: 8, 32>}, {pipeline_mode = #tpu.pipeline_mode<synchronous>, transform_indices = @transform_5, window_bounds = array<i64: 32, 8>}, {pipeline_mode = #tpu.pipeline_mode<synchronous>, transform_indices = @transform_6, window_bounds = array<i64: 1, 32>}, {transform_indices = @transform_7, window_bounds = array<i64: 32, 32>}]} {
    %c0 = arith.constant 0 : index
    %c0_0 = arith.constant 0 : index
    %0 = vector.load %arg1[%c0, %c0_0] : memref<64x32xf32, #tpu.memory_space<vmem>>, vector<64x32xf32>
    %c0_1 = arith.constant 0 : index
    %c0_2 = arith.constant 0 : index
    %1 = vector.load %arg2[%c0_1, %c0_2] : memref<32x32xf32, #tpu.memory_space<vmem>>, vector<32x32xf32>
    %c0_3 = arith.constant 0 : index
    %c0_4 = arith.constant 0 : index
    %2 = vector.load %arg3[%c0_3, %c0_4] : memref<32x64xf32, #tpu.memory_space<vmem>>, vector<32x64xf32>
    %c0_5 = arith.constant 0 : index
    %c0_6 = arith.constant 0 : index
    %3 = vector.load %arg4[%c0_5, %c0_6] : memref<32x32xf32, #tpu.memory_space<vmem>>, vector<32x32xf32>
    %c0_7 = arith.constant 0 : index
    %c0_8 = arith.constant 0 : index
    %4 = vector.load %arg5[%c0_7, %c0_8] : memref<8x32xf32, #tpu.memory_space<vmem>>, vector<8x32xf32>
    %c0_9 = arith.constant 0 : index
    %c0_10 = arith.constant 0 : index
    %5 = vector.load %arg6[%c0_9, %c0_10] : memref<32x8xf32, #tpu.memory_space<vmem>>, vector<32x8xf32>
    %c0_11 = arith.constant 0 : index
    %c0_12 = arith.constant 0 : index
    %6 = vector.load %arg7[%c0_11, %c0_12] : memref<1x32xf32, #tpu.memory_space<vmem>>, vector<1x32xf32>
    %7 = arith.truncf %0 : vector<64x32xf32> to vector<64x32xbf16>
    %8 = arith.truncf %3 : vector<32x32xf32> to vector<32x32xbf16>
    %cst = arith.constant dense<0.000000e+00> : vector<64x32xf32>
    %9 = tpu.matmul %7, %8, %cst {dimension_numbers = #tpu.dot_dimension_numbers<[1], [0], [0], [1], [0, 0, 1, 1], [], []>} : vector<64x32xbf16>, vector<32x32xbf16>, vector<64x32xf32> -> vector<64x32xf32>
    %10 = arith.truncf %1 : vector<32x32xf32> to vector<32x32xbf16>
    %11 = arith.truncf %3 : vector<32x32xf32> to vector<32x32xbf16>
    %cst_13 = arith.constant dense<0.000000e+00> : vector<32x32xf32>
    %12 = tpu.matmul %10, %11, %cst_13 {dimension_numbers = #tpu.dot_dimension_numbers<[1], [0], [0], [1], [0, 0, 1, 1], [], []>} : vector<32x32xbf16>, vector<32x32xbf16>, vector<32x32xf32> -> vector<32x32xf32>
    %13 = arith.truncf %4 : vector<8x32xf32> to vector<8x32xbf16>
    %14 = arith.truncf %9 : vector<64x32xf32> to vector<64x32xbf16>
    %cst_14 = arith.constant dense<0.000000e+00> : vector<8x64xf32>
    %15 = tpu.matmul %13, %14, %cst_14 {dimension_numbers = #tpu.dot_dimension_numbers<[1], [1], [0], [0], [0, 0, 1, 0], [], []>} : vector<8x32xbf16>, vector<64x32xbf16>, vector<8x64xf32> -> vector<8x64xf32>
    %16 = arith.truncf %12 : vector<32x32xf32> to vector<32x32xbf16>
    %17 = arith.truncf %5 : vector<32x8xf32> to vector<32x8xbf16>
    %cst_15 = arith.constant dense<0.000000e+00> : vector<32x8xf32>
    %18 = tpu.matmul %16, %17, %cst_15 {dimension_numbers = #tpu.dot_dimension_numbers<[1], [0], [0], [1], [0, 0, 1, 1], [], []>} : vector<32x32xbf16>, vector<32x8xbf16>, vector<32x8xf32> -> vector<32x8xf32>
    %cst_16 = arith.constant 5.000000e-01 : f32
    %19 = vector.broadcast %cst_16 : f32 to vector<32x64xf32>
    %20 = arith.cmpf ogt, %2, %19 : vector<32x64xf32>
    %21 = arith.extui %20 : vector<32x64xi1> to vector<32x64xi32>
    %22 = arith.sitofp %21 : vector<32x64xi32> to vector<32x64xf32>
    %23 = vector.extract_strided_slice %18 {offsets = [0, 0], sizes = [32, 1], strides = [1, 1]} : vector<32x8xf32> to vector<32x1xf32>
    %24 = vector.extract_strided_slice %15 {offsets = [0, 0], sizes = [1, 64], strides = [1, 1]} : vector<8x64xf32> to vector<1x64xf32>
    %25 = vector.broadcast %23 : vector<32x1xf32> to vector<32x64xf32>
    %26 = vector.broadcast %24 : vector<1x64xf32> to vector<32x64xf32>
    %27 = arith.addf %25, %26 : vector<32x64xf32>
    %cst_17 = arith.constant 0.000000e+00 : f32
    %28 = vector.broadcast %cst_17 : f32 to vector<32x64xf32>
    %29 = arith.cmpf oge, %27, %28 : vector<32x64xf32>
    %cst_18 = arith.constant 2.000000e-01 : f32
    %30 = vector.broadcast %cst_18 : f32 to vector<32x64xf32>
    %31 = arith.mulf %30, %27 : vector<32x64xf32>
    %32 = arith.select %29, %27, %31 : vector<32x64xi1>, vector<32x64xf32>
    %cst_19 = arith.constant -1.000000e+30 : f32
    %33 = vector.broadcast %cst_19 : f32 to vector<32x64xf32>
    %34 = arith.select %20, %32, %33 : vector<32x64xi1>, vector<32x64xf32>
    %cst_20 = arith.constant dense<0xFF800000> : vector<32xf32>
    %35 = vector.multi_reduction <maximumf>, %34, %cst_20 [1] : vector<32x64xf32> to vector<32xf32>
    %36 = vector.shape_cast %35 : vector<32xf32> to vector<32x1xf32>
    %37 = vector.broadcast %36 : vector<32x1xf32> to vector<32x64xf32>
    %38 = arith.subf %34, %37 : vector<32x64xf32>
    %39 = math.exp %38 : vector<32x64xf32>
    %40 = arith.mulf %39, %22 : vector<32x64xf32>
    %cst_21 = arith.constant dense<0.000000e+00> : vector<32xf32>
    %41 = vector.multi_reduction <add>, %40, %cst_21 [1] : vector<32x64xf32> to vector<32xf32>
    %42 = vector.shape_cast %41 : vector<32xf32> to vector<32x1xf32>
    %cst_22 = arith.constant 9.99999968E-21 : f32
    %43 = vector.broadcast %cst_22 : f32 to vector<32x1xf32>
    %44 = arith.addf %42, %43 : vector<32x1xf32>
    %45 = tpu.reciprocal %44 {approx = true} : vector<32x1xf32> -> vector<32x1xf32>
    %46 = vector.broadcast %45 : vector<32x1xf32> to vector<32x64xf32>
    %47 = arith.mulf %40, %46 : vector<32x64xf32>
    %48 = vector.extract_strided_slice %9 {offsets = [0, 0], sizes = [64, 8], strides = [1, 1]} : vector<64x32xf32> to vector<64x8xf32>
    %49 = arith.truncf %47 : vector<32x64xf32> to vector<32x64xbf16>
    %50 = arith.truncf %48 : vector<64x8xf32> to vector<64x8xbf16>
    %cst_23 = arith.constant dense<0.000000e+00> : vector<32x8xf32>
    %51 = tpu.matmul %49, %50, %cst_23 {dimension_numbers = #tpu.dot_dimension_numbers<[1], [0], [0], [1], [0, 0, 1, 1], [], []>} : vector<32x64xbf16>, vector<64x8xbf16>, vector<32x8xf32> -> vector<32x8xf32>
    %52 = vector.extract_strided_slice %6 {offsets = [0, 0], sizes = [1, 8], strides = [1, 1]} : vector<1x32xf32> to vector<1x8xf32>
    %53 = vector.broadcast %52 : vector<1x8xf32> to vector<32x8xf32>
    %54 = arith.addf %51, %53 : vector<32x8xf32>
    %cst_24 = arith.constant 0.000000e+00 : f32
    %55 = vector.broadcast %cst_24 : f32 to vector<32x8xf32>
    %56 = arith.maximumf %54, %55 : vector<32x8xf32>
    %c0_25 = arith.constant 0 : index
    %c0_26 = arith.constant 0 : index
    %57 = vector.load %arg8[%c0_25, %c0_26] : memref<32x32xf32, #tpu.memory_space<vmem>>, vector<32x8xf32>
    tpu.vector_store %arg8[%c0_25, %c0_26], %56 {strides = array<i32>} : memref<32x32xf32, #tpu.memory_space<vmem>>, vector<32x8xf32>,
    %58 = vector.extract_strided_slice %18 {offsets = [0, 1], sizes = [32, 1], strides = [1, 1]} : vector<32x8xf32> to vector<32x1xf32>
    %59 = vector.extract_strided_slice %15 {offsets = [1, 0], sizes = [1, 64], strides = [1, 1]} : vector<8x64xf32> to vector<1x64xf32>
    %60 = vector.broadcast %58 : vector<32x1xf32> to vector<32x64xf32>
    %61 = vector.broadcast %59 : vector<1x64xf32> to vector<32x64xf32>
    %62 = arith.addf %60, %61 : vector<32x64xf32>
    %cst_27 = arith.constant 0.000000e+00 : f32
    %63 = vector.broadcast %cst_27 : f32 to vector<32x64xf32>
    %64 = arith.cmpf oge, %62, %63 : vector<32x64xf32>
    %cst_28 = arith.constant 2.000000e-01 : f32
    %65 = vector.broadcast %cst_28 : f32 to vector<32x64xf32>
    %66 = arith.mulf %65, %62 : vector<32x64xf32>
    %67 = arith.select %64, %62, %66 : vector<32x64xi1>, vector<32x64xf32>
    %cst_29 = arith.constant -1.000000e+30 : f32
    %68 = vector.broadcast %cst_29 : f32 to vector<32x64xf32>
    %69 = arith.select %20, %67, %68 : vector<32x64xi1>, vector<32x64xf32>
    %cst_30 = arith.constant dense<0xFF800000> : vector<32xf32>
    %70 = vector.multi_reduction <maximumf>, %69, %cst_30 [1] : vector<32x64xf32> to vector<32xf32>
    %71 = vector.shape_cast %70 : vector<32xf32> to vector<32x1xf32>
    %72 = vector.broadcast %71 : vector<32x1xf32> to vector<32x64xf32>
    %73 = arith.subf %69, %72 : vector<32x64xf32>
    %74 = math.exp %73 : vector<32x64xf32>
    %75 = arith.mulf %74, %22 : vector<32x64xf32>
    %cst_31 = arith.constant dense<0.000000e+00> : vector<32xf32>
    %76 = vector.multi_reduction <add>, %75, %cst_31 [1] : vector<32x64xf32> to vector<32xf32>
    %77 = vector.shape_cast %76 : vector<32xf32> to vector<32x1xf32>
    %cst_32 = arith.constant 9.99999968E-21 : f32
    %78 = vector.broadcast %cst_32 : f32 to vector<32x1xf32>
    %79 = arith.addf %77, %78 : vector<32x1xf32>
    %80 = tpu.reciprocal %79 {approx = true} : vector<32x1xf32> -> vector<32x1xf32>
    %81 = vector.broadcast %80 : vector<32x1xf32> to vector<32x64xf32>
    %82 = arith.mulf %75, %81 : vector<32x64xf32>
    %83 = vector.extract_strided_slice %9 {offsets = [0, 8], sizes = [64, 8], strides = [1, 1]} : vector<64x32xf32> to vector<64x8xf32>
    %84 = arith.truncf %82 : vector<32x64xf32> to vector<32x64xbf16>
    %85 = arith.truncf %83 : vector<64x8xf32> to vector<64x8xbf16>
    %cst_33 = arith.constant dense<0.000000e+00> : vector<32x8xf32>
    %86 = tpu.matmul %84, %85, %cst_33 {dimension_numbers = #tpu.dot_dimension_numbers<[1], [0], [0], [1], [0, 0, 1, 1], [], []>} : vector<32x64xbf16>, vector<64x8xbf16>, vector<32x8xf32> -> vector<32x8xf32>
    %87 = vector.extract_strided_slice %6 {offsets = [0, 8], sizes = [1, 8], strides = [1, 1]} : vector<1x32xf32> to vector<1x8xf32>
    %88 = vector.broadcast %87 : vector<1x8xf32> to vector<32x8xf32>
    %89 = arith.addf %86, %88 : vector<32x8xf32>
    %cst_34 = arith.constant 0.000000e+00 : f32
    %90 = vector.broadcast %cst_34 : f32 to vector<32x8xf32>
    %91 = arith.maximumf %89, %90 : vector<32x8xf32>
    %c0_35 = arith.constant 0 : index
    %c8 = arith.constant 8 : index
    %92 = vector.load %arg8[%c0_35, %c8] : memref<32x32xf32, #tpu.memory_space<vmem>>, vector<32x8xf32>
    tpu.vector_store %arg8[%c0_35, %c8], %91 {strides = array<i32>} : memref<32x32xf32, #tpu.memory_space<vmem>>, vector<32x8xf32>,
    %93 = vector.extract_strided_slice %18 {offsets = [0, 2], sizes = [32, 1], strides = [1, 1]} : vector<32x8xf32> to vector<32x1xf32>
    %94 = vector.extract_strided_slice %15 {offsets = [2, 0], sizes = [1, 64], strides = [1, 1]} : vector<8x64xf32> to vector<1x64xf32>
    %95 = vector.broadcast %93 : vector<32x1xf32> to vector<32x64xf32>
    %96 = vector.broadcast %94 : vector<1x64xf32> to vector<32x64xf32>
    %97 = arith.addf %95, %96 : vector<32x64xf32>
    %cst_36 = arith.constant 0.000000e+00 : f32
    %98 = vector.broadcast %cst_36 : f32 to vector<32x64xf32>
    %99 = arith.cmpf oge, %97, %98 : vector<32x64xf32>
    %cst_37 = arith.constant 2.000000e-01 : f32
    %100 = vector.broadcast %cst_37 : f32 to vector<32x64xf32>
    %101 = arith.mulf %100, %97 : vector<32x64xf32>
    %102 = arith.select %99, %97, %101 : vector<32x64xi1>, vector<32x64xf32>
    %cst_38 = arith.constant -1.000000e+30 : f32
    %103 = vector.broadcast %cst_38 : f32 to vector<32x64xf32>
    %104 = arith.select %20, %102, %103 : vector<32x64xi1>, vector<32x64xf32>
    %cst_39 = arith.constant dense<0xFF800000> : vector<32xf32>
    %105 = vector.multi_reduction <maximumf>, %104, %cst_39 [1] : vector<32x64xf32> to vector<32xf32>
    %106 = vector.shape_cast %105 : vector<32xf32> to vector<32x1xf32>
    %107 = vector.broadcast %106 : vector<32x1xf32> to vector<32x64xf32>
    %108 = arith.subf %104, %107 : vector<32x64xf32>
    %109 = math.exp %108 : vector<32x64xf32>
    %110 = arith.mulf %109, %22 : vector<32x64xf32>
    %cst_40 = arith.constant dense<0.000000e+00> : vector<32xf32>
    %111 = vector.multi_reduction <add>, %110, %cst_40 [1] : vector<32x64xf32> to vector<32xf32>
    %112 = vector.shape_cast %111 : vector<32xf32> to vector<32x1xf32>
    %cst_41 = arith.constant 9.99999968E-21 : f32
    %113 = vector.broadcast %cst_41 : f32 to vector<32x1xf32>
    %114 = arith.addf %112, %113 : vector<32x1xf32>
    %115 = tpu.reciprocal %114 {approx = true} : vector<32x1xf32> -> vector<32x1xf32>
    %116 = vector.broadcast %115 : vector<32x1xf32> to vector<32x64xf32>
    %117 = arith.mulf %110, %116 : vector<32x64xf32>
    %118 = vector.extract_strided_slice %9 {offsets = [0, 16], sizes = [64, 8], strides = [1, 1]} : vector<64x32xf32> to vector<64x8xf32>
    %119 = arith.truncf %117 : vector<32x64xf32> to vector<32x64xbf16>
    %120 = arith.truncf %118 : vector<64x8xf32> to vector<64x8xbf16>
    %cst_42 = arith.constant dense<0.000000e+00> : vector<32x8xf32>
    %121 = tpu.matmul %119, %120, %cst_42 {dimension_numbers = #tpu.dot_dimension_numbers<[1], [0], [0], [1], [0, 0, 1, 1], [], []>} : vector<32x64xbf16>, vector<64x8xbf16>, vector<32x8xf32> -> vector<32x8xf32>
    %122 = vector.extract_strided_slice %6 {offsets = [0, 16], sizes = [1, 8], strides = [1, 1]} : vector<1x32xf32> to vector<1x8xf32>
    %123 = vector.broadcast %122 : vector<1x8xf32> to vector<32x8xf32>
    %124 = arith.addf %121, %123 : vector<32x8xf32>
    %cst_43 = arith.constant 0.000000e+00 : f32
    %125 = vector.broadcast %cst_43 : f32 to vector<32x8xf32>
    %126 = arith.maximumf %124, %125 : vector<32x8xf32>
    %c0_44 = arith.constant 0 : index
    %c16 = arith.constant 16 : index
    %127 = vector.load %arg8[%c0_44, %c16] : memref<32x32xf32, #tpu.memory_space<vmem>>, vector<32x8xf32>
    tpu.vector_store %arg8[%c0_44, %c16], %126 {strides = array<i32>} : memref<32x32xf32, #tpu.memory_space<vmem>>, vector<32x8xf32>,
    %128 = vector.extract_strided_slice %18 {offsets = [0, 3], sizes = [32, 1], strides = [1, 1]} : vector<32x8xf32> to vector<32x1xf32>
    %129 = vector.extract_strided_slice %15 {offsets = [3, 0], sizes = [1, 64], strides = [1, 1]} : vector<8x64xf32> to vector<1x64xf32>
    %130 = vector.broadcast %128 : vector<32x1xf32> to vector<32x64xf32>
    %131 = vector.broadcast %129 : vector<1x64xf32> to vector<32x64xf32>
    %132 = arith.addf %130, %131 : vector<32x64xf32>
    %cst_45 = arith.constant 0.000000e+00 : f32
    %133 = vector.broadcast %cst_45 : f32 to vector<32x64xf32>
    %134 = arith.cmpf oge, %132, %133 : vector<32x64xf32>
    %cst_46 = arith.constant 2.000000e-01 : f32
    %135 = vector.broadcast %cst_46 : f32 to vector<32x64xf32>
    %136 = arith.mulf %135, %132 : vector<32x64xf32>
    %137 = arith.select %134, %132, %136 : vector<32x64xi1>, vector<32x64xf32>
    %cst_47 = arith.constant -1.000000e+30 : f32
    %138 = vector.broadcast %cst_47 : f32 to vector<32x64xf32>
    %139 = arith.select %20, %137, %138 : vector<32x64xi1>, vector<32x64xf32>
    %cst_48 = arith.constant dense<0xFF800000> : vector<32xf32>
    %140 = vector.multi_reduction <maximumf>, %139, %cst_48 [1] : vector<32x64xf32> to vector<32xf32>
    %141 = vector.shape_cast %140 : vector<32xf32> to vector<32x1xf32>
    %142 = vector.broadcast %141 : vector<32x1xf32> to vector<32x64xf32>
    %143 = arith.subf %139, %142 : vector<32x64xf32>
    %144 = math.exp %143 : vector<32x64xf32>
    %145 = arith.mulf %144, %22 : vector<32x64xf32>
    %cst_49 = arith.constant dense<0.000000e+00> : vector<32xf32>
    %146 = vector.multi_reduction <add>, %145, %cst_49 [1] : vector<32x64xf32> to vector<32xf32>
    %147 = vector.shape_cast %146 : vector<32xf32> to vector<32x1xf32>
    %cst_50 = arith.constant 9.99999968E-21 : f32
    %148 = vector.broadcast %cst_50 : f32 to vector<32x1xf32>
    %149 = arith.addf %147, %148 : vector<32x1xf32>
    %150 = tpu.reciprocal %149 {approx = true} : vector<32x1xf32> -> vector<32x1xf32>
    %151 = vector.broadcast %150 : vector<32x1xf32> to vector<32x64xf32>
    %152 = arith.mulf %145, %151 : vector<32x64xf32>
    %153 = vector.extract_strided_slice %9 {offsets = [0, 24], sizes = [64, 8], strides = [1, 1]} : vector<64x32xf32> to vector<64x8xf32>
    %154 = arith.truncf %152 : vector<32x64xf32> to vector<32x64xbf16>
    %155 = arith.truncf %153 : vector<64x8xf32> to vector<64x8xbf16>
    %cst_51 = arith.constant dense<0.000000e+00> : vector<32x8xf32>
    %156 = tpu.matmul %154, %155, %cst_51 {dimension_numbers = #tpu.dot_dimension_numbers<[1], [0], [0], [1], [0, 0, 1, 1], [], []>} : vector<32x64xbf16>, vector<64x8xbf16>, vector<32x8xf32> -> vector<32x8xf32>
    %157 = vector.extract_strided_slice %6 {offsets = [0, 24], sizes = [1, 8], strides = [1, 1]} : vector<1x32xf32> to vector<1x8xf32>
    %158 = vector.broadcast %157 : vector<1x8xf32> to vector<32x8xf32>
    %159 = arith.addf %156, %158 : vector<32x8xf32>
    %cst_52 = arith.constant 0.000000e+00 : f32
    %160 = vector.broadcast %cst_52 : f32 to vector<32x8xf32>
    %161 = arith.maximumf %159, %160 : vector<32x8xf32>
    %c0_53 = arith.constant 0 : index
    %c24 = arith.constant 24 : index
    %162 = vector.load %arg8[%c0_53, %c24] : memref<32x32xf32, #tpu.memory_space<vmem>>, vector<32x8xf32>
    tpu.vector_store %arg8[%c0_53, %c24], %161 {strides = array<i32>} : memref<32x32xf32, #tpu.memory_space<vmem>>, vector<32x8xf32>,
    return
  }
  func.func @transform_0(%arg0: i32) -> (i32, i32) {
    %c0_i32 = arith.constant 0 : i32
    %c0_i32_0 = arith.constant 0 : i32
    %c0_i32_1 = arith.constant 0 : i32
    return %c0_i32, %c0_i32_0 : i32, i32
  }
  func.func @transform_1(%arg0: i32) -> (i32, i32) {
    %c0_i32 = arith.constant 0 : i32
    %c0_i32_0 = arith.constant 0 : i32
    return %arg0, %c0_i32 : i32, i32
  }
  func.func @transform_2(%arg0: i32) -> (i32, i32) {
    %c0_i32 = arith.constant 0 : i32
    %c0_i32_0 = arith.constant 0 : i32
    return %arg0, %c0_i32 : i32, i32
  }
  func.func @transform_3(%arg0: i32) -> (i32, i32) {
    %c0_i32 = arith.constant 0 : i32
    %c0_i32_0 = arith.constant 0 : i32
    %c0_i32_1 = arith.constant 0 : i32
    return %c0_i32, %c0_i32_0 : i32, i32
  }
  func.func @transform_4(%arg0: i32) -> (i32, i32) {
    %c0_i32 = arith.constant 0 : i32
    %c0_i32_0 = arith.constant 0 : i32
    %c0_i32_1 = arith.constant 0 : i32
    return %c0_i32, %c0_i32_0 : i32, i32
  }
  func.func @transform_5(%arg0: i32) -> (i32, i32) {
    %c0_i32 = arith.constant 0 : i32
    %c0_i32_0 = arith.constant 0 : i32
    %c0_i32_1 = arith.constant 0 : i32
    return %c0_i32, %c0_i32_0 : i32, i32
  }
  func.func @transform_6(%arg0: i32) -> (i32, i32) {
    %c0_i32 = arith.constant 0 : i32
    %c0_i32_0 = arith.constant 0 : i32
    %c0_i32_1 = arith.constant 0 : i32
    return %c0_i32, %c0_i32_0 : i32, i32
  }
  func.func @transform_7(%arg0: i32) -> (i32, i32) {
    %c0_i32 = arith.constant 0 : i32
    %c0_i32_0 = arith.constant 0 : i32
    return %arg0, %c0_i32 : i32, i32
  }
}

module attributes {stable_mosaic.version = 11 : i64} {
  func.func @_graphconv_kernel(%arg0: i32, %arg1: memref<64x32xf32, #tpu.memory_space<vmem>>, %arg2: memref<64x64xf32, #tpu.memory_space<vmem>>, %arg3: memref<32x64xf32, #tpu.memory_space<vmem>>, %arg4: memref<32x8xf32, #tpu.memory_space<vmem>>, %arg5: memref<1x8xf32, #tpu.memory_space<vmem>>, %arg6: memref<32x8xf32, #tpu.memory_space<vmem>>) attributes {dimension_semantics = [#tpu.dimension_semantics<parallel>], iteration_bounds = array<i64: 2>, scalar_prefetch = 0 : i64, scratch_operands = 0 : i64, tpu.core_type = #tpu.core_type<tc>, window_params = [{pipeline_mode = #tpu.pipeline_mode<synchronous>, transform_indices = @transform_0, window_bounds = array<i64: 64, 32>}, {pipeline_mode = #tpu.pipeline_mode<synchronous>, transform_indices = @transform_1, window_bounds = array<i64: 64, 64>}, {transform_indices = @transform_2, window_bounds = array<i64: 32, 64>}, {pipeline_mode = #tpu.pipeline_mode<synchronous>, transform_indices = @transform_3, window_bounds = array<i64: 32, 8>}, {pipeline_mode = #tpu.pipeline_mode<synchronous>, transform_indices = @transform_4, window_bounds = array<i64: 1, 8>}, {transform_indices = @transform_5, window_bounds = array<i64: 32, 8>}]} {
    %c0 = arith.constant 0 : index
    %c0_0 = arith.constant 0 : index
    %0 = vector.load %arg1[%c0, %c0_0] : memref<64x32xf32, #tpu.memory_space<vmem>>, vector<64x32xf32>
    %c0_1 = arith.constant 0 : index
    %c0_2 = arith.constant 0 : index
    %1 = vector.load %arg2[%c0_1, %c0_2] : memref<64x64xf32, #tpu.memory_space<vmem>>, vector<64x64xf32>
    %c0_3 = arith.constant 0 : index
    %c0_4 = arith.constant 0 : index
    %2 = vector.load %arg3[%c0_3, %c0_4] : memref<32x64xf32, #tpu.memory_space<vmem>>, vector<32x64xf32>
    %c0_5 = arith.constant 0 : index
    %c0_6 = arith.constant 0 : index
    %3 = vector.load %arg4[%c0_5, %c0_6] : memref<32x8xf32, #tpu.memory_space<vmem>>, vector<32x8xf32>
    %c0_7 = arith.constant 0 : index
    %c0_8 = arith.constant 0 : index
    %4 = vector.load %arg5[%c0_7, %c0_8] : memref<1x8xf32, #tpu.memory_space<vmem>>, vector<1x8xf32>
    %cst = arith.constant dense<0.000000e+00> : vector<64xf32>
    %5 = vector.multi_reduction <add>, %1, %cst [0] : vector<64x64xf32> to vector<64xf32>
    %6 = vector.shape_cast %5 : vector<64xf32> to vector<1x64xf32>
    %cst_9 = arith.constant 1.000000e+00 : f32
    %7 = vector.broadcast %cst_9 : f32 to vector<1x64xf32>
    %8 = arith.maximumf %6, %7 : vector<1x64xf32>
    %9 = math.rsqrt %8 : vector<1x64xf32>
    %cst_10 = arith.constant dense<0.000000e+00> : vector<32xf32>
    %10 = vector.multi_reduction <add>, %2, %cst_10 [1] : vector<32x64xf32> to vector<32xf32>
    %11 = vector.shape_cast %10 : vector<32xf32> to vector<32x1xf32>
    %cst_11 = arith.constant 1.000000e+00 : f32
    %12 = vector.broadcast %cst_11 : f32 to vector<32x1xf32>
    %13 = arith.maximumf %11, %12 : vector<32x1xf32>
    %14 = math.rsqrt %13 : vector<32x1xf32>
    %15 = arith.truncf %0 : vector<64x32xf32> to vector<64x32xbf16>
    %16 = arith.truncf %3 : vector<32x8xf32> to vector<32x8xbf16>
    %cst_12 = arith.constant dense<0.000000e+00> : vector<64x8xf32>
    %17 = tpu.matmul %15, %16, %cst_12 {dimension_numbers = #tpu.dot_dimension_numbers<[1], [0], [0], [1], [0, 0, 1, 1], [], []>} : vector<64x32xbf16>, vector<32x8xbf16>, vector<64x8xf32> -> vector<64x8xf32>
    %18 = vector.broadcast %9 : vector<1x64xf32> to vector<32x64xf32>
    %19 = arith.mulf %2, %18 : vector<32x64xf32>
    %20 = arith.truncf %19 : vector<32x64xf32> to vector<32x64xbf16>
    %21 = arith.truncf %17 : vector<64x8xf32> to vector<64x8xbf16>
    %cst_13 = arith.constant dense<0.000000e+00> : vector<32x8xf32>
    %22 = tpu.matmul %20, %21, %cst_13 {dimension_numbers = #tpu.dot_dimension_numbers<[1], [0], [0], [1], [0, 0, 1, 1], [], []>} : vector<32x64xbf16>, vector<64x8xbf16>, vector<32x8xf32> -> vector<32x8xf32>
    %23 = vector.broadcast %14 : vector<32x1xf32> to vector<32x8xf32>
    %24 = arith.mulf %22, %23 : vector<32x8xf32>
    %25 = vector.broadcast %4 : vector<1x8xf32> to vector<32x8xf32>
    %26 = arith.addf %24, %25 : vector<32x8xf32>
    %c0_14 = arith.constant 0 : index
    %c0_15 = arith.constant 0 : index
    %27 = vector.load %arg6[%c0_14, %c0_15] : memref<32x8xf32, #tpu.memory_space<vmem>>, vector<32x8xf32>
    tpu.vector_store %arg6[%c0_14, %c0_15], %26 {strides = array<i32>} : memref<32x8xf32, #tpu.memory_space<vmem>>, vector<32x8xf32>,
    return
  }
  func.func @transform_0(%arg0: i32) -> (i32, i32) {
    %c0_i32 = arith.constant 0 : i32
    %c0_i32_0 = arith.constant 0 : i32
    %c0_i32_1 = arith.constant 0 : i32
    return %c0_i32, %c0_i32_0 : i32, i32
  }
  func.func @transform_1(%arg0: i32) -> (i32, i32) {
    %c0_i32 = arith.constant 0 : i32
    %c0_i32_0 = arith.constant 0 : i32
    %c0_i32_1 = arith.constant 0 : i32
    return %c0_i32, %c0_i32_0 : i32, i32
  }
  func.func @transform_2(%arg0: i32) -> (i32, i32) {
    %c0_i32 = arith.constant 0 : i32
    %c0_i32_0 = arith.constant 0 : i32
    return %arg0, %c0_i32 : i32, i32
  }
  func.func @transform_3(%arg0: i32) -> (i32, i32) {
    %c0_i32 = arith.constant 0 : i32
    %c0_i32_0 = arith.constant 0 : i32
    %c0_i32_1 = arith.constant 0 : i32
    return %c0_i32, %c0_i32_0 : i32, i32
  }
  func.func @transform_4(%arg0: i32) -> (i32, i32) {
    %c0_i32 = arith.constant 0 : i32
    %c0_i32_0 = arith.constant 0 : i32
    %c0_i32_1 = arith.constant 0 : i32
    return %c0_i32, %c0_i32_0 : i32, i32
  }
  func.func @transform_5(%arg0: i32) -> (i32, i32) {
    %c0_i32 = arith.constant 0 : i32
    %c0_i32_0 = arith.constant 0 : i32
    return %arg0, %c0_i32 : i32, i32
  }
}

</mosaic_0001>

<llo_original>
// kernel: gat_forward.7
$region0: #{gat_forward.7}
  #allocation0 [shape = 'u32[]', space=smem, size = 0x4, offset = 0x4, fixed_abs, tag = 'smem constant byte address 0x4 - core index']
  #allocation1 [shape = 'u32[72,128]{1,0:T(1,128)}', space=vmem, size = 0x9000, scoped, tag = 'internal scratch']
  %s0 = inlined_call_operand.vmem [shape: f32[64,32], index: 0, kind: input, shape index: {}]
  %s1 = inlined_call_operand.vmem [shape: f32[64,64], index: 1, kind: input, shape index: {}, may-alias: {1,2}]
  %s2 = inlined_call_operand.vmem [shape: f32[64,64], index: 2, kind: input, shape index: {}, may-alias: {1,2}]
  %s3 = inlined_call_operand.vmem [shape: f32[32,8], index: 3, kind: input, shape index: {}]
  %s4 = inlined_call_operand.vmem [shape: f32[1,8], index: 4, kind: input, shape index: {}]
  %s5 = inlined_call_operand.vmem [shape: f32[64,8], index: 5, kind: output, shape index: {}]
  %s6 = sld [smem:[#allocation0]]
  $region53: #{gat_forward.7} parent=0
    _
  %s8 = ssub.s32 1, %s6
  %s9 = scalar_select 0, %s8, %s6
  loop: start=0, step=1, limit=4
  $region2: #{gat_forward.7} parent=0 // loop_pre_header
    _
  $region3: #{gat_forward.7} parent=0 // loop_header
    %s11 = sphi 0, %s15
    %p12 = scmp.ge.s32.totalorder %s11, 4
    %s19 = sphi 0, %s19
    %s21 = sphi 0, %s19
    %s22 = sphi 0, %s21
    %s36 = sphi 0, %s22
    %s40 = sphi 0, %s40
    %s42 = sphi 0, %s40
    %s43 = sphi 0, %s42
    %s57 = sphi 0, %s43
    %s63 = sphi 0, %s65
    %s66 = sphi 0, %s63
    %s67 = sphi 0, %s66
    %s83 = sphi 0, %s67
    %s87 = sphi 0, %s87
    %s89 = sphi 0, %s87
    %s90 = sphi 0, %s89
    %s104 = sphi 0, %s90
    %s108 = sphi 0, %s108
    %s110 = sphi 0, %s108
    %s111 = sphi 0, %s110
    %s125 = sphi 0, %s111
    %s131 = sphi 0, %s133
    %s134 = sphi 0, %s131
    %s135 = sphi 0, %s134
    %s151 = sphi 0, %s135
  $region4: #{gat_forward.7} parent=0 // loop_header_branch
    %14 = sbr.rel (%p12) target = $region8
  $region5: #{gat_forward.7} parent=0 // loop_body
    %s16 = ssub.s32 %s11, 1
    %s17 = ssub.s32 %s11, 2
    %s18 = sadd.s32 %s11, 1
    %s20 = sadd.s32 %s19, 1
    %p23 = scmp.eq.s32.totalorder %s11, 1
    %p24 = scmp.ne.s32.totalorder %s19, %s21
    %p25 = scmp.eq.s32.totalorder %s11, 0
    %p26 = por %p24, %p25
    %p27 = scmp.ne.s32.totalorder %s19, %s21
    %p28 = scmp.eq.s32.totalorder %s16, 1
    %p29 = por %p27, %p28
    %p30 = scmp.ne.s32.totalorder %s21, %s22
    %p31 = scmp.eq.s32.totalorder %s16, 0
    %p32 = por %p30, %p31
    %p33 = scmp.ne.s32.totalorder %s21, %s22
    %p34 = scmp.eq.s32.totalorder %s17, 1
    %p35 = por %p33, %p34
    %p37 = scmp.ne.s32.totalorder %s22, %s36
    %p38 = scmp.eq.s32.totalorder %s17, 0
    %p39 = por %p37, %p38
    %s41 = sadd.s32 %s40, 1
    %p44 = scmp.eq.s32.totalorder %s11, 1
    %p45 = scmp.ne.s32.totalorder %s40, %s42
    %p46 = scmp.eq.s32.totalorder %s11, 0
    %p47 = por %p45, %p46
    %p48 = scmp.ne.s32.totalorder %s40, %s42
    %p49 = scmp.eq.s32.totalorder %s16, 1
    %p50 = por %p48, %p49
    %p51 = scmp.ne.s32.totalorder %s42, %s43
    %p52 = scmp.eq.s32.totalorder %s16, 0
    %p53 = por %p51, %p52
    %p54 = scmp.ne.s32.totalorder %s42, %s43
    %p55 = scmp.eq.s32.totalorder %s17, 1
    %p56 = por %p54, %p55
    %p58 = scmp.ne.s32.totalorder %s43, %s57
    %p59 = scmp.eq.s32.totalorder %s17, 0
    %p60 = por %p58, %p59
    %s61 = ssub.s32 %s11, %s18
    %p62 = scmp.eq.s32.totalorder %s61, 0
    %s64 = sadd.s32 %s63, 1
    %s65 = scalar_select %p62, %s63, %s64
    %p68 = pneg %p62
    %p69 = scmp.eq.s32.totalorder %s11, 1
    %p70 = por %p68, %p69
    %p71 = scmp.ne.s32.totalorder %s63, %s66
    %p72 = scmp.eq.s32.totalorder %s11, 0
    %p73 = por %p71, %p72
    %p74 = scmp.ne.s32.totalorder %s63, %s66
    %p75 = scmp.eq.s32.totalorder %s16, 1
    %p76 = por %p74, %p75
    %p77 = scmp.ne.s32.totalorder %s66, %s67
    %p78 = scmp.eq.s32.totalorder %s16, 0
    %p79 = por %p77, %p78
    %p80 = scmp.ne.s32.totalorder %s66, %s67
    %p81 = scmp.eq.s32.totalorder %s17, 1
    %p82 = por %p80, %p81
    %p84 = scmp.ne.s32.totalorder %s67, %s83
    %p85 = scmp.eq.s32.totalorder %s17, 0
    %p86 = por %p84, %p85
    %s88 = sadd.s32 %s87, 1
    %p91 = scmp.eq.s32.totalorder %s11, 1
    %p92 = scmp.ne.s32.totalorder %s87, %s89
    %p93 = scmp.eq.s32.totalorder %s11, 0
    %p94 = por %p92, %p93
    %p95 = scmp.ne.s32.totalorder %s87, %s89
    %p96 = scmp.eq.s32.totalorder %s16, 1
    %p97 = por %p95, %p96
    %p98 = scmp.ne.s32.totalorder %s89, %s90
    %p99 = scmp.eq.s32.totalorder %s16, 0
    %p100 = por %p98, %p99
    %p101 = scmp.ne.s32.totalorder %s89, %s90
    %p102 = scmp.eq.s32.totalorder %s17, 1
    %p103 = por %p101, %p102
    %p105 = scmp.ne.s32.totalorder %s90, %s104
    %p106 = scmp.eq.s32.totalorder %s17, 0
    %p107 = por %p105, %p106
    %s109 = sadd.s32 %s108, 1
    %p112 = scmp.eq.s32.totalorder %s11, 1
    %p113 = scmp.ne.s32.totalorder %s108, %s110
    %p114 = scmp.eq.s32.totalorder %s11, 0
    %p115 = por %p113, %p114
    %p116 = scmp.ne.s32.totalorder %s108, %s110
    %p117 = scmp.eq.s32.totalorder %s16, 1
    %p118 = por %p116, %p117
    %p119 = scmp.ne.s32.totalorder %s110, %s111
    %p120 = scmp.eq.s32.totalorder %s16, 0
    %p121 = por %p119, %p120
    %p122 = scmp.ne.s32.totalorder %s110, %s111
    %p123 = scmp.eq.s32.totalorder %s17, 1
    %p124 = por %p122, %p123
    %p126 = scmp.ne.s32.totalorder %s111, %s125
    %p127 = scmp.eq.s32.totalorder %s17, 0
    %p128 = por %p126, %p127
    %s129 = ssub.s32 %s11, %s18
    %p130 = scmp.eq.s32.totalorder %s129, 0
    %s132 = sadd.s32 %s131, 1
    %s133 = scalar_select %p130, %s131, %s132
    %p136 = pneg %p130
    %p137 = scmp.eq.s32.totalorder %s11, 1
    %p138 = por %p136, %p137
    %p139 = scmp.ne.s32.totalorder %s131, %s134
    %p140 = scmp.eq.s32.totalorder %s11, 0
    %p141 = por %p139, %p140
    %p142 = scmp.ne.s32.totalorder %s131, %s134
    %p143 = scmp.eq.s32.totalorder %s16, 1
    %p144 = por %p142, %p143
    %p145 = scmp.ne.s32.totalorder %s134, %s135
    %p146 = scmp.eq.s32.totalorder %s16, 0
    %p147 = por %p145, %p146
    %p148 = scmp.ne.s32.totalorder %s134, %s135
    %p149 = scmp.eq.s32.totalorder %s17, 1
    %p150 = por %p148, %p149
    %p152 = scmp.ne.s32.totalorder %s135, %s151
    %p153 = scmp.eq.s32.totalorder %s17, 0
    %p154 = por %p152, %p153
    %p155 = scmp.le.s32.totalorder 1, %s11
    %p156 = scmp.lt.s32.totalorder %s11, 3
    %p157 = pnand %p155, %p156
    %p158 = pneg %p157
    // Predicated region
    $region9: #{gat_forward.7} parent=5 // pred_check
      _
    $region10: #{gat_forward.7} parent=5 // pred_check_branch
      %160 = sbr.rel (%p157) target = $region12
    $region11: #{gat_forward.7} parent=5 // pred_region
      %s161 = ssub.s32 %s11, 1
      // Predicated region
      $region13: #{gat_forward.7} parent=11 // pred_check
        %p162 = pneg %p32
      $region14: #{gat_forward.7} parent=11 // pred_check_branch
        %164 = sbr.rel (%p162) target = $region16
      $region15: #{gat_forward.7} parent=11 // pred_region
        _
      $region16: #{gat_forward.7} parent=11 // pred_fallthru
        _
      // Predicated region
      $region17: #{gat_forward.7} parent=11 // pred_check
        %p165 = pneg %p53
      $region18: #{gat_forward.7} parent=11 // pred_check_branch
        %167 = sbr.rel (%p165) target = $region20
      $region19: #{gat_forward.7} parent=11 // pred_region
        _
      $region20: #{gat_forward.7} parent=11 // pred_fallthru
        _
      // Predicated region
      $region21: #{gat_forward.7} parent=11 // pred_check
        %p168 = pneg %p100
      $region22: #{gat_forward.7} parent=11 // pred_check_branch
        %170 = sbr.rel (%p168) target = $region24
      $region23: #{gat_forward.7} parent=11 // pred_region
        _
      $region24: #{gat_forward.7} parent=11 // pred_fallthru
        _
      // Predicated region
      $region25: #{gat_forward.7} parent=11 // pred_check
        %p171 = pneg %p121
      $region26: #{gat_forward.7} parent=11 // pred_check_branch
        %173 = sbr.rel (%p171) target = $region28
      $region27: #{gat_forward.7} parent=11 // pred_region
        _
      $region28: #{gat_forward.7} parent=11 // pred_fallthru
        _
    $region12: #{gat_forward.7} parent=5 // pred_fallthru
      _
    %p174 = scmp.lt.s32.totalorder %s11, 2
    // Predicated region
    $region29: #{gat_forward.7} parent=5 // pred_check
      %p175 = pneg %p174
    $region30: #{gat_forward.7} parent=5 // pred_check_branch
      %177 = sbr.rel (%p175) target = $region32
    $region31: #{gat_forward.7} parent=5 // pred_region
      // Predicated region
      $region33: #{gat_forward.7} parent=31 // pred_check
        %p178 = pneg %p73
      $region34: #{gat_forward.7} parent=31 // pred_check_branch
        %180 = sbr.rel (%p178) target = $region36
      $region35: #{gat_forward.7} parent=31 // pred_region
        %s181 = smul.u32 4, %s11
        %p182 = scmp.lt.s32.totalorder %s181, 7
        %s183 = scalar_select %p182, %s181, 7
        %s184 = smul.addr %s183, 8
        %s185 = scalar_lea.vmem %s2, %s184
        %s186 = smul.u32 4, %s11
      $region36: #{gat_forward.7} parent=31 // pred_fallthru
        _
    $region32: #{gat_forward.7} parent=5 // pred_fallthru
      _
    %p187 = scmp.le.s32.totalorder 1, %s11
    %p188 = scmp.lt.s32.totalorder %s11, 3
    %p189 = pnand %p187, %p188
    %p190 = pneg %p189
    // Predicated region
    $region37: #{gat_forward.7} parent=5 // pred_check
      _
    $region38: #{gat_forward.7} parent=5 // pred_check_branch
      %192 = sbr.rel (%p189) target = $region40
    $region39: #{gat_forward.7} parent=5 // pred_region
      %s193 = ssub.s32 %s11, 1
      %p194 = pneg %p32
      %p195 = pneg %p29
      %p196 = pneg %p53
      %p197 = pneg %p50
      %s198 = smul.u32 4, %s16
      %p199 = scmp.lt.s32.totalorder %s198, 7
      %s200 = scalar_select %p199, %s198, 7
      %s201 = smul.addr %s200, 8
      %s202 = scalar_lea.vmem %s2, %s201
      %p203 = pneg %p79
      %p204 = pneg %p76
      %p205 = pneg %p100
      %p206 = pneg %p97
      %p207 = pneg %p121
      %p208 = pneg %p118
      %p209 = pneg %p147
      %p210 = pneg %p144
      %s211 = smul.u32 4, %s16
      %p212 = scmp.lt.s32.totalorder %s211, 7
      %s213 = scalar_select %p212, %s211, 7
      %s214 = smul.addr %s213, 8
      %s215 = scalar_lea.vmem %s5, %s214
      %s216 = smul.u32 4, %s16
      %p217 = scmp.lt.s32.totalorder %s216, 7
      %s218 = scalar_select %p217, %s216, 7
      %s219 = smul.addr %s218, 8
      %s220 = scalar_lea.vmem %s2, %s219
      %s221 = smul.u32 4, %s16
      %s222 = smul.u32 4, %s16
      %p223 = scmp.lt.s32.totalorder %s222, 7
      %s224 = scalar_select %p223, %s222, 7
      %s225 = smul.addr %s224, 8
      %s226 = scalar_lea.vmem %s5, %s225
      %s227 = smul.u32 4, %s16
      %v229 = vld [vmem:[%s0] sm:$0xff]
      %v230 = vld [vmem:[%s0 + $0x8] sm:$0xff]
      %v231 = vld [vmem:[%s0 + $0x10] sm:$0xff]
      %v232 = vld [vmem:[%s0 + $0x18] sm:$0xff]
      %v233 = vld [vmem:[%s0 + $0x20] sm:$0xff]
      %v234 = vld [vmem:[%s0 + $0x28] sm:$0xff]
      %v235 = vld [vmem:[%s0 + $0x30] sm:$0xff]
      %v236 = vld [vmem:[%s0 + $0x38] sm:$0xff]
      %v237 = vld [vmem:[%s1] sm:$0xff]
      %v238 = vld [vmem:[%s1 + $0x8] sm:$0xff]
      %v239 = vld [vmem:[%s1 + $0x10] sm:$0xff]
      %v240 = vld [vmem:[%s1 + $0x18] sm:$0xff]
      %v241 = vld [vmem:[%s1 + $0x20] sm:$0xff]
      %v242 = vld [vmem:[%s1 + $0x28] sm:$0xff]
      %v243 = vld [vmem:[%s1 + $0x30] sm:$0xff]
      %v244 = vld [vmem:[%s1 + $0x38] sm:$0xff]
      %v245 = vld [vmem:[%s220] sm:$0xff]
      %v246 = vld [vmem:[%s220 + $0x8] sm:$0xff]
      %v247 = vld [vmem:[%s220 + $0x10] sm:$0xff]
      %v248 = vld [vmem:[%s220 + $0x18] sm:$0xff]
      %v249 = vld [vmem:[%s3] sm:$0xff]
      %v250 = vld [vmem:[%s3 + $0x8] sm:$0xff]
      %v251 = vld [vmem:[%s3 + $0x10] sm:$0xff]
      %v252 = vld [vmem:[%s3 + $0x18] sm:$0xff]
      %v253 = vld [vmem:[%s4] sm:$0x1]
      %vm254 = vcmask 523264
      %v255 = vsel %vm254, %v237, 0.0
      %v256 = vsel %vm254, %v238, 0.0
      %v257 = vadd.f32 %v255, %v256
      %v258 = vsel %vm254, %v239, 0.0
      %v259 = vadd.f32 %v257, %v258
      %v260 = vsel %vm254, %v240, 0.0
      %v261 = vadd.f32 %v259, %v260
      %v262 = vsel %vm254, %v241, 0.0
      %v263 = vadd.f32 %v261, %v262
      %v264 = vsel %vm254, %v242, 0.0
      %v265 = vadd.f32 %v263, %v264
      %v266 = vsel %vm254, %v243, 0.0
      %v267 = vadd.f32 %v265, %v266
      %v268 = vsel %vm254, %v244, 0.0
      %v269 = vadd.f32 %v267, %v268
      %v270 = vrot.slane %v269, 4
      %v271 = vadd.f32 %v269, %v270
      %v272 = vrot.slane %v271, 2
      %v273 = vadd.f32 %v271, %v272
      %v274 = vrot.slane %v273, 1
      %v275 = vadd.f32 %v273, %v274
      %v276 = vmax.f32 %v275, 1.0
      %v277 = vrsqrt.pop %v276
      %v278 = vmul.f32 %v277, %v276
      %v279 = vmul.f32 %v278, %v277
      %v280 = vmul.f32 0.5, %v279
      %v281 = vsub.f32 1.5, %v280
      %v282 = vmul.f32 %v277, %v281
      %vm283 = vweird.f32 %v276
      %vm284 = vweird.f32 %v277
      %vm285 = vmor %vm283, %vm284
      %v286 = vsel %vm285, %v277, %v282
      %v287 = vsel %vm254, %v245, 0.0
      %288 = vadd.xlane.f32.xlu0 %v287
      %v289 = vpop.xlane.xlu0 %288
      %v290 = vsel %vm254, %v246, 0.0
      %291 = vadd.xlane.f32.xlu0 %v290
      %v292 = vpop.xlane.xlu0 %291
      %v293 = vsel %vm254, %v247, 0.0
      %294 = vadd.xlane.f32.xlu0 %v293
      %v295 = vpop.xlane.xlu0 %294
      %v296 = vsel %vm254, %v248, 0.0
      %297 = vadd.xlane.f32.xlu0 %v296
      %v298 = vpop.xlane.xlu0 %297
      %v299 = vmax.f32 %v289, 1.0
      %v300 = vmax.f32 %v292, 1.0
      %v301 = vmax.f32 %v295, 1.0
      %v302 = vmax.f32 %v298, 1.0
      %v303 = vrsqrt.pop %v299
      %v304 = vmul.f32 %v303, %v299
      %v305 = vmul.f32 %v304, %v303
      %v306 = vmul.f32 0.5, %v305
      %v307 = vsub.f32 1.5, %v306
      %v308 = vmul.f32 %v303, %v307
      %vm309 = vweird.f32 %v299
      %vm310 = vweird.f32 %v303
      %vm311 = vmor %vm309, %vm310
      %v312 = vsel %vm311, %v303, %v308
      %v313 = vrsqrt.pop %v300
      %v314 = vmul.f32 %v313, %v300
      %v315 = vmul.f32 %v314, %v313
      %v316 = vmul.f32 0.5, %v315
      %v317 = vsub.f32 1.5, %v316
      %v318 = vmul.f32 %v313, %v317
      %vm319 = vweird.f32 %v300
      %vm320 = vweird.f32 %v313
      %vm321 = vmor %vm319, %vm320
      %v322 = vsel %vm321, %v313, %v318
      %v323 = vrsqrt.pop %v301
      %v324 = vmul.f32 %v323, %v301
      %v325 = vmul.f32 %v324, %v323
      %v326 = vmul.f32 0.5, %v325
      %v327 = vsub.f32 1.5, %v326
      %v328 = vmul.f32 %v323, %v327
      %vm329 = vweird.f32 %v301
      %vm330 = vweird.f32 %v323
      %vm331 = vmor %vm329, %vm330
      %v332 = vsel %vm331, %v323, %v328
      %v333 = vrsqrt.pop %v302
      %v334 = vmul.f32 %v333, %v302
      %v335 = vmul.f32 %v334, %v333
      %v336 = vmul.f32 0.5, %v335
      %v337 = vsub.f32 1.5, %v336
      %v338 = vmul.f32 %v333, %v337
      %vm339 = vweird.f32 %v302
      %vm340 = vweird.f32 %v333
      %vm341 = vmor %vm339, %vm340
      %v342 = vsel %vm341, %v333, %v338
      %v343 = vpack.c.bf16 %v230, %v229
      %v344 = vpack.c.bf16 %v232, %v231
      %v345 = vpack.c.bf16 %v234, %v233
      %v346 = vpack.c.bf16 %v236, %v235
      %v347 = vpack.c.bf16 %v250, %v249
      %v348 = vpack.c.bf16 %v252, %v251
      %vm349 = vcmask 261120
      %v351 = vsel %vm349, %v343, 0
      %v354 = vsel %vm349, %v344, 0
      %v357 = vsel %vm349, %v345, 0
      %v360 = vsel %vm349, %v346, 0
      %362 = vmatpush.bf16.msra.mxu0 0
      %363 = vmatpush.bf16.msra.mxu0 0
      %364 = vmatpush.bf16.msra.mxu0 0
      %365 = vmatpush.bf16.msra.mxu0 0
      %366 = vmatpush.bf16.msra.mxu0 0
      %367 = vmatpush.bf16.msra.mxu0 0
      %368 = vmatpush.bf16.msra.mxu0 %v348
      %369 = vmatpush.bf16.msra.mxu0 %v347
      %370 = vmatmul.bf16.gmra.mxu0 %v351
      %v371 = vpop.f32.mrf.mxu0
      %v372 = vadd.f32 0.0, %v371
      %v373 = vpop.f32.mrf.mxu0
      %v374 = vadd.f32 0.0, %v373
      %375 = vmatmul.bf16.gmra.mxu0 %v354
      %v376 = vpop.f32.mrf.mxu0
      %v377 = vadd.f32 0.0, %v376
      %v378 = vpop.f32.mrf.mxu0
      %v379 = vadd.f32 0.0, %v378
      %380 = vmatmul.bf16.gmra.mxu0 %v357
      %v381 = vpop.f32.mrf.mxu0
      %v382 = vadd.f32 0.0, %v381
      %v383 = vpop.f32.mrf.mxu0
      %v384 = vadd.f32 0.0, %v383
      %385 = vmatmul.bf16.gmra.mxu0 %v360
      %v386 = vpop.f32.mrf.mxu0
      %v387 = vadd.f32 0.0, %v386
      %v388 = vpop.f32.mrf.mxu0
      %v389 = vadd.f32 0.0, %v388
      %390 = vdwg.mxu0
      %v391 = vmul.f32 %v245, %v286
      %v392 = vmul.f32 %v246, %v286
      %v393 = vmul.f32 %v247, %v286
      %v394 = vmul.f32 %v248, %v286
      %v395 = vpack.c.bf16 %v392, %v391
      %v396 = vpack.c.bf16 %v394, %v393
      %v397 = vpack.c.bf16 %v374, %v372
      %v398 = vpack.c.bf16 %v379, %v377
      %v399 = vpack.c.bf16 %v384, %v382
      %v400 = vpack.c.bf16 %v389, %v387
      %v402 = vsel %vm254, %v395, 0
      %v405 = vsel %vm254, %v396, 0
      %407 = vmatpush.bf16.msra.mxu0 0
      %408 = vmatpush.bf16.msra.mxu0 0
      %409 = vmatpush.bf16.msra.mxu0 0
      %410 = vmatpush.bf16.msra.mxu0 0
      %411 = vmatpush.bf16.msra.mxu0 %v400
      %412 = vmatpush.bf16.msra.mxu0 %v399
      %413 = vmatpush.bf16.msra.mxu0 %v398
      %414 = vmatpush.bf16.msra.mxu0 %v397
      %415 = vmatmul.bf16.gmra.mxu0 %v402
      %v416 = vpop.f32.mrf.mxu0
      %v417 = vadd.f32 0.0, %v416
      %v418 = vpop.f32.mrf.mxu0
      %v419 = vadd.f32 0.0, %v418
      %420 = vmatmul.bf16.gmra.mxu0 %v405
      %v421 = vpop.f32.mrf.mxu0
      %v422 = vadd.f32 0.0, %v421
      %v423 = vpop.f32.mrf.mxu0
      %v424 = vadd.f32 0.0, %v423
      %425 = vdwg.mxu0
      %v426 = vmul.f32 %v417, %v312
      %v427 = vmul.f32 %v419, %v322
      %v428 = vmul.f32 %v422, %v332
      %v429 = vmul.f32 %v424, %v342
      %v431 = vperm.slane %v253, 0
      %v433 = vadd.f32 %v426, %v431
      %v434 = vadd.f32 %v427, %v431
      %v435 = vadd.f32 %v428, %v431
      %v436 = vadd.f32 %v429, %v431
      %vm437 = vcmask 64512
      %438 = vst.msk [vmem:[%s226] sm:$0xff] %vm437, %v433
      %439 = vst.msk [vmem:[%s226 + $0x8] sm:$0xff] %vm437, %v434
      %440 = vst.msk [vmem:[%s226 + $0x10] sm:$0xff] %vm437, %v435
      %441 = vst.msk [vmem:[%s226 + $0x18] sm:$0xff] %vm437, %v436
      %s442 = smul.u32 4, %s16
      %p443 = scmp.lt.s32.totalorder %s442, 7
      %s444 = scalar_select %p443, %s442, 7
      %s445 = smul.addr %s444, 8
      %s446 = scalar_lea.vmem %s5, %s445
      // Predicated region
      $region41: #{gat_forward.7} parent=39 // pred_check
        %p447 = pneg %p144
      $region42: #{gat_forward.7} parent=39 // pred_check_branch
        %449 = sbr.rel (%p447) target = $region44
      $region43: #{gat_forward.7} parent=39 // pred_region
        %s450 = smul.u32 4, %s16
      $region44: #{gat_forward.7} parent=39 // pred_fallthru
        _
    $region40: #{gat_forward.7} parent=5 // pred_fallthru
      _
    %p451 = scmp.le.s32.totalorder 2, %s11
    // Predicated region
    $region45: #{gat_forward.7} parent=5 // pred_check
      %p452 = pneg %p451
    $region46: #{gat_forward.7} parent=5 // pred_check_branch
      %454 = sbr.rel (%p452) target = $region48
    $region47: #{gat_forward.7} parent=5 // pred_region
      %s455 = ssub.s32 %s11, 2
      // Predicated region
      $region49: #{gat_forward.7} parent=47 // pred_check
        %p456 = pneg %p150
      $region50: #{gat_forward.7} parent=47 // pred_check_branch
        %458 = sbr.rel (%p456) target = $region52
      $region51: #{gat_forward.7} parent=47 // pred_region
        %s459 = smul.u32 4, %s17
        %p460 = scmp.lt.s32.totalorder %s459, 7
        %s461 = scalar_select %p460, %s459, 7
        %s462 = smul.addr %s461, 8
        %s463 = scalar_lea.vmem %s5, %s462
      $region52: #{gat_forward.7} parent=47 // pred_fallthru
        _
    $region48: #{gat_forward.7} parent=5 // pred_fallthru
      _
  $region6: #{gat_forward.7} parent=0 // loop_footer
    %s15 = sadd.s32 1, %s11
  $region7: #{gat_forward.7} parent=0 // loop_footer_branch
    %10 = sbr.rel target = $region3
  $region8: #{gat_forward.7} parent=0 // loop_exit
    _

// kernel: gat_forward.4
$region0: #{gat_forward.4}
  #allocation0 [shape = 'u32[]', space=smem, size = 0x4, offset = 0x4, fixed_abs, tag = 'smem constant byte address 0x4 - core index']
  #allocation1 [shape = 'u32[72,128]{1,0:T(1,128)}', space=vmem, size = 0x9000, scoped, tag = 'internal scratch']
  %s0 = inlined_call_operand.vmem [shape: f32[64,16], index: 0, kind: input, shape index: {}, may-alias: {0,1}]
  %s1 = inlined_call_operand.vmem [shape: f32[64,16], index: 1, kind: input, shape index: {}, may-alias: {0,1}]
  %s2 = inlined_call_operand.vmem [shape: f32[64,64], index: 2, kind: input, shape index: {}]
  %s3 = inlined_call_operand.vmem [shape: f32[16,32], index: 3, kind: input, shape index: {}]
  %s4 = inlined_call_operand.vmem [shape: f32[8,32], index: 4, kind: input, shape index: {}]
  %s5 = inlined_call_operand.vmem [shape: f32[32,8], index: 5, kind: input, shape index: {}]
  %s6 = inlined_call_operand.vmem [shape: f32[1,32], index: 6, kind: input, shape index: {}]
  %s7 = inlined_call_operand.vmem [shape: f32[64,32], index: 7, kind: output, shape index: {}]
  %s8 = sld [smem:[#allocation0]]
  $region61: #{gat_forward.4} parent=0
    _
  %s10 = ssub.s32 1, %s8
  %s11 = scalar_select 0, %s10, %s8
  loop: start=0, step=1, limit=4
  $region2: #{gat_forward.4} parent=0 // loop_pre_header
    _
  $region3: #{gat_forward.4} parent=0 // loop_header
    %s13 = sphi 0, %s17
    %p14 = scmp.ge.s32.totalorder %s13, 4
    %s21 = sphi 0, %s21
    %s23 = sphi 0, %s21
    %s24 = sphi 0, %s23
    %s38 = sphi 0, %s24
    %s44 = sphi 0, %s46
    %s47 = sphi 0, %s44
    %s48 = sphi 0, %s47
    %s64 = sphi 0, %s48
    %s70 = sphi 0, %s72
    %s73 = sphi 0, %s70
    %s74 = sphi 0, %s73
    %s90 = sphi 0, %s74
    %s94 = sphi 0, %s94
    %s96 = sphi 0, %s94
    %s97 = sphi 0, %s96
    %s111 = sphi 0, %s97
    %s115 = sphi 0, %s115
    %s117 = sphi 0, %s115
    %s118 = sphi 0, %s117
    %s132 = sphi 0, %s118
    %s136 = sphi 0, %s136
    %s138 = sphi 0, %s136
    %s139 = sphi 0, %s138
    %s153 = sphi 0, %s139
    %s157 = sphi 0, %s157
    %s159 = sphi 0, %s157
    %s160 = sphi 0, %s159
    %s174 = sphi 0, %s160
    %s180 = sphi 0, %s182
    %s183 = sphi 0, %s180
    %s184 = sphi 0, %s183
    %s200 = sphi 0, %s184
  $region4: #{gat_forward.4} parent=0 // loop_header_branch
    %16 = sbr.rel (%p14) target = $region8
  $region5: #{gat_forward.4} parent=0 // loop_body
    %s18 = ssub.s32 %s13, 1
    %s19 = ssub.s32 %s13, 2
    %s20 = sadd.s32 %s13, 1
    %s22 = sadd.s32 %s21, 1
    %p25 = scmp.eq.s32.totalorder %s13, 1
    %p26 = scmp.ne.s32.totalorder %s21, %s23
    %p27 = scmp.eq.s32.totalorder %s13, 0
    %p28 = por %p26, %p27
    %p29 = scmp.ne.s32.totalorder %s21, %s23
    %p30 = scmp.eq.s32.totalorder %s18, 1
    %p31 = por %p29, %p30
    %p32 = scmp.ne.s32.totalorder %s23, %s24
    %p33 = scmp.eq.s32.totalorder %s18, 0
    %p34 = por %p32, %p33
    %p35 = scmp.ne.s32.totalorder %s23, %s24
    %p36 = scmp.eq.s32.totalorder %s19, 1
    %p37 = por %p35, %p36
    %p39 = scmp.ne.s32.totalorder %s24, %s38
    %p40 = scmp.eq.s32.totalorder %s19, 0
    %p41 = por %p39, %p40
    %s42 = ssub.s32 %s13, %s20
    %p43 = scmp.eq.s32.totalorder %s42, 0
    %s45 = sadd.s32 %s44, 1
    %s46 = scalar_select %p43, %s44, %s45
    %p49 = pneg %p43
    %p50 = scmp.eq.s32.totalorder %s13, 1
    %p51 = por %p49, %p50
    %p52 = scmp.ne.s32.totalorder %s44, %s47
    %p53 = scmp.eq.s32.totalorder %s13, 0
    %p54 = por %p52, %p53
    %p55 = scmp.ne.s32.totalorder %s44, %s47
    %p56 = scmp.eq.s32.totalorder %s18, 1
    %p57 = por %p55, %p56
    %p58 = scmp.ne.s32.totalorder %s47, %s48
    %p59 = scmp.eq.s32.totalorder %s18, 0
    %p60 = por %p58, %p59
    %p61 = scmp.ne.s32.totalorder %s47, %s48
    %p62 = scmp.eq.s32.totalorder %s19, 1
    %p63 = por %p61, %p62
    %p65 = scmp.ne.s32.totalorder %s48, %s64
    %p66 = scmp.eq.s32.totalorder %s19, 0
    %p67 = por %p65, %p66
    %s68 = ssub.s32 %s13, %s20
    %p69 = scmp.eq.s32.totalorder %s68, 0
    %s71 = sadd.s32 %s70, 1
    %s72 = scalar_select %p69, %s70, %s71
    %p75 = pneg %p69
    %p76 = scmp.eq.s32.totalorder %s13, 1
    %p77 = por %p75, %p76
    %p78 = scmp.ne.s32.totalorder %s70, %s73
    %p79 = scmp.eq.s32.totalorder %s13, 0
    %p80 = por %p78, %p79
    %p81 = scmp.ne.s32.totalorder %s70, %s73
    %p82 = scmp.eq.s32.totalorder %s18, 1
    %p83 = por %p81, %p82
    %p84 = scmp.ne.s32.totalorder %s73, %s74
    %p85 = scmp.eq.s32.totalorder %s18, 0
    %p86 = por %p84, %p85
    %p87 = scmp.ne.s32.totalorder %s73, %s74
    %p88 = scmp.eq.s32.totalorder %s19, 1
    %p89 = por %p87, %p88
    %p91 = scmp.ne.s32.totalorder %s74, %s90
    %p92 = scmp.eq.s32.totalorder %s19, 0
    %p93 = por %p91, %p92
    %s95 = sadd.s32 %s94, 1
    %p98 = scmp.eq.s32.totalorder %s13, 1
    %p99 = scmp.ne.s32.totalorder %s94, %s96
    %p100 = scmp.eq.s32.totalorder %s13, 0
    %p101 = por %p99, %p100
    %p102 = scmp.ne.s32.totalorder %s94, %s96
    %p103 = scmp.eq.s32.totalorder %s18, 1
    %p104 = por %p102, %p103
    %p105 = scmp.ne.s32.totalorder %s96, %s97
    %p106 = scmp.eq.s32.totalorder %s18, 0
    %p107 = por %p105, %p106
    %p108 = scmp.ne.s32.totalorder %s96, %s97
    %p109 = scmp.eq.s32.totalorder %s19, 1
    %p110 = por %p108, %p109
    %p112 = scmp.ne.s32.totalorder %s97, %s111
    %p113 = scmp.eq.s32.totalorder %s19, 0
    %p114 = por %p112, %p113
    %s116 = sadd.s32 %s115, 1
    %p119 = scmp.eq.s32.totalorder %s13, 1
    %p120 = scmp.ne.s32.totalorder %s115, %s117
    %p121 = scmp.eq.s32.totalorder %s13, 0
    %p122 = por %p120, %p121
    %p123 = scmp.ne.s32.totalorder %s115, %s117
    %p124 = scmp.eq.s32.totalorder %s18, 1
    %p125 = por %p123, %p124
    %p126 = scmp.ne.s32.totalorder %s117, %s118
    %p127 = scmp.eq.s32.totalorder %s18, 0
    %p128 = por %p126, %p127
    %p129 = scmp.ne.s32.totalorder %s117, %s118
    %p130 = scmp.eq.s32.totalorder %s19, 1
    %p131 = por %p129, %p130
    %p133 = scmp.ne.s32.totalorder %s118, %s132
    %p134 = scmp.eq.s32.totalorder %s19, 0
    %p135 = por %p133, %p134
    %s137 = sadd.s32 %s136, 1
    %p140 = scmp.eq.s32.totalorder %s13, 1
    %p141 = scmp.ne.s32.totalorder %s136, %s138
    %p142 = scmp.eq.s32.totalorder %s13, 0
    %p143 = por %p141, %p142
    %p144 = scmp.ne.s32.totalorder %s136, %s138
    %p145 = scmp.eq.s32.totalorder %s18, 1
    %p146 = por %p144, %p145
    %p147 = scmp.ne.s32.totalorder %s138, %s139
    %p148 = scmp.eq.s32.totalorder %s18, 0
    %p149 = por %p147, %p148
    %p150 = scmp.ne.s32.totalorder %s138, %s139
    %p151 = scmp.eq.s32.totalorder %s19, 1
    %p152 = por %p150, %p151
    %p154 = scmp.ne.s32.totalorder %s139, %s153
    %p155 = scmp.eq.s32.totalorder %s19, 0
    %p156 = por %p154, %p155
    %s158 = sadd.s32 %s157, 1
    %p161 = scmp.eq.s32.totalorder %s13, 1
    %p162 = scmp.ne.s32.totalorder %s157, %s159
    %p163 = scmp.eq.s32.totalorder %s13, 0
    %p164 = por %p162, %p163
    %p165 = scmp.ne.s32.totalorder %s157, %s159
    %p166 = scmp.eq.s32.totalorder %s18, 1
    %p167 = por %p165, %p166
    %p168 = scmp.ne.s32.totalorder %s159, %s160
    %p169 = scmp.eq.s32.totalorder %s18, 0
    %p170 = por %p168, %p169
    %p171 = scmp.ne.s32.totalorder %s159, %s160
    %p172 = scmp.eq.s32.totalorder %s19, 1
    %p173 = por %p171, %p172
    %p175 = scmp.ne.s32.totalorder %s160, %s174
    %p176 = scmp.eq.s32.totalorder %s19, 0
    %p177 = por %p175, %p176
    %s178 = ssub.s32 %s13, %s20
    %p179 = scmp.eq.s32.totalorder %s178, 0
    %s181 = sadd.s32 %s180, 1
    %s182 = scalar_select %p179, %s180, %s181
    %p185 = pneg %p179
    %p186 = scmp.eq.s32.totalorder %s13, 1
    %p187 = por %p185, %p186
    %p188 = scmp.ne.s32.totalorder %s180, %s183
    %p189 = scmp.eq.s32.totalorder %s13, 0
    %p190 = por %p188, %p189
    %p191 = scmp.ne.s32.totalorder %s180, %s183
    %p192 = scmp.eq.s32.totalorder %s18, 1
    %p193 = por %p191, %p192
    %p194 = scmp.ne.s32.totalorder %s183, %s184
    %p195 = scmp.eq.s32.totalorder %s18, 0
    %p196 = por %p194, %p195
    %p197 = scmp.ne.s32.totalorder %s183, %s184
    %p198 = scmp.eq.s32.totalorder %s19, 1
    %p199 = por %p197, %p198
    %p201 = scmp.ne.s32.totalorder %s184, %s200
    %p202 = scmp.eq.s32.totalorder %s19, 0
    %p203 = por %p201, %p202
    %p204 = scmp.le.s32.totalorder 1, %s13
    %p205 = scmp.lt.s32.totalorder %s13, 3
    %p206 = pnand %p204, %p205
    %p207 = pneg %p206
    // Predicated region
    $region9: #{gat_forward.4} parent=5 // pred_check
      _
    $region10: #{gat_forward.4} parent=5 // pred_check_branch
      %209 = sbr.rel (%p206) target = $region12
    $region11: #{gat_forward.4} parent=5 // pred_region
      %s210 = ssub.s32 %s13, 1
      // Predicated region
      $region13: #{gat_forward.4} parent=11 // pred_check
        %p211 = pneg %p34
      $region14: #{gat_forward.4} parent=11 // pred_check_branch
        %213 = sbr.rel (%p211) target = $region16
      $region15: #{gat_forward.4} parent=11 // pred_region
        _
      $region16: #{gat_forward.4} parent=11 // pred_fallthru
        _
      // Predicated region
      $region17: #{gat_forward.4} parent=11 // pred_check
        %p214 = pneg %p107
      $region18: #{gat_forward.4} parent=11 // pred_check_branch
        %216 = sbr.rel (%p214) target = $region20
      $region19: #{gat_forward.4} parent=11 // pred_region
        _
      $region20: #{gat_forward.4} parent=11 // pred_fallthru
        _
      // Predicated region
      $region21: #{gat_forward.4} parent=11 // pred_check
        %p217 = pneg %p128
      $region22: #{gat_forward.4} parent=11 // pred_check_branch
        %219 = sbr.rel (%p217) target = $region24
      $region23: #{gat_forward.4} parent=11 // pred_region
        _
      $region24: #{gat_forward.4} parent=11 // pred_fallthru
        _
      // Predicated region
      $region25: #{gat_forward.4} parent=11 // pred_check
        %p220 = pneg %p149
      $region26: #{gat_forward.4} parent=11 // pred_check_branch
        %222 = sbr.rel (%p220) target = $region28
      $region27: #{gat_forward.4} parent=11 // pred_region
        _
      $region28: #{gat_forward.4} parent=11 // pred_fallthru
        _
      // Predicated region
      $region29: #{gat_forward.4} parent=11 // pred_check
        %p223 = pneg %p170
      $region30: #{gat_forward.4} parent=11 // pred_check_branch
        %225 = sbr.rel (%p223) target = $region32
      $region31: #{gat_forward.4} parent=11 // pred_region
        _
      $region32: #{gat_forward.4} parent=11 // pred_fallthru
        _
    $region12: #{gat_forward.4} parent=5 // pred_fallthru
      _
    %p226 = scmp.lt.s32.totalorder %s13, 2
    // Predicated region
    $region33: #{gat_forward.4} parent=5 // pred_check
      %p227 = pneg %p226
    $region34: #{gat_forward.4} parent=5 // pred_check_branch
      %229 = sbr.rel (%p227) target = $region36
    $region35: #{gat_forward.4} parent=5 // pred_region
      // Predicated region
      $region37: #{gat_forward.4} parent=35 // pred_check
        %p230 = pneg %p54
      $region38: #{gat_forward.4} parent=35 // pred_check_branch
        %232 = sbr.rel (%p230) target = $region40
      $region39: #{gat_forward.4} parent=35 // pred_region
        %s233 = smul.u32 4, %s13
        %p234 = scmp.lt.s32.totalorder %s233, 7
        %s235 = scalar_select %p234, %s233, 7
        %s236 = smul.addr %s235, 8
        %s237 = scalar_lea.vmem %s1, %s236
        %s238 = smul.u32 4, %s13
      $region40: #{gat_forward.4} parent=35 // pred_fallthru
        _
      // Predicated region
      $region41: #{gat_forward.4} parent=35 // pred_check
        %p239 = pneg %p80
      $region42: #{gat_forward.4} parent=35 // pred_check_branch
        %241 = sbr.rel (%p239) target = $region44
      $region43: #{gat_forward.4} parent=35 // pred_region
        %s242 = smul.u32 4, %s13
        %p243 = scmp.lt.s32.totalorder %s242, 7
        %s244 = scalar_select %p243, %s242, 7
        %s245 = smul.addr %s244, 8
        %s246 = scalar_lea.vmem %s2, %s245
        %s247 = smul.u32 4, %s13
      $region44: #{gat_forward.4} parent=35 // pred_fallthru
        _
    $region36: #{gat_forward.4} parent=5 // pred_fallthru
      _
    %p248 = scmp.le.s32.totalorder 1, %s13
    %p249 = scmp.lt.s32.totalorder %s13, 3
    %p250 = pnand %p248, %p249
    %p251 = pneg %p250
    // Predicated region
    $region45: #{gat_forward.4} parent=5 // pred_check
      _
    $region46: #{gat_forward.4} parent=5 // pred_check_branch
      %253 = sbr.rel (%p250) target = $region48
    $region47: #{gat_forward.4} parent=5 // pred_region
      %s254 = ssub.s32 %s13, 1
      %p255 = pneg %p34
      %p256 = pneg %p31
      %s257 = smul.u32 4, %s18
      %p258 = scmp.lt.s32.totalorder %s257, 7
      %s259 = scalar_select %p258, %s257, 7
      %s260 = smul.addr %s259, 8
      %s261 = scalar_lea.vmem %s1, %s260
      %p262 = pneg %p60
      %p263 = pneg %p57
      %s264 = smul.u32 4, %s18
      %p265 = scmp.lt.s32.totalorder %s264, 7
      %s266 = scalar_select %p265, %s264, 7
      %s267 = smul.addr %s266, 8
      %s268 = scalar_lea.vmem %s2, %s267
      %p269 = pneg %p86
      %p270 = pneg %p83
      %p271 = pneg %p107
      %p272 = pneg %p104
      %p273 = pneg %p128
      %p274 = pneg %p125
      %p275 = pneg %p149
      %p276 = pneg %p146
      %p277 = pneg %p170
      %p278 = pneg %p167
      %p279 = pneg %p196
      %p280 = pneg %p193
      %s281 = smul.u32 4, %s18
      %p282 = scmp.lt.s32.totalorder %s281, 7
      %s283 = scalar_select %p282, %s281, 7
      %s284 = smul.addr %s283, 8
      %s285 = scalar_lea.vmem %s7, %s284
      %s286 = smul.u32 4, %s18
      %p287 = scmp.lt.s32.totalorder %s286, 7
      %s288 = scalar_select %p287, %s286, 7
      %s289 = smul.addr %s288, 8
      %s290 = scalar_lea.vmem %s1, %s289
      %s291 = smul.u32 4, %s18
      %s292 = smul.u32 4, %s18
      %p293 = scmp.lt.s32.totalorder %s292, 7
      %s294 = scalar_select %p293, %s292, 7
      %s295 = smul.addr %s294, 8
      %s296 = scalar_lea.vmem %s2, %s295
      %s297 = smul.u32 4, %s18
      %s298 = smul.u32 4, %s18
      %p299 = scmp.lt.s32.totalorder %s298, 7
      %s300 = scalar_select %p299, %s298, 7
      %s301 = smul.addr %s300, 8
      %s302 = scalar_lea.vmem %s7, %s301
      %s303 = smul.u32 4, %s18
      %v305 = vld [vmem:[%s0] sm:$0xff]
      %v306 = vld [vmem:[%s0 + $0x8] sm:$0xff]
      %v307 = vld [vmem:[%s0 + $0x10] sm:$0xff]
      %v308 = vld [vmem:[%s0 + $0x18] sm:$0xff]
      %v309 = vld [vmem:[%s0 + $0x20] sm:$0xff]
      %v310 = vld [vmem:[%s0 + $0x28] sm:$0xff]
      %v311 = vld [vmem:[%s0 + $0x30] sm:$0xff]
      %v312 = vld [vmem:[%s0 + $0x38] sm:$0xff]
      %v313 = vld [vmem:[%s290] sm:$0xff]
      %v314 = vld [vmem:[%s290 + $0x8] sm:$0xff]
      %v315 = vld [vmem:[%s290 + $0x10] sm:$0xff]
      %v316 = vld [vmem:[%s290 + $0x18] sm:$0xff]
      %v317 = vld [vmem:[%s296] sm:$0xff]
      %v318 = vld [vmem:[%s296 + $0x8] sm:$0xff]
      %v319 = vld [vmem:[%s296 + $0x10] sm:$0xff]
      %v320 = vld [vmem:[%s296 + $0x18] sm:$0xff]
      %v321 = vld [vmem:[%s3] sm:$0xff]
      %v322 = vld [vmem:[%s3 + $0x8] sm:$0xff]
      %v323 = vld [vmem:[%s4] sm:$0xff]
      %v324 = vld [vmem:[%s5] sm:$0xff]
      %v325 = vld [vmem:[%s5 + $0x8] sm:$0xff]
      %v326 = vld [vmem:[%s5 + $0x10] sm:$0xff]
      %v327 = vld [vmem:[%s5 + $0x18] sm:$0xff]
      %v328 = vld [vmem:[%s6] sm:$0x1]
      %v329 = vpack.c.bf16 %v306, %v305
      %v330 = vpack.c.bf16 %v308, %v307
      %v331 = vpack.c.bf16 %v310, %v309
      %v332 = vpack.c.bf16 %v312, %v311
      %v333 = vpack.c.bf16 %v322, %v321
      %vm334 = vcmask 130048
      %v336 = vsel %vm334, %v329, 0
      %v339 = vsel %vm334, %v330, 0
      %v342 = vsel %vm334, %v331, 0
      %v345 = vsel %vm334, %v332, 0
      %347 = vmatpush.bf16.msra.mxu0 0
      %348 = vmatpush.bf16.msra.mxu0 0
      %349 = vmatpush.bf16.msra.mxu0 0
      %350 = vmatpush.bf16.msra.mxu0 0
      %351 = vmatpush.bf16.msra.mxu0 0
      %352 = vmatpush.bf16.msra.mxu0 0
      %353 = vmatpush.bf16.msra.mxu0 0
      %354 = vmatpush.bf16.msra.mxu0 %v333
      %355 = vmatmul.bf16.gmra.mxu0 %v336
      %v356 = vpop.f32.mrf.mxu0
      %v357 = vadd.f32 0.0, %v356
      %v358 = vpop.f32.mrf.mxu0
      %v359 = vadd.f32 0.0, %v358
      %360 = vmatmul.bf16.gmra.mxu0 %v339
      %v361 = vpop.f32.mrf.mxu0
      %v362 = vadd.f32 0.0, %v361
      %v363 = vpop.f32.mrf.mxu0
      %v364 = vadd.f32 0.0, %v363
      %365 = vmatmul.bf16.gmra.mxu0 %v342
      %v366 = vpop.f32.mrf.mxu0
      %v367 = vadd.f32 0.0, %v366
      %v368 = vpop.f32.mrf.mxu0
      %v369 = vadd.f32 0.0, %v368
      %370 = vmatmul.bf16.gmra.mxu0 %v345
      %v371 = vpop.f32.mrf.mxu0
      %v372 = vadd.f32 0.0, %v371
      %v373 = vpop.f32.mrf.mxu0
      %v374 = vadd.f32 0.0, %v373
      %375 = vdwg.mxu0
      %v376 = vpack.c.bf16 %v314, %v313
      %v377 = vpack.c.bf16 %v316, %v315
      %v379 = vsel %vm334, %v376, 0
      %v382 = vsel %vm334, %v377, 0
      %384 = vmatpush.bf16.msra.mxu0 0
      %385 = vmatpush.bf16.msra.mxu0 0
      %386 = vmatpush.bf16.msra.mxu0 0
      %387 = vmatpush.bf16.msra.mxu0 0
      %388 = vmatpush.bf16.msra.mxu0 0
      %389 = vmatpush.bf16.msra.mxu0 0
      %390 = vmatpush.bf16.msra.mxu0 0
      %391 = vmatpush.bf16.msra.mxu0 %v333
      %392 = vmatmul.bf16.gmra.mxu0 %v379
      %v393 = vpop.f32.mrf.mxu0
      %v394 = vadd.f32 0.0, %v393
      %v395 = vpop.f32.mrf.mxu0
      %v396 = vadd.f32 0.0, %v395
      %397 = vmatmul.bf16.gmra.mxu0 %v382
      %v398 = vpop.f32.mrf.mxu0
      %v399 = vadd.f32 0.0, %v398
      %v400 = vpop.f32.mrf.mxu0
      %v401 = vadd.f32 0.0, %v400
      %402 = vdwg.mxu0
      %v403 = vpack.c.bf16 %v323, %v323
      %v404 = vpack.c.bf16 %v359, %v357
      %v405 = vpack.c.bf16 %v364, %v362
      %v406 = vpack.c.bf16 %v369, %v367
      %v407 = vpack.c.bf16 %v374, %v372
      %vm408 = vcmask 261120
      %v410 = vsel %vm408, %v403, 0
      %v413 = vsel %vm408, %v404, 0
      %v416 = vsel %vm408, %v405, 0
      %v419 = vsel %vm408, %v406, 0
      %v422 = vsel %vm408, %v407, 0
      %424 = vmatpush.bf16.xpose.msra.mxu0 0
      %425 = vmatpush.bf16.xpose.msra.mxu0 0
      %426 = vmatpush.bf16.xpose.msra.mxu0 0
      %427 = vmatpush.bf16.xpose.msra.mxu0 0
      %428 = vmatpush.bf16.xpose.msra.mxu0 %v422
      %429 = vmatpush.bf16.xpose.msra.mxu0 %v419
      %430 = vmatpush.bf16.xpose.msra.mxu0 %v416
      %431 = vmatpush.bf16.xpose.msra.mxu0 %v413
      %432 = vmatmul.bf16.gmra.mxu0 %v410
      %v433 = vpop.f32.mrf.mxu0
      %v434 = vadd.f32 0.0, %v433
      %v435 = vpop.f32.mrf.mxu0
      %436 = vdwg.mxu0
      %v437 = vpack.c.bf16 %v396, %v394
      %v438 = vpack.c.bf16 %v401, %v399
      %v439 = vpack.c.bf16 %v325, %v324
      %v440 = vpack.c.bf16 %v327, %v326
      %v442 = vsel %vm408, %v437, 0
      %v445 = vsel %vm408, %v438, 0
      %447 = vmatpush.bf16.msra.mxu0 0
      %448 = vmatpush.bf16.msra.mxu0 0
      %449 = vmatpush.bf16.msra.mxu0 0
      %450 = vmatpush.bf16.msra.mxu0 0
      %451 = vmatpush.bf16.msra.mxu0 0
      %452 = vmatpush.bf16.msra.mxu0 0
      %453 = vmatpush.bf16.msra.mxu0 %v440
      %454 = vmatpush.bf16.msra.mxu0 %v439
      %455 = vmatmul.bf16.gmra.mxu0 %v442
      %v456 = vpop.f32.mrf.mxu0
      %v457 = vadd.f32 0.0, %v456
      %v458 = vpop.f32.mrf.mxu0
      %v459 = vadd.f32 0.0, %v458
      %460 = vmatmul.bf16.gmra.mxu0 %v445
      %v461 = vpop.f32.mrf.mxu0
      %v462 = vadd.f32 0.0, %v461
      %v463 = vpop.f32.mrf.mxu0
      %v464 = vadd.f32 0.0, %v463
      %465 = vdwg.mxu0
      %vm466 = vcmp.gt.f32.partialorder %v317, 0.5
      %vm467 = vcmp.gt.f32.partialorder %v318, 0.5
      %vm468 = vcmp.gt.f32.partialorder %v319, 0.5
      %vm469 = vcmp.gt.f32.partialorder %v320, 0.5
      %v470 = vsel %vm466, 1, 0
      %v471 = vsel %vm467, 1, 0
      %v472 = vsel %vm468, 1, 0
      %v473 = vsel %vm469, 1, 0
      %v474 = vcvt.s32.f32 %v470
      %v475 = vcvt.s32.f32 %v471
      %v476 = vcvt.s32.f32 %v472
      %v477 = vcvt.s32.f32 %v473
      %479 = vset.pattern.permute.xlu0 0
      %480 = vperm.xlu0 %479, %v457
      %v481 = vpop.permute.xlu0 %480
      %484 = vset.pattern.permute.xlu0 0
      %485 = vperm.xlu0 %484, %v459
      %v486 = vpop.permute.xlu0 %485
      %489 = vset.pattern.permute.xlu0 0
      %490 = vperm.xlu0 %489, %v462
      %v491 = vpop.permute.xlu0 %490
      %494 = vset.pattern.permute.xlu0 0
      %495 = vperm.xlu0 %494, %v464
      %v496 = vpop.permute.xlu0 %495
      %v498 = vperm.slane %v434, 0
      %v499 = vadd.f32 %v481, %v498
      %v500 = vadd.f32 %v486, %v498
      %v501 = vadd.f32 %v491, %v498
      %v502 = vadd.f32 %v496, %v498
      %vm503 = vcmp.ge.f32.partialorder %v499, 0.0
      %vm504 = vcmp.ge.f32.partialorder %v500, 0.0
      %vm505 = vcmp.ge.f32.partialorder %v501, 0.0
      %vm506 = vcmp.ge.f32.partialorder %v502, 0.0
      %v507 = vmul.f32 %v499, 0.2
      %v508 = vmul.f32 %v500, 0.2
      %v509 = vmul.f32 %v501, 0.2
      %v510 = vmul.f32 %v502, 0.2
      %v511 = vsel %vm503, %v499, %v507
      %v512 = vsel %vm504, %v500, %v508
      %v513 = vsel %vm505, %v501, %v509
      %v514 = vsel %vm506, %v502, %v510
      %v515 = vsel %vm466, %v511, -1e+30
      %v516 = vsel %vm467, %v512, -1e+30
      %v517 = vsel %vm468, %v513, -1e+30
      %v518 = vsel %vm469, %v514, -1e+30
      %vm519 = vcmask 523264
      %v520 = vsel %vm519, %v515, -inf
      %521 = vmax.xlane.f32.xlu0 %v520
      %v522 = vpop.xlane.xlu0 %521
      %v523 = vsel %vm519, %v516, -inf
      %524 = vmax.xlane.f32.xlu0 %v523
      %v525 = vpop.xlane.xlu0 %524
      %v526 = vsel %vm519, %v517, -inf
      %527 = vmax.xlane.f32.xlu0 %v526
      %v528 = vpop.xlane.xlu0 %527
      %v529 = vsel %vm519, %v518, -inf
      %530 = vmax.xlane.f32.xlu0 %v529
      %v531 = vpop.xlane.xlu0 %530
      %v532 = vsub.f32 %v515, %v522
      %v533 = vsub.f32 %v516, %v525
      %v534 = vsub.f32 %v517, %v528
      %v535 = vsub.f32 %v518, %v531
      %v536 = vmul.f32 %v532, 1.442695
      %v537 = vpow.pop %v536
      %v538 = vmul.f32 %v533, 1.442695
      %v539 = vpow.pop %v538
      %v540 = vmul.f32 %v534, 1.442695
      %v541 = vpow.pop %v540
      %v542 = vmul.f32 %v535, 1.442695
      %v543 = vpow.pop %v542
      %v544 = vmul.f32 %v537, %v474
      %v545 = vmul.f32 %v539, %v475
      %v546 = vmul.f32 %v541, %v476
      %v547 = vmul.f32 %v543, %v477
      %v548 = vsel %vm519, %v544, 0.0
      %549 = vadd.xlane.f32.xlu0 %v548
      %v550 = vpop.xlane.xlu0 %549
      %v551 = vsel %vm519, %v545, 0.0
      %552 = vadd.xlane.f32.xlu0 %v551
      %v553 = vpop.xlane.xlu0 %552
      %v554 = vsel %vm519, %v546, 0.0
      %555 = vadd.xlane.f32.xlu0 %v554
      %v556 = vpop.xlane.xlu0 %555
      %v557 = vsel %vm519, %v547, 0.0
      %558 = vadd.xlane.f32.xlu0 %v557
      %v559 = vpop.xlane.xlu0 %558
      %v560 = vadd.f32 %v550, 1e-20
      %v561 = vadd.f32 %v553, 1e-20
      %v562 = vadd.f32 %v556, 1e-20
      %v563 = vadd.f32 %v559, 1e-20
      %v564 = vrcp.pop %v560
      %v565 = vrcp.pop %v561
      %v566 = vrcp.pop %v562
      %v567 = vrcp.pop %v563
      %v568 = vmul.f32 %v544, %v564
      %v569 = vmul.f32 %v545, %v565
      %v570 = vmul.f32 %v546, %v566
      %v571 = vmul.f32 %v547, %v567
      %v572 = vpack.c.bf16 %v569, %v568
      %v573 = vpack.c.bf16 %v571, %v570
      %v575 = vperm.slane %v328, 0
      %v578 = vsel %vm519, %v572, 0
      %v581 = vsel %vm519, %v573, 0
      %583 = vmatpush.bf16.msra.mxu0 0
      %584 = vmatpush.bf16.msra.mxu0 0
      %585 = vmatpush.bf16.msra.mxu0 0
      %586 = vmatpush.bf16.msra.mxu0 0
      %587 = vmatpush.bf16.msra.mxu0 %v407
      %588 = vmatpush.bf16.msra.mxu0 %v406
      %589 = vmatpush.bf16.msra.mxu0 %v405
      %590 = vmatpush.bf16.msra.mxu0 %v404
      %591 = vmatmul.bf16.gmra.mxu0 %v578
      %v592 = vpop.f32.mrf.mxu0
      %v593 = vadd.f32 %v575, %v592
      %v594 = vpop.f32.mrf.mxu0
      %v595 = vadd.f32 %v575, %v594
      %596 = vmatmul.bf16.gmra.mxu0 %v581
      %v597 = vpop.f32.mrf.mxu0
      %v598 = vadd.f32 %v575, %v597
      %v599 = vpop.f32.mrf.mxu0
      %v600 = vadd.f32 %v575, %v599
      %601 = vdwg.mxu0
      %v602 = vmax.f32 %v593, 0.0
      %v603 = vmax.f32 %v595, 0.0
      %v604 = vmax.f32 %v598, 0.0
      %v605 = vmax.f32 %v600, 0.0
      %vm606 = vcmask 64512
      %607 = vst.msk [vmem:[%s302] sm:$0xff] %vm606, %v602
      %608 = vst.msk [vmem:[%s302 + $0x8] sm:$0xff] %vm606, %v603
      %609 = vst.msk [vmem:[%s302 + $0x10] sm:$0xff] %vm606, %v604
      %610 = vst.msk [vmem:[%s302 + $0x18] sm:$0xff] %vm606, %v605
      %611 = vset.pattern.permute.xlu0 1
      %612 = vperm.xlu0 %611, %v457
      %v613 = vpop.permute.xlu0 %612
      %615 = vset.pattern.permute.xlu0 1
      %616 = vperm.xlu0 %615, %v459
      %v617 = vpop.permute.xlu0 %616
      %619 = vset.pattern.permute.xlu0 1
      %620 = vperm.xlu0 %619, %v462
      %v621 = vpop.permute.xlu0 %620
      %623 = vset.pattern.permute.xlu0 1
      %624 = vperm.xlu0 %623, %v464
      %v625 = vpop.permute.xlu0 %624
      %v627 = vperm.slane %v434, 1
      %v628 = vadd.f32 %v613, %v627
      %v629 = vadd.f32 %v617, %v627
      %v630 = vadd.f32 %v621, %v627
      %v631 = vadd.f32 %v625, %v627
      %vm632 = vcmp.ge.f32.partialorder %v628, 0.0
      %vm633 = vcmp.ge.f32.partialorder %v629, 0.0
      %vm634 = vcmp.ge.f32.partialorder %v630, 0.0
      %vm635 = vcmp.ge.f32.partialorder %v631, 0.0
      %v636 = vmul.f32 %v628, 0.2
      %v637 = vmul.f32 %v629, 0.2
      %v638 = vmul.f32 %v630, 0.2
      %v639 = vmul.f32 %v631, 0.2
      %v640 = vsel %vm632, %v628, %v636
      %v641 = vsel %vm633, %v629, %v637
      %v642 = vsel %vm634, %v630, %v638
      %v643 = vsel %vm635, %v631, %v639
      %v644 = vsel %vm466, %v640, -1e+30
      %v645 = vsel %vm467, %v641, -1e+30
      %v646 = vsel %vm468, %v642, -1e+30
      %v647 = vsel %vm469, %v643, -1e+30
      %v648 = vsel %vm519, %v644, -inf
      %649 = vmax.xlane.f32.xlu0 %v648
      %v650 = vpop.xlane.xlu0 %649
      %v651 = vsel %vm519, %v645, -inf
      %652 = vmax.xlane.f32.xlu0 %v651
      %v653 = vpop.xlane.xlu0 %652
      %v654 = vsel %vm519, %v646, -inf
      %655 = vmax.xlane.f32.xlu0 %v654
      %v656 = vpop.xlane.xlu0 %655
      %v657 = vsel %vm519, %v647, -inf
      %658 = vmax.xlane.f32.xlu0 %v657
      %v659 = vpop.xlane.xlu0 %658
      %v660 = vsub.f32 %v644, %v650
      %v661 = vsub.f32 %v645, %v653
      %v662 = vsub.f32 %v646, %v656
      %v663 = vsub.f32 %v647, %v659
      %v664 = vmul.f32 %v660, 1.442695
      %v665 = vpow.pop %v664
      %v666 = vmul.f32 %v661, 1.442695
      %v667 = vpow.pop %v666
      %v668 = vmul.f32 %v662, 1.442695
      %v669 = vpow.pop %v668
      %v670 = vmul.f32 %v663, 1.442695
      %v671 = vpow.pop %v670
      %v672 = vmul.f32 %v665, %v474
      %v673 = vmul.f32 %v667, %v475
      %v674 = vmul.f32 %v669, %v476
      %v675 = vmul.f32 %v671, %v477
      %v676 = vsel %vm519, %v672, 0.0
      %677 = vadd.xlane.f32.xlu0 %v676
      %v678 = vpop.xlane.xlu0 %677
      %v679 = vsel %vm519, %v673, 0.0
      %680 = vadd.xlane.f32.xlu0 %v679
      %v681 = vpop.xlane.xlu0 %680
      %v682 = vsel %vm519, %v674, 0.0
      %683 = vadd.xlane.f32.xlu0 %v682
      %v684 = vpop.xlane.xlu0 %683
      %v685 = vsel %vm519, %v675, 0.0
      %686 = vadd.xlane.f32.xlu0 %v685
      %v687 = vpop.xlane.xlu0 %686
      %v688 = vadd.f32 %v678, 1e-20
      %v689 = vadd.f32 %v681, 1e-20
      %v690 = vadd.f32 %v684, 1e-20
      %v691 = vadd.f32 %v687, 1e-20
      %v692 = vrcp.pop %v688
      %v693 = vrcp.pop %v689
      %v694 = vrcp.pop %v690
      %v695 = vrcp.pop %v691
      %v696 = vmul.f32 %v672, %v692
      %v697 = vmul.f32 %v673, %v693
      %v698 = vmul.f32 %v674, %v694
      %v699 = vmul.f32 %v675, %v695
      %v700 = vpack.c.bf16 %v697, %v696
      %v701 = vpack.c.bf16 %v699, %v698
      %706 = vrot.lane.b32.xlu0 %v404, 120
      %v707 = vpop.permute.xlu0 %706
      %708 = vrot.lane.b32.xlu0 %v405, 120
      %v709 = vpop.permute.xlu0 %708
      %710 = vrot.lane.b32.xlu0 %v406, 120
      %v711 = vpop.permute.xlu0 %710
      %712 = vrot.lane.b32.xlu0 %v407, 120
      %v713 = vpop.permute.xlu0 %712
      %718 = vrot.lane.b32.xlu0 %v575, 120
      %v719 = vpop.permute.xlu0 %718
      %v722 = vsel %vm519, %v700, 0
      %v725 = vsel %vm519, %v701, 0
      %727 = vmatpush.bf16.msra.mxu0 0
      %728 = vmatpush.bf16.msra.mxu0 0
      %729 = vmatpush.bf16.msra.mxu0 0
      %730 = vmatpush.bf16.msra.mxu0 0
      %731 = vmatpush.bf16.msra.mxu0 %v713
      %732 = vmatpush.bf16.msra.mxu0 %v711
      %733 = vmatpush.bf16.msra.mxu0 %v709
      %734 = vmatpush.bf16.msra.mxu0 %v707
      %735 = vmatmul.bf16.gmra.mxu0 %v722
      %v736 = vpop.f32.mrf.mxu0
      %v737 = vadd.f32 %v719, %v736
      %v738 = vpop.f32.mrf.mxu0
      %v739 = vadd.f32 %v719, %v738
      %740 = vmatmul.bf16.gmra.mxu0 %v725
      %v741 = vpop.f32.mrf.mxu0
      %v742 = vadd.f32 %v719, %v741
      %v743 = vpop.f32.mrf.mxu0
      %v744 = vadd.f32 %v719, %v743
      %745 = vdwg.mxu0
      %v746 = vmax.f32 %v737, 0.0
      %v747 = vmax.f32 %v739, 0.0
      %v748 = vmax.f32 %v742, 0.0
      %v749 = vmax.f32 %v744, 0.0
      %754 = vrot.lane.b32.xlu0 %v746, 8
      %v755 = vpop.permute.xlu0 %754
      %756 = vrot.lane.b32.xlu0 %v747, 8
      %v757 = vpop.permute.xlu0 %756
      %758 = vrot.lane.b32.xlu0 %v748, 8
      %v759 = vpop.permute.xlu0 %758
      %760 = vrot.lane.b32.xlu0 %v749, 8
      %v761 = vpop.permute.xlu0 %760
      %vm766 = vcmask 130112
      %767 = vst.msk [vmem:[%s302] sm:$0xff] %vm766, %v755
      %768 = vst.msk [vmem:[%s302 + $0x8] sm:$0xff] %vm766, %v757
      %769 = vst.msk [vmem:[%s302 + $0x10] sm:$0xff] %vm766, %v759
      %770 = vst.msk [vmem:[%s302 + $0x18] sm:$0xff] %vm766, %v761
      %771 = vset.pattern.permute.xlu0 2
      %772 = vperm.xlu0 %771, %v457
      %v773 = vpop.permute.xlu0 %772
      %775 = vset.pattern.permute.xlu0 2
      %776 = vperm.xlu0 %775, %v459
      %v777 = vpop.permute.xlu0 %776
      %779 = vset.pattern.permute.xlu0 2
      %780 = vperm.xlu0 %779, %v462
      %v781 = vpop.permute.xlu0 %780
      %783 = vset.pattern.permute.xlu0 2
      %784 = vperm.xlu0 %783, %v464
      %v785 = vpop.permute.xlu0 %784
      %v787 = vperm.slane %v434, 2
      %v788 = vadd.f32 %v773, %v787
      %v789 = vadd.f32 %v777, %v787
      %v790 = vadd.f32 %v781, %v787
      %v791 = vadd.f32 %v785, %v787
      %vm792 = vcmp.ge.f32.partialorder %v788, 0.0
      %vm793 = vcmp.ge.f32.partialorder %v789, 0.0
      %vm794 = vcmp.ge.f32.partialorder %v790, 0.0
      %vm795 = vcmp.ge.f32.partialorder %v791, 0.0
      %v796 = vmul.f32 %v788, 0.2
      %v797 = vmul.f32 %v789, 0.2
      %v798 = vmul.f32 %v790, 0.2
      %v799 = vmul.f32 %v791, 0.2
      %v800 = vsel %vm792, %v788, %v796
      %v801 = vsel %vm793, %v789, %v797
      %v802 = vsel %vm794, %v790, %v798
      %v803 = vsel %vm795, %v791, %v799
      %v804 = vsel %vm466, %v800, -1e+30
      %v805 = vsel %vm467, %v801, -1e+30
      %v806 = vsel %vm468, %v802, -1e+30
      %v807 = vsel %vm469, %v803, -1e+30
      %v808 = vsel %vm519, %v804, -inf
      %809 = vmax.xlane.f32.xlu0 %v808
      %v810 = vpop.xlane.xlu0 %809
      %v811 = vsel %vm519, %v805, -inf
      %812 = vmax.xlane.f32.xlu0 %v811
      %v813 = vpop.xlane.xlu0 %812
      %v814 = vsel %vm519, %v806, -inf
      %815 = vmax.xlane.f32.xlu0 %v814
      %v816 = vpop.xlane.xlu0 %815
      %v817 = vsel %vm519, %v807, -inf
      %818 = vmax.xlane.f32.xlu0 %v817
      %v819 = vpop.xlane.xlu0 %818
      %v820 = vsub.f32 %v804, %v810
      %v821 = vsub.f32 %v805, %v813
      %v822 = vsub.f32 %v806, %v816
      %v823 = vsub.f32 %v807, %v819
      %v824 = vmul.f32 %v820, 1.442695
      %v825 = vpow.pop %v824
      %v826 = vmul.f32 %v821, 1.442695
      %v827 = vpow.pop %v826
      %v828 = vmul.f32 %v822, 1.442695
      %v829 = vpow.pop %v828
      %v830 = vmul.f32 %v823, 1.442695
      %v831 = vpow.pop %v830
      %v832 = vmul.f32 %v825, %v474
      %v833 = vmul.f32 %v827, %v475
      %v834 = vmul.f32 %v829, %v476
      %v835 = vmul.f32 %v831, %v477
      %v836 = vsel %vm519, %v832, 0.0
      %837 = vadd.xlane.f32.xlu0 %v836
      %v838 = vpop.xlane.xlu0 %837
      %v839 = vsel %vm519, %v833, 0.0
      %840 = vadd.xlane.f32.xlu0 %v839
      %v841 = vpop.xlane.xlu0 %840
      %v842 = vsel %vm519, %v834, 0.0
      %843 = vadd.xlane.f32.xlu0 %v842
      %v844 = vpop.xlane.xlu0 %843
      %v845 = vsel %vm519, %v835, 0.0
      %846 = vadd.xlane.f32.xlu0 %v845
      %v847 = vpop.xlane.xlu0 %846
      %v848 = vadd.f32 %v838, 1e-20
      %v849 = vadd.f32 %v841, 1e-20
      %v850 = vadd.f32 %v844, 1e-20
      %v851 = vadd.f32 %v847, 1e-20
      %v852 = vrcp.pop %v848
      %v853 = vrcp.pop %v849
      %v854 = vrcp.pop %v850
      %v855 = vrcp.pop %v851
      %v856 = vmul.f32 %v832, %v852
      %v857 = vmul.f32 %v833, %v853
      %v858 = vmul.f32 %v834, %v854
      %v859 = vmul.f32 %v835, %v855
      %v860 = vpack.c.bf16 %v857, %v856
      %v861 = vpack.c.bf16 %v859, %v858
      %862 = vrot.lane.b32.xlu0 %v404, 112
      %v863 = vpop.permute.xlu0 %862
      %864 = vrot.lane.b32.xlu0 %v405, 112
      %v865 = vpop.permute.xlu0 %864
      %866 = vrot.lane.b32.xlu0 %v406, 112
      %v867 = vpop.permute.xlu0 %866
      %868 = vrot.lane.b32.xlu0 %v407, 112
      %v869 = vpop.permute.xlu0 %868
      %874 = vrot.lane.b32.xlu0 %v575, 112
      %v875 = vpop.permute.xlu0 %874
      %v878 = vsel %vm519, %v860, 0
      %v881 = vsel %vm519, %v861, 0
      %883 = vmatpush.bf16.msra.mxu0 0
      %884 = vmatpush.bf16.msra.mxu0 0
      %885 = vmatpush.bf16.msra.mxu0 0
      %886 = vmatpush.bf16.msra.mxu0 0
      %887 = vmatpush.bf16.msra.mxu0 %v869
      %888 = vmatpush.bf16.msra.mxu0 %v867
      %889 = vmatpush.bf16.msra.mxu0 %v865
      %890 = vmatpush.bf16.msra.mxu0 %v863
      %891 = vmatmul.bf16.gmra.mxu0 %v878
      %v892 = vpop.f32.mrf.mxu0
      %v893 = vadd.f32 %v875, %v892
      %v894 = vpop.f32.mrf.mxu0
      %v895 = vadd.f32 %v875, %v894
      %896 = vmatmul.bf16.gmra.mxu0 %v881
      %v897 = vpop.f32.mrf.mxu0
      %v898 = vadd.f32 %v875, %v897
      %v899 = vpop.f32.mrf.mxu0
      %v900 = vadd.f32 %v875, %v899
      %901 = vdwg.mxu0
      %v902 = vmax.f32 %v893, 0.0
      %v903 = vmax.f32 %v895, 0.0
      %v904 = vmax.f32 %v898, 0.0
      %v905 = vmax.f32 %v900, 0.0
      %910 = vrot.lane.b32.xlu0 %v902, 16
      %v911 = vpop.permute.xlu0 %910
      %912 = vrot.lane.b32.xlu0 %v903, 16
      %v913 = vpop.permute.xlu0 %912
      %914 = vrot.lane.b32.xlu0 %v904, 16
      %v915 = vpop.permute.xlu0 %914
      %916 = vrot.lane.b32.xlu0 %v905, 16
      %v917 = vpop.permute.xlu0 %916
      %vm922 = vcmask 195712
      %923 = vst.msk [vmem:[%s302] sm:$0xff] %vm922, %v911
      %924 = vst.msk [vmem:[%s302 + $0x8] sm:$0xff] %vm922, %v913
      %925 = vst.msk [vmem:[%s302 + $0x10] sm:$0xff] %vm922, %v915
      %926 = vst.msk [vmem:[%s302 + $0x18] sm:$0xff] %vm922, %v917
      %927 = vset.pattern.permute.xlu0 3
      %928 = vperm.xlu0 %927, %v457
      %v929 = vpop.permute.xlu0 %928
      %931 = vset.pattern.permute.xlu0 3
      %932 = vperm.xlu0 %931, %v459
      %v933 = vpop.permute.xlu0 %932
      %935 = vset.pattern.permute.xlu0 3
      %936 = vperm.xlu0 %935, %v462
      %v937 = vpop.permute.xlu0 %936
      %939 = vset.pattern.permute.xlu0 3
      %940 = vperm.xlu0 %939, %v464
      %v941 = vpop.permute.xlu0 %940
      %v943 = vperm.slane %v434, 3
      %v944 = vadd.f32 %v929, %v943
      %v945 = vadd.f32 %v933, %v943
      %v946 = vadd.f32 %v937, %v943
      %v947 = vadd.f32 %v941, %v943
      %vm948 = vcmp.ge.f32.partialorder %v944, 0.0
      %vm949 = vcmp.ge.f32.partialorder %v945, 0.0
      %vm950 = vcmp.ge.f32.partialorder %v946, 0.0
      %vm951 = vcmp.ge.f32.partialorder %v947, 0.0
      %v952 = vmul.f32 %v944, 0.2
      %v953 = vmul.f32 %v945, 0.2
      %v954 = vmul.f32 %v946, 0.2
      %v955 = vmul.f32 %v947, 0.2
      %v956 = vsel %vm948, %v944, %v952
      %v957 = vsel %vm949, %v945, %v953
      %v958 = vsel %vm950, %v946, %v954
      %v959 = vsel %vm951, %v947, %v955
      %v960 = vsel %vm466, %v956, -1e+30
      %v961 = vsel %vm467, %v957, -1e+30
      %v962 = vsel %vm468, %v958, -1e+30
      %v963 = vsel %vm469, %v959, -1e+30
      %v964 = vsel %vm519, %v960, -inf
      %965 = vmax.xlane.f32.xlu0 %v964
      %v966 = vpop.xlane.xlu0 %965
      %v967 = vsel %vm519, %v961, -inf
      %968 = vmax.xlane.f32.xlu0 %v967
      %v969 = vpop.xlane.xlu0 %968
      %v970 = vsel %vm519, %v962, -inf
      %971 = vmax.xlane.f32.xlu0 %v970
      %v972 = vpop.xlane.xlu0 %971
      %v973 = vsel %vm519, %v963, -inf
      %974 = vmax.xlane.f32.xlu0 %v973
      %v975 = vpop.xlane.xlu0 %974
      %v976 = vsub.f32 %v960, %v966
      %v977 = vsub.f32 %v961, %v969
      %v978 = vsub.f32 %v962, %v972
      %v979 = vsub.f32 %v963, %v975
      %v980 = vmul.f32 %v976, 1.442695
      %v981 = vpow.pop %v980
      %v982 = vmul.f32 %v977, 1.442695
      %v983 = vpow.pop %v982
      %v984 = vmul.f32 %v978, 1.442695
      %v985 = vpow.pop %v984
      %v986 = vmul.f32 %v979, 1.442695
      %v987 = vpow.pop %v986
      %v988 = vmul.f32 %v981, %v474
      %v989 = vmul.f32 %v983, %v475
      %v990 = vmul.f32 %v985, %v476
      %v991 = vmul.f32 %v987, %v477
      %v992 = vsel %vm519, %v988, 0.0
      %993 = vadd.xlane.f32.xlu0 %v992
      %v994 = vpop.xlane.xlu0 %993
      %v995 = vsel %vm519, %v989, 0.0
      %996 = vadd.xlane.f32.xlu0 %v995
      %v997 = vpop.xlane.xlu0 %996
      %v998 = vsel %vm519, %v990, 0.0
      %999 = vadd.xlane.f32.xlu0 %v998
      %v1000 = vpop.xlane.xlu0 %999
      %v1001 = vsel %vm519, %v991, 0.0
      %1002 = vadd.xlane.f32.xlu0 %v1001
      %v1003 = vpop.xlane.xlu0 %1002
      %v1004 = vadd.f32 %v994, 1e-20
      %v1005 = vadd.f32 %v997, 1e-20
      %v1006 = vadd.f32 %v1000, 1e-20
      %v1007 = vadd.f32 %v1003, 1e-20
      %v1008 = vrcp.pop %v1004
      %v1009 = vrcp.pop %v1005
      %v1010 = vrcp.pop %v1006
      %v1011 = vrcp.pop %v1007
      %v1012 = vmul.f32 %v988, %v1008
      %v1013 = vmul.f32 %v989, %v1009
      %v1014 = vmul.f32 %v990, %v1010
      %v1015 = vmul.f32 %v991, %v1011
      %v1016 = vpack.c.bf16 %v1013, %v1012
      %v1017 = vpack.c.bf16 %v1015, %v1014
      %1018 = vrot.lane.b32.xlu0 %v404, 104
      %v1019 = vpop.permute.xlu0 %1018
      %1020 = vrot.lane.b32.xlu0 %v405, 104
      %v1021 = vpop.permute.xlu0 %1020
      %1022 = vrot.lane.b32.xlu0 %v406, 104
      %v1023 = vpop.permute.xlu0 %1022
      %1024 = vrot.lane.b32.xlu0 %v407, 104
      %v1025 = vpop.permute.xlu0 %1024
      %1030 = vrot.lane.b32.xlu0 %v575, 104
      %v1031 = vpop.permute.xlu0 %1030
      %v1034 = vsel %vm519, %v1016, 0
      %v1037 = vsel %vm519, %v1017, 0
      %1039 = vmatpush.bf16.msra.mxu0 0
      %1040 = vmatpush.bf16.msra.mxu0 0
      %1041 = vmatpush.bf16.msra.mxu0 0
      %1042 = vmatpush.bf16.msra.mxu0 0
      %1043 = vmatpush.bf16.msra.mxu0 %v1025
      %1044 = vmatpush.bf16.msra.mxu0 %v1023
      %1045 = vmatpush.bf16.msra.mxu0 %v1021
      %1046 = vmatpush.bf16.msra.mxu0 %v1019
      %1047 = vmatmul.bf16.gmra.mxu0 %v1034
      %v1048 = vpop.f32.mrf.mxu0
      %v1049 = vadd.f32 %v1031, %v1048
      %v1050 = vpop.f32.mrf.mxu0
      %v1051 = vadd.f32 %v1031, %v1050
      %1052 = vmatmul.bf16.gmra.mxu0 %v1037
      %v1053 = vpop.f32.mrf.mxu0
      %v1054 = vadd.f32 %v1031, %v1053
      %v1055 = vpop.f32.mrf.mxu0
      %v1056 = vadd.f32 %v1031, %v1055
      %1057 = vdwg.mxu0
      %v1058 = vmax.f32 %v1049, 0.0
      %v1059 = vmax.f32 %v1051, 0.0
      %v1060 = vmax.f32 %v1054, 0.0
      %v1061 = vmax.f32 %v1056, 0.0
      %1066 = vrot.lane.b32.xlu0 %v1058, 24
      %v1067 = vpop.permute.xlu0 %1066
      %1068 = vrot.lane.b32.xlu0 %v1059, 24
      %v1069 = vpop.permute.xlu0 %1068
      %1070 = vrot.lane.b32.xlu0 %v1060, 24
      %v1071 = vpop.permute.xlu0 %1070
      %1072 = vrot.lane.b32.xlu0 %v1061, 24
      %v1073 = vpop.permute.xlu0 %1072
      %vm1078 = vcmask 261312
      %1079 = vst.msk [vmem:[%s302] sm:$0xff] %vm1078, %v1067
      %1080 = vst.msk [vmem:[%s302 + $0x8] sm:$0xff] %vm1078, %v1069
      %1081 = vst.msk [vmem:[%s302 + $0x10] sm:$0xff] %vm1078, %v1071
      %1082 = vst.msk [vmem:[%s302 + $0x18] sm:$0xff] %vm1078, %v1073
      %s1083 = smul.u32 4, %s18
      %p1084 = scmp.lt.s32.totalorder %s1083, 7
      %s1085 = scalar_select %p1084, %s1083, 7
      %s1086 = smul.addr %s1085, 8
      %s1087 = scalar_lea.vmem %s7, %s1086
      // Predicated region
      $region49: #{gat_forward.4} parent=47 // pred_check
        %p1088 = pneg %p193
      $region50: #{gat_forward.4} parent=47 // pred_check_branch
        %1090 = sbr.rel (%p1088) target = $region52
      $region51: #{gat_forward.4} parent=47 // pred_region
        %s1091 = smul.u32 4, %s18
      $region52: #{gat_forward.4} parent=47 // pred_fallthru
        _
    $region48: #{gat_forward.4} parent=5 // pred_fallthru
      _
    %p1092 = scmp.le.s32.totalorder 2, %s13
    // Predicated region
    $region53: #{gat_forward.4} parent=5 // pred_check
      %p1093 = pneg %p1092
    $region54: #{gat_forward.4} parent=5 // pred_check_branch
      %1095 = sbr.rel (%p1093) target = $region56
    $region55: #{gat_forward.4} parent=5 // pred_region
      %s1096 = ssub.s32 %s13, 2
      // Predicated region
      $region57: #{gat_forward.4} parent=55 // pred_check
        %p1097 = pneg %p199
      $region58: #{gat_forward.4} parent=55 // pred_check_branch
        %1099 = sbr.rel (%p1097) target = $region60
      $region59: #{gat_forward.4} parent=55 // pred_region
        %s1100 = smul.u32 4, %s19
        %p1101 = scmp.lt.s32.totalorder %s1100, 7
        %s1102 = scalar_select %p1101, %s1100, 7
        %s1103 = smul.addr %s1102, 8
        %s1104 = scalar_lea.vmem %s7, %s1103
      $region60: #{gat_forward.4} parent=55 // pred_fallthru
        _
    $region56: #{gat_forward.4} parent=5 // pred_fallthru
      _
  $region6: #{gat_forward.4} parent=0 // loop_footer
    %s17 = sadd.s32 1, %s13
  $region7: #{gat_forward.4} parent=0 // loop_footer_branch
    %12 = sbr.rel target = $region3
  $region8: #{gat_forward.4} parent=0 // loop_exit
    _

// kernel: gat_forward.5
$region0: #{gat_forward.5}
  #allocation0 [shape = 'u32[]', space=smem, size = 0x4, offset = 0x4, fixed_abs, tag = 'smem constant byte address 0x4 - core index']
  #allocation1 [shape = 'u32[72,128]{1,0:T(1,128)}', space=vmem, size = 0x9000, scoped, tag = 'internal scratch']
  %s0 = inlined_call_operand.vmem [shape: f32[64,32], index: 0, kind: input, shape index: {}, may-alias: {0,1}]
  %s1 = inlined_call_operand.vmem [shape: f32[64,32], index: 1, kind: input, shape index: {}, may-alias: {0,1}]
  %s2 = inlined_call_operand.vmem [shape: f32[64,64], index: 2, kind: input, shape index: {}]
  %s3 = inlined_call_operand.vmem [shape: f32[32,32], index: 3, kind: input, shape index: {}]
  %s4 = inlined_call_operand.vmem [shape: f32[8,32], index: 4, kind: input, shape index: {}]
  %s5 = inlined_call_operand.vmem [shape: f32[32,8], index: 5, kind: input, shape index: {}]
  %s6 = inlined_call_operand.vmem [shape: f32[1,32], index: 6, kind: input, shape index: {}]
  %s7 = inlined_call_operand.vmem [shape: f32[64,32], index: 7, kind: output, shape index: {}]
  %s8 = sld [smem:[#allocation0]]
  $region61: #{gat_forward.5} parent=0
    _
  %s10 = ssub.s32 1, %s8
  %s11 = scalar_select 0, %s10, %s8
  loop: start=0, step=1, limit=4
  $region2: #{gat_forward.5} parent=0 // loop_pre_header
    _
  $region3: #{gat_forward.5} parent=0 // loop_header
    %s13 = sphi 0, %s17
    %p14 = scmp.ge.s32.totalorder %s13, 4
    %s21 = sphi 0, %s21
    %s23 = sphi 0, %s21
    %s24 = sphi 0, %s23
    %s38 = sphi 0, %s24
    %s44 = sphi 0, %s46
    %s47 = sphi 0, %s44
    %s48 = sphi 0, %s47
    %s64 = sphi 0, %s48
    %s70 = sphi 0, %s72
    %s73 = sphi 0, %s70
    %s74 = sphi 0, %s73
    %s90 = sphi 0, %s74
    %s94 = sphi 0, %s94
    %s96 = sphi 0, %s94
    %s97 = sphi 0, %s96
    %s111 = sphi 0, %s97
    %s115 = sphi 0, %s115
    %s117 = sphi 0, %s115
    %s118 = sphi 0, %s117
    %s132 = sphi 0, %s118
    %s136 = sphi 0, %s136
    %s138 = sphi 0, %s136
    %s139 = sphi 0, %s138
    %s153 = sphi 0, %s139
    %s157 = sphi 0, %s157
    %s159 = sphi 0, %s157
    %s160 = sphi 0, %s159
    %s174 = sphi 0, %s160
    %s180 = sphi 0, %s182
    %s183 = sphi 0, %s180
    %s184 = sphi 0, %s183
    %s200 = sphi 0, %s184
  $region4: #{gat_forward.5} parent=0 // loop_header_branch
    %16 = sbr.rel (%p14) target = $region8
  $region5: #{gat_forward.5} parent=0 // loop_body
    %s18 = ssub.s32 %s13, 1
    %s19 = ssub.s32 %s13, 2
    %s20 = sadd.s32 %s13, 1
    %s22 = sadd.s32 %s21, 1
    %p25 = scmp.eq.s32.totalorder %s13, 1
    %p26 = scmp.ne.s32.totalorder %s21, %s23
    %p27 = scmp.eq.s32.totalorder %s13, 0
    %p28 = por %p26, %p27
    %p29 = scmp.ne.s32.totalorder %s21, %s23
    %p30 = scmp.eq.s32.totalorder %s18, 1
    %p31 = por %p29, %p30
    %p32 = scmp.ne.s32.totalorder %s23, %s24
    %p33 = scmp.eq.s32.totalorder %s18, 0
    %p34 = por %p32, %p33
    %p35 = scmp.ne.s32.totalorder %s23, %s24
    %p36 = scmp.eq.s32.totalorder %s19, 1
    %p37 = por %p35, %p36
    %p39 = scmp.ne.s32.totalorder %s24, %s38
    %p40 = scmp.eq.s32.totalorder %s19, 0
    %p41 = por %p39, %p40
    %s42 = ssub.s32 %s13, %s20
    %p43 = scmp.eq.s32.totalorder %s42, 0
    %s45 = sadd.s32 %s44, 1
    %s46 = scalar_select %p43, %s44, %s45
    %p49 = pneg %p43
    %p50 = scmp.eq.s32.totalorder %s13, 1
    %p51 = por %p49, %p50
    %p52 = scmp.ne.s32.totalorder %s44, %s47
    %p53 = scmp.eq.s32.totalorder %s13, 0
    %p54 = por %p52, %p53
    %p55 = scmp.ne.s32.totalorder %s44, %s47
    %p56 = scmp.eq.s32.totalorder %s18, 1
    %p57 = por %p55, %p56
    %p58 = scmp.ne.s32.totalorder %s47, %s48
    %p59 = scmp.eq.s32.totalorder %s18, 0
    %p60 = por %p58, %p59
    %p61 = scmp.ne.s32.totalorder %s47, %s48
    %p62 = scmp.eq.s32.totalorder %s19, 1
    %p63 = por %p61, %p62
    %p65 = scmp.ne.s32.totalorder %s48, %s64
    %p66 = scmp.eq.s32.totalorder %s19, 0
    %p67 = por %p65, %p66
    %s68 = ssub.s32 %s13, %s20
    %p69 = scmp.eq.s32.totalorder %s68, 0
    %s71 = sadd.s32 %s70, 1
    %s72 = scalar_select %p69, %s70, %s71
    %p75 = pneg %p69
    %p76 = scmp.eq.s32.totalorder %s13, 1
    %p77 = por %p75, %p76
    %p78 = scmp.ne.s32.totalorder %s70, %s73
    %p79 = scmp.eq.s32.totalorder %s13, 0
    %p80 = por %p78, %p79
    %p81 = scmp.ne.s32.totalorder %s70, %s73
    %p82 = scmp.eq.s32.totalorder %s18, 1
    %p83 = por %p81, %p82
    %p84 = scmp.ne.s32.totalorder %s73, %s74
    %p85 = scmp.eq.s32.totalorder %s18, 0
    %p86 = por %p84, %p85
    %p87 = scmp.ne.s32.totalorder %s73, %s74
    %p88 = scmp.eq.s32.totalorder %s19, 1
    %p89 = por %p87, %p88
    %p91 = scmp.ne.s32.totalorder %s74, %s90
    %p92 = scmp.eq.s32.totalorder %s19, 0
    %p93 = por %p91, %p92
    %s95 = sadd.s32 %s94, 1
    %p98 = scmp.eq.s32.totalorder %s13, 1
    %p99 = scmp.ne.s32.totalorder %s94, %s96
    %p100 = scmp.eq.s32.totalorder %s13, 0
    %p101 = por %p99, %p100
    %p102 = scmp.ne.s32.totalorder %s94, %s96
    %p103 = scmp.eq.s32.totalorder %s18, 1
    %p104 = por %p102, %p103
    %p105 = scmp.ne.s32.totalorder %s96, %s97
    %p106 = scmp.eq.s32.totalorder %s18, 0
    %p107 = por %p105, %p106
    %p108 = scmp.ne.s32.totalorder %s96, %s97
    %p109 = scmp.eq.s32.totalorder %s19, 1
    %p110 = por %p108, %p109
    %p112 = scmp.ne.s32.totalorder %s97, %s111
    %p113 = scmp.eq.s32.totalorder %s19, 0
    %p114 = por %p112, %p113
    %s116 = sadd.s32 %s115, 1
    %p119 = scmp.eq.s32.totalorder %s13, 1
    %p120 = scmp.ne.s32.totalorder %s115, %s117
    %p121 = scmp.eq.s32.totalorder %s13, 0
    %p122 = por %p120, %p121
    %p123 = scmp.ne.s32.totalorder %s115, %s117
    %p124 = scmp.eq.s32.totalorder %s18, 1
    %p125 = por %p123, %p124
    %p126 = scmp.ne.s32.totalorder %s117, %s118
    %p127 = scmp.eq.s32.totalorder %s18, 0
    %p128 = por %p126, %p127
    %p129 = scmp.ne.s32.totalorder %s117, %s118
    %p130 = scmp.eq.s32.totalorder %s19, 1
    %p131 = por %p129, %p130
    %p133 = scmp.ne.s32.totalorder %s118, %s132
    %p134 = scmp.eq.s32.totalorder %s19, 0
    %p135 = por %p133, %p134
    %s137 = sadd.s32 %s136, 1
    %p140 = scmp.eq.s32.totalorder %s13, 1
    %p141 = scmp.ne.s32.totalorder %s136, %s138
    %p142 = scmp.eq.s32.totalorder %s13, 0
    %p143 = por %p141, %p142
    %p144 = scmp.ne.s32.totalorder %s136, %s138
    %p145 = scmp.eq.s32.totalorder %s18, 1
    %p146 = por %p144, %p145
    %p147 = scmp.ne.s32.totalorder %s138, %s139
    %p148 = scmp.eq.s32.totalorder %s18, 0
    %p149 = por %p147, %p148
    %p150 = scmp.ne.s32.totalorder %s138, %s139
    %p151 = scmp.eq.s32.totalorder %s19, 1
    %p152 = por %p150, %p151
    %p154 = scmp.ne.s32.totalorder %s139, %s153
    %p155 = scmp.eq.s32.totalorder %s19, 0
    %p156 = por %p154, %p155
    %s158 = sadd.s32 %s157, 1
    %p161 = scmp.eq.s32.totalorder %s13, 1
    %p162 = scmp.ne.s32.totalorder %s157, %s159
    %p163 = scmp.eq.s32.totalorder %s13, 0
    %p164 = por %p162, %p163
    %p165 = scmp.ne.s32.totalorder %s157, %s159
    %p166 = scmp.eq.s32.totalorder %s18, 1
    %p167 = por %p165, %p166
    %p168 = scmp.ne.s32.totalorder %s159, %s160
    %p169 = scmp.eq.s32.totalorder %s18, 0
    %p170 = por %p168, %p169
    %p171 = scmp.ne.s32.totalorder %s159, %s160
    %p172 = scmp.eq.s32.totalorder %s19, 1
    %p173 = por %p171, %p172
    %p175 = scmp.ne.s32.totalorder %s160, %s174
    %p176 = scmp.eq.s32.totalorder %s19, 0
    %p177 = por %p175, %p176
    %s178 = ssub.s32 %s13, %s20
    %p179 = scmp.eq.s32.totalorder %s178, 0
    %s181 = sadd.s32 %s180, 1
    %s182 = scalar_select %p179, %s180, %s181
    %p185 = pneg %p179
    %p186 = scmp.eq.s32.totalorder %s13, 1
    %p187 = por %p185, %p186
    %p188 = scmp.ne.s32.totalorder %s180, %s183
    %p189 = scmp.eq.s32.totalorder %s13, 0
    %p190 = por %p188, %p189
    %p191 = scmp.ne.s32.totalorder %s180, %s183
    %p192 = scmp.eq.s32.totalorder %s18, 1
    %p193 = por %p191, %p192
    %p194 = scmp.ne.s32.totalorder %s183, %s184
    %p195 = scmp.eq.s32.totalorder %s18, 0
    %p196 = por %p194, %p195
    %p197 = scmp.ne.s32.totalorder %s183, %s184
    %p198 = scmp.eq.s32.totalorder %s19, 1
    %p199 = por %p197, %p198
    %p201 = scmp.ne.s32.totalorder %s184, %s200
    %p202 = scmp.eq.s32.totalorder %s19, 0
    %p203 = por %p201, %p202
    %p204 = scmp.le.s32.totalorder 1, %s13
    %p205 = scmp.lt.s32.totalorder %s13, 3
    %p206 = pnand %p204, %p205
    %p207 = pneg %p206
    // Predicated region
    $region9: #{gat_forward.5} parent=5 // pred_check
      _
    $region10: #{gat_forward.5} parent=5 // pred_check_branch
      %209 = sbr.rel (%p206) target = $region12
    $region11: #{gat_forward.5} parent=5 // pred_region
      %s210 = ssub.s32 %s13, 1
      // Predicated region
      $region13: #{gat_forward.5} parent=11 // pred_check
        %p211 = pneg %p34
      $region14: #{gat_forward.5} parent=11 // pred_check_branch
        %213 = sbr.rel (%p211) target = $region16
      $region15: #{gat_forward.5} parent=11 // pred_region
        _
      $region16: #{gat_forward.5} parent=11 // pred_fallthru
        _
      // Predicated region
      $region17: #{gat_forward.5} parent=11 // pred_check
        %p214 = pneg %p107
      $region18: #{gat_forward.5} parent=11 // pred_check_branch
        %216 = sbr.rel (%p214) target = $region20
      $region19: #{gat_forward.5} parent=11 // pred_region
        _
      $region20: #{gat_forward.5} parent=11 // pred_fallthru
        _
      // Predicated region
      $region21: #{gat_forward.5} parent=11 // pred_check
        %p217 = pneg %p128
      $region22: #{gat_forward.5} parent=11 // pred_check_branch
        %219 = sbr.rel (%p217) target = $region24
      $region23: #{gat_forward.5} parent=11 // pred_region
        _
      $region24: #{gat_forward.5} parent=11 // pred_fallthru
        _
      // Predicated region
      $region25: #{gat_forward.5} parent=11 // pred_check
        %p220 = pneg %p149
      $region26: #{gat_forward.5} parent=11 // pred_check_branch
        %222 = sbr.rel (%p220) target = $region28
      $region27: #{gat_forward.5} parent=11 // pred_region
        _
      $region28: #{gat_forward.5} parent=11 // pred_fallthru
        _
      // Predicated region
      $region29: #{gat_forward.5} parent=11 // pred_check
        %p223 = pneg %p170
      $region30: #{gat_forward.5} parent=11 // pred_check_branch
        %225 = sbr.rel (%p223) target = $region32
      $region31: #{gat_forward.5} parent=11 // pred_region
        _
      $region32: #{gat_forward.5} parent=11 // pred_fallthru
        _
    $region12: #{gat_forward.5} parent=5 // pred_fallthru
      _
    %p226 = scmp.lt.s32.totalorder %s13, 2
    // Predicated region
    $region33: #{gat_forward.5} parent=5 // pred_check
      %p227 = pneg %p226
    $region34: #{gat_forward.5} parent=5 // pred_check_branch
      %229 = sbr.rel (%p227) target = $region36
    $region35: #{gat_forward.5} parent=5 // pred_region
      // Predicated region
      $region37: #{gat_forward.5} parent=35 // pred_check
        %p230 = pneg %p54
      $region38: #{gat_forward.5} parent=35 // pred_check_branch
        %232 = sbr.rel (%p230) target = $region40
      $region39: #{gat_forward.5} parent=35 // pred_region
        %s233 = smul.u32 4, %s13
        %p234 = scmp.lt.s32.totalorder %s233, 7
        %s235 = scalar_select %p234, %s233, 7
        %s236 = smul.addr %s235, 8
        %s237 = scalar_lea.vmem %s1, %s236
        %s238 = smul.u32 4, %s13
      $region40: #{gat_forward.5} parent=35 // pred_fallthru
        _
      // Predicated region
      $region41: #{gat_forward.5} parent=35 // pred_check
        %p239 = pneg %p80
      $region42: #{gat_forward.5} parent=35 // pred_check_branch
        %241 = sbr.rel (%p239) target = $region44
      $region43: #{gat_forward.5} parent=35 // pred_region
        %s242 = smul.u32 4, %s13
        %p243 = scmp.lt.s32.totalorder %s242, 7
        %s244 = scalar_select %p243, %s242, 7
        %s245 = smul.addr %s244, 8
        %s246 = scalar_lea.vmem %s2, %s245
        %s247 = smul.u32 4, %s13
      $region44: #{gat_forward.5} parent=35 // pred_fallthru
        _
    $region36: #{gat_forward.5} parent=5 // pred_fallthru
      _
    %p248 = scmp.le.s32.totalorder 1, %s13
    %p249 = scmp.lt.s32.totalorder %s13, 3
    %p250 = pnand %p248, %p249
    %p251 = pneg %p250
    // Predicated region
    $region45: #{gat_forward.5} parent=5 // pred_check
      _
    $region46: #{gat_forward.5} parent=5 // pred_check_branch
      %253 = sbr.rel (%p250) target = $region48
    $region47: #{gat_forward.5} parent=5 // pred_region
      %s254 = ssub.s32 %s13, 1
      %p255 = pneg %p34
      %p256 = pneg %p31
      %s257 = smul.u32 4, %s18
      %p258 = scmp.lt.s32.totalorder %s257, 7
      %s259 = scalar_select %p258, %s257, 7
      %s260 = smul.addr %s259, 8
      %s261 = scalar_lea.vmem %s1, %s260
      %p262 = pneg %p60
      %p263 = pneg %p57
      %s264 = smul.u32 4, %s18
      %p265 = scmp.lt.s32.totalorder %s264, 7
      %s266 = scalar_select %p265, %s264, 7
      %s267 = smul.addr %s266, 8
      %s268 = scalar_lea.vmem %s2, %s267
      %p269 = pneg %p86
      %p270 = pneg %p83
      %p271 = pneg %p107
      %p272 = pneg %p104
      %p273 = pneg %p128
      %p274 = pneg %p125
      %p275 = pneg %p149
      %p276 = pneg %p146
      %p277 = pneg %p170
      %p278 = pneg %p167
      %p279 = pneg %p196
      %p280 = pneg %p193
      %s281 = smul.u32 4, %s18
      %p282 = scmp.lt.s32.totalorder %s281, 7
      %s283 = scalar_select %p282, %s281, 7
      %s284 = smul.addr %s283, 8
      %s285 = scalar_lea.vmem %s7, %s284
      %s286 = smul.u32 4, %s18
      %p287 = scmp.lt.s32.totalorder %s286, 7
      %s288 = scalar_select %p287, %s286, 7
      %s289 = smul.addr %s288, 8
      %s290 = scalar_lea.vmem %s1, %s289
      %s291 = smul.u32 4, %s18
      %s292 = smul.u32 4, %s18
      %p293 = scmp.lt.s32.totalorder %s292, 7
      %s294 = scalar_select %p293, %s292, 7
      %s295 = smul.addr %s294, 8
      %s296 = scalar_lea.vmem %s2, %s295
      %s297 = smul.u32 4, %s18
      %s298 = smul.u32 4, %s18
      %p299 = scmp.lt.s32.totalorder %s298, 7
      %s300 = scalar_select %p299, %s298, 7
      %s301 = smul.addr %s300, 8
      %s302 = scalar_lea.vmem %s7, %s301
      %s303 = smul.u32 4, %s18
      %v305 = vld [vmem:[%s0] sm:$0xff]
      %v306 = vld [vmem:[%s0 + $0x8] sm:$0xff]
      %v307 = vld [vmem:[%s0 + $0x10] sm:$0xff]
      %v308 = vld [vmem:[%s0 + $0x18] sm:$0xff]
      %v309 = vld [vmem:[%s0 + $0x20] sm:$0xff]
      %v310 = vld [vmem:[%s0 + $0x28] sm:$0xff]
      %v311 = vld [vmem:[%s0 + $0x30] sm:$0xff]
      %v312 = vld [vmem:[%s0 + $0x38] sm:$0xff]
      %v313 = vld [vmem:[%s290] sm:$0xff]
      %v314 = vld [vmem:[%s290 + $0x8] sm:$0xff]
      %v315 = vld [vmem:[%s290 + $0x10] sm:$0xff]
      %v316 = vld [vmem:[%s290 + $0x18] sm:$0xff]
      %v317 = vld [vmem:[%s296] sm:$0xff]
      %v318 = vld [vmem:[%s296 + $0x8] sm:$0xff]
      %v319 = vld [vmem:[%s296 + $0x10] sm:$0xff]
      %v320 = vld [vmem:[%s296 + $0x18] sm:$0xff]
      %v321 = vld [vmem:[%s3] sm:$0xff]
      %v322 = vld [vmem:[%s3 + $0x8] sm:$0xff]
      %v323 = vld [vmem:[%s3 + $0x10] sm:$0xff]
      %v324 = vld [vmem:[%s3 + $0x18] sm:$0xff]
      %v325 = vld [vmem:[%s4] sm:$0xff]
      %v326 = vld [vmem:[%s5] sm:$0xff]
      %v327 = vld [vmem:[%s5 + $0x8] sm:$0xff]
      %v328 = vld [vmem:[%s5 + $0x10] sm:$0xff]
      %v329 = vld [vmem:[%s5 + $0x18] sm:$0xff]
      %v330 = vld [vmem:[%s6] sm:$0x1]
      %v331 = vpack.c.bf16 %v306, %v305
      %v332 = vpack.c.bf16 %v308, %v307
      %v333 = vpack.c.bf16 %v310, %v309
      %v334 = vpack.c.bf16 %v312, %v311
      %v335 = vpack.c.bf16 %v322, %v321
      %v336 = vpack.c.bf16 %v324, %v323
      %vm337 = vcmask 261120
      %v339 = vsel %vm337, %v331, 0
      %v342 = vsel %vm337, %v332, 0
      %v345 = vsel %vm337, %v333, 0
      %v348 = vsel %vm337, %v334, 0
      %350 = vmatpush.bf16.msra.mxu0 0
      %351 = vmatpush.bf16.msra.mxu0 0
      %352 = vmatpush.bf16.msra.mxu0 0
      %353 = vmatpush.bf16.msra.mxu0 0
      %354 = vmatpush.bf16.msra.mxu0 0
      %355 = vmatpush.bf16.msra.mxu0 0
      %356 = vmatpush.bf16.msra.mxu0 %v336
      %357 = vmatpush.bf16.msra.mxu0 %v335
      %358 = vmatmul.bf16.gmra.mxu0 %v339
      %v359 = vpop.f32.mrf.mxu0
      %v360 = vadd.f32 0.0, %v359
      %v361 = vpop.f32.mrf.mxu0
      %v362 = vadd.f32 0.0, %v361
      %363 = vmatmul.bf16.gmra.mxu0 %v342
      %v364 = vpop.f32.mrf.mxu0
      %v365 = vadd.f32 0.0, %v364
      %v366 = vpop.f32.mrf.mxu0
      %v367 = vadd.f32 0.0, %v366
      %368 = vmatmul.bf16.gmra.mxu0 %v345
      %v369 = vpop.f32.mrf.mxu0
      %v370 = vadd.f32 0.0, %v369
      %v371 = vpop.f32.mrf.mxu0
      %v372 = vadd.f32 0.0, %v371
      %373 = vmatmul.bf16.gmra.mxu0 %v348
      %v374 = vpop.f32.mrf.mxu0
      %v375 = vadd.f32 0.0, %v374
      %v376 = vpop.f32.mrf.mxu0
      %v377 = vadd.f32 0.0, %v376
      %378 = vdwg.mxu0
      %v379 = vpack.c.bf16 %v314, %v313
      %v380 = vpack.c.bf16 %v316, %v315
      %v382 = vsel %vm337, %v379, 0
      %v385 = vsel %vm337, %v380, 0
      %387 = vmatpush.bf16.msra.mxu0 0
      %388 = vmatpush.bf16.msra.mxu0 0
      %389 = vmatpush.bf16.msra.mxu0 0
      %390 = vmatpush.bf16.msra.mxu0 0
      %391 = vmatpush.bf16.msra.mxu0 0
      %392 = vmatpush.bf16.msra.mxu0 0
      %393 = vmatpush.bf16.msra.mxu0 %v336
      %394 = vmatpush.bf16.msra.mxu0 %v335
      %395 = vmatmul.bf16.gmra.mxu0 %v382
      %v396 = vpop.f32.mrf.mxu0
      %v397 = vadd.f32 0.0, %v396
      %v398 = vpop.f32.mrf.mxu0
      %v399 = vadd.f32 0.0, %v398
      %400 = vmatmul.bf16.gmra.mxu0 %v385
      %v401 = vpop.f32.mrf.mxu0
      %v402 = vadd.f32 0.0, %v401
      %v403 = vpop.f32.mrf.mxu0
      %v404 = vadd.f32 0.0, %v403
      %405 = vdwg.mxu0
      %v406 = vpack.c.bf16 %v325, %v325
      %v407 = vpack.c.bf16 %v362, %v360
      %v408 = vpack.c.bf16 %v367, %v365
      %v409 = vpack.c.bf16 %v372, %v370
      %v410 = vpack.c.bf16 %v377, %v375
      %v412 = vsel %vm337, %v406, 0
      %v415 = vsel %vm337, %v407, 0
      %v418 = vsel %vm337, %v408, 0
      %v421 = vsel %vm337, %v409, 0
      %v424 = vsel %vm337, %v410, 0
      %426 = vmatpush.bf16.xpose.msra.mxu0 0
      %427 = vmatpush.bf16.xpose.msra.mxu0 0
      %428 = vmatpush.bf16.xpose.msra.mxu0 0
      %429 = vmatpush.bf16.xpose.msra.mxu0 0
      %430 = vmatpush.bf16.xpose.msra.mxu0 %v424
      %431 = vmatpush.bf16.xpose.msra.mxu0 %v421
      %432 = vmatpush.bf16.xpose.msra.mxu0 %v418
      %433 = vmatpush.bf16.xpose.msra.mxu0 %v415
      %434 = vmatmul.bf16.gmra.mxu0 %v412
      %v435 = vpop.f32.mrf.mxu0
      %v436 = vadd.f32 0.0, %v435
      %v437 = vpop.f32.mrf.mxu0
      %438 = vdwg.mxu0
      %v439 = vpack.c.bf16 %v399, %v397
      %v440 = vpack.c.bf16 %v404, %v402
      %v441 = vpack.c.bf16 %v327, %v326
      %v442 = vpack.c.bf16 %v329, %v328
      %v444 = vsel %vm337, %v439, 0
      %v447 = vsel %vm337, %v440, 0
      %449 = vmatpush.bf16.msra.mxu0 0
      %450 = vmatpush.bf16.msra.mxu0 0
      %451 = vmatpush.bf16.msra.mxu0 0
      %452 = vmatpush.bf16.msra.mxu0 0
      %453 = vmatpush.bf16.msra.mxu0 0
      %454 = vmatpush.bf16.msra.mxu0 0
      %455 = vmatpush.bf16.msra.mxu0 %v442
      %456 = vmatpush.bf16.msra.mxu0 %v441
      %457 = vmatmul.bf16.gmra.mxu0 %v444
      %v458 = vpop.f32.mrf.mxu0
      %v459 = vadd.f32 0.0, %v458
      %v460 = vpop.f32.mrf.mxu0
      %v461 = vadd.f32 0.0, %v460
      %462 = vmatmul.bf16.gmra.mxu0 %v447
      %v463 = vpop.f32.mrf.mxu0
      %v464 = vadd.f32 0.0, %v463
      %v465 = vpop.f32.mrf.mxu0
      %v466 = vadd.f32 0.0, %v465
      %467 = vdwg.mxu0
      %vm468 = vcmp.gt.f32.partialorder %v317, 0.5
      %vm469 = vcmp.gt.f32.partialorder %v318, 0.5
      %vm470 = vcmp.gt.f32.partialorder %v319, 0.5
      %vm471 = vcmp.gt.f32.partialorder %v320, 0.5
      %v472 = vsel %vm468, 1, 0
      %v473 = vsel %vm469, 1, 0
      %v474 = vsel %vm470, 1, 0
      %v475 = vsel %vm471, 1, 0
      %v476 = vcvt.s32.f32 %v472
      %v477 = vcvt.s32.f32 %v473
      %v478 = vcvt.s32.f32 %v474
      %v479 = vcvt.s32.f32 %v475
      %481 = vset.pattern.permute.xlu0 0
      %482 = vperm.xlu0 %481, %v459
      %v483 = vpop.permute.xlu0 %482
      %486 = vset.pattern.permute.xlu0 0
      %487 = vperm.xlu0 %486, %v461
      %v488 = vpop.permute.xlu0 %487
      %491 = vset.pattern.permute.xlu0 0
      %492 = vperm.xlu0 %491, %v464
      %v493 = vpop.permute.xlu0 %492
      %496 = vset.pattern.permute.xlu0 0
      %497 = vperm.xlu0 %496, %v466
      %v498 = vpop.permute.xlu0 %497
      %v500 = vperm.slane %v436, 0
      %v501 = vadd.f32 %v483, %v500
      %v502 = vadd.f32 %v488, %v500
      %v503 = vadd.f32 %v493, %v500
      %v504 = vadd.f32 %v498, %v500
      %vm505 = vcmp.ge.f32.partialorder %v501, 0.0
      %vm506 = vcmp.ge.f32.partialorder %v502, 0.0
      %vm507 = vcmp.ge.f32.partialorder %v503, 0.0
      %vm508 = vcmp.ge.f32.partialorder %v504, 0.0
      %v509 = vmul.f32 %v501, 0.2
      %v510 = vmul.f32 %v502, 0.2
      %v511 = vmul.f32 %v503, 0.2
      %v512 = vmul.f32 %v504, 0.2
      %v513 = vsel %vm505, %v501, %v509
      %v514 = vsel %vm506, %v502, %v510
      %v515 = vsel %vm507, %v503, %v511
      %v516 = vsel %vm508, %v504, %v512
      %v517 = vsel %vm468, %v513, -1e+30
      %v518 = vsel %vm469, %v514, -1e+30
      %v519 = vsel %vm470, %v515, -1e+30
      %v520 = vsel %vm471, %v516, -1e+30
      %vm521 = vcmask 523264
      %v522 = vsel %vm521, %v517, -inf
      %523 = vmax.xlane.f32.xlu0 %v522
      %v524 = vpop.xlane.xlu0 %523
      %v525 = vsel %vm521, %v518, -inf
      %526 = vmax.xlane.f32.xlu0 %v525
      %v527 = vpop.xlane.xlu0 %526
      %v528 = vsel %vm521, %v519, -inf
      %529 = vmax.xlane.f32.xlu0 %v528
      %v530 = vpop.xlane.xlu0 %529
      %v531 = vsel %vm521, %v520, -inf
      %532 = vmax.xlane.f32.xlu0 %v531
      %v533 = vpop.xlane.xlu0 %532
      %v534 = vsub.f32 %v517, %v524
      %v535 = vsub.f32 %v518, %v527
      %v536 = vsub.f32 %v519, %v530
      %v537 = vsub.f32 %v520, %v533
      %v538 = vmul.f32 %v534, 1.442695
      %v539 = vpow.pop %v538
      %v540 = vmul.f32 %v535, 1.442695
      %v541 = vpow.pop %v540
      %v542 = vmul.f32 %v536, 1.442695
      %v543 = vpow.pop %v542
      %v544 = vmul.f32 %v537, 1.442695
      %v545 = vpow.pop %v544
      %v546 = vmul.f32 %v539, %v476
      %v547 = vmul.f32 %v541, %v477
      %v548 = vmul.f32 %v543, %v478
      %v549 = vmul.f32 %v545, %v479
      %v550 = vsel %vm521, %v546, 0.0
      %551 = vadd.xlane.f32.xlu0 %v550
      %v552 = vpop.xlane.xlu0 %551
      %v553 = vsel %vm521, %v547, 0.0
      %554 = vadd.xlane.f32.xlu0 %v553
      %v555 = vpop.xlane.xlu0 %554
      %v556 = vsel %vm521, %v548, 0.0
      %557 = vadd.xlane.f32.xlu0 %v556
      %v558 = vpop.xlane.xlu0 %557
      %v559 = vsel %vm521, %v549, 0.0
      %560 = vadd.xlane.f32.xlu0 %v559
      %v561 = vpop.xlane.xlu0 %560
      %v562 = vadd.f32 %v552, 1e-20
      %v563 = vadd.f32 %v555, 1e-20
      %v564 = vadd.f32 %v558, 1e-20
      %v565 = vadd.f32 %v561, 1e-20
      %v566 = vrcp.pop %v562
      %v567 = vrcp.pop %v563
      %v568 = vrcp.pop %v564
      %v569 = vrcp.pop %v565
      %v570 = vmul.f32 %v546, %v566
      %v571 = vmul.f32 %v547, %v567
      %v572 = vmul.f32 %v548, %v568
      %v573 = vmul.f32 %v549, %v569
      %v574 = vpack.c.bf16 %v571, %v570
      %v575 = vpack.c.bf16 %v573, %v572
      %v577 = vperm.slane %v330, 0
      %v580 = vsel %vm521, %v574, 0
      %v583 = vsel %vm521, %v575, 0
      %585 = vmatpush.bf16.msra.mxu0 0
      %586 = vmatpush.bf16.msra.mxu0 0
      %587 = vmatpush.bf16.msra.mxu0 0
      %588 = vmatpush.bf16.msra.mxu0 0
      %589 = vmatpush.bf16.msra.mxu0 %v410
      %590 = vmatpush.bf16.msra.mxu0 %v409
      %591 = vmatpush.bf16.msra.mxu0 %v408
      %592 = vmatpush.bf16.msra.mxu0 %v407
      %593 = vmatmul.bf16.gmra.mxu0 %v580
      %v594 = vpop.f32.mrf.mxu0
      %v595 = vadd.f32 %v577, %v594
      %v596 = vpop.f32.mrf.mxu0
      %v597 = vadd.f32 %v577, %v596
      %598 = vmatmul.bf16.gmra.mxu0 %v583
      %v599 = vpop.f32.mrf.mxu0
      %v600 = vadd.f32 %v577, %v599
      %v601 = vpop.f32.mrf.mxu0
      %v602 = vadd.f32 %v577, %v601
      %603 = vdwg.mxu0
      %v604 = vmax.f32 %v595, 0.0
      %v605 = vmax.f32 %v597, 0.0
      %v606 = vmax.f32 %v600, 0.0
      %v607 = vmax.f32 %v602, 0.0
      %vm608 = vcmask 64512
      %609 = vst.msk [vmem:[%s302] sm:$0xff] %vm608, %v604
      %610 = vst.msk [vmem:[%s302 + $0x8] sm:$0xff] %vm608, %v605
      %611 = vst.msk [vmem:[%s302 + $0x10] sm:$0xff] %vm608, %v606
      %612 = vst.msk [vmem:[%s302 + $0x18] sm:$0xff] %vm608, %v607
      %613 = vset.pattern.permute.xlu0 1
      %614 = vperm.xlu0 %613, %v459
      %v615 = vpop.permute.xlu0 %614
      %617 = vset.pattern.permute.xlu0 1
      %618 = vperm.xlu0 %617, %v461
      %v619 = vpop.permute.xlu0 %618
      %621 = vset.pattern.permute.xlu0 1
      %622 = vperm.xlu0 %621, %v464
      %v623 = vpop.permute.xlu0 %622
      %625 = vset.pattern.permute.xlu0 1
      %626 = vperm.xlu0 %625, %v466
      %v627 = vpop.permute.xlu0 %626
      %v629 = vperm.slane %v436, 1
      %v630 = vadd.f32 %v615, %v629
      %v631 = vadd.f32 %v619, %v629
      %v632 = vadd.f32 %v623, %v629
      %v633 = vadd.f32 %v627, %v629
      %vm634 = vcmp.ge.f32.partialorder %v630, 0.0
      %vm635 = vcmp.ge.f32.partialorder %v631, 0.0
      %vm636 = vcmp.ge.f32.partialorder %v632, 0.0
      %vm637 = vcmp.ge.f32.partialorder %v633, 0.0
      %v638 = vmul.f32 %v630, 0.2
      %v639 = vmul.f32 %v631, 0.2
      %v640 = vmul.f32 %v632, 0.2
      %v641 = vmul.f32 %v633, 0.2
      %v642 = vsel %vm634, %v630, %v638
      %v643 = vsel %vm635, %v631, %v639
      %v644 = vsel %vm636, %v632, %v640
      %v645 = vsel %vm637, %v633, %v641
      %v646 = vsel %vm468, %v642, -1e+30
      %v647 = vsel %vm469, %v643, -1e+30
      %v648 = vsel %vm470, %v644, -1e+30
      %v649 = vsel %vm471, %v645, -1e+30
      %v650 = vsel %vm521, %v646, -inf
      %651 = vmax.xlane.f32.xlu0 %v650
      %v652 = vpop.xlane.xlu0 %651
      %v653 = vsel %vm521, %v647, -inf
      %654 = vmax.xlane.f32.xlu0 %v653
      %v655 = vpop.xlane.xlu0 %654
      %v656 = vsel %vm521, %v648, -inf
      %657 = vmax.xlane.f32.xlu0 %v656
      %v658 = vpop.xlane.xlu0 %657
      %v659 = vsel %vm521, %v649, -inf
      %660 = vmax.xlane.f32.xlu0 %v659
      %v661 = vpop.xlane.xlu0 %660
      %v662 = vsub.f32 %v646, %v652
      %v663 = vsub.f32 %v647, %v655
      %v664 = vsub.f32 %v648, %v658
      %v665 = vsub.f32 %v649, %v661
      %v666 = vmul.f32 %v662, 1.442695
      %v667 = vpow.pop %v666
      %v668 = vmul.f32 %v663, 1.442695
      %v669 = vpow.pop %v668
      %v670 = vmul.f32 %v664, 1.442695
      %v671 = vpow.pop %v670
      %v672 = vmul.f32 %v665, 1.442695
      %v673 = vpow.pop %v672
      %v674 = vmul.f32 %v667, %v476
      %v675 = vmul.f32 %v669, %v477
      %v676 = vmul.f32 %v671, %v478
      %v677 = vmul.f32 %v673, %v479
      %v678 = vsel %vm521, %v674, 0.0
      %679 = vadd.xlane.f32.xlu0 %v678
      %v680 = vpop.xlane.xlu0 %679
      %v681 = vsel %vm521, %v675, 0.0
      %682 = vadd.xlane.f32.xlu0 %v681
      %v683 = vpop.xlane.xlu0 %682
      %v684 = vsel %vm521, %v676, 0.0
      %685 = vadd.xlane.f32.xlu0 %v684
      %v686 = vpop.xlane.xlu0 %685
      %v687 = vsel %vm521, %v677, 0.0
      %688 = vadd.xlane.f32.xlu0 %v687
      %v689 = vpop.xlane.xlu0 %688
      %v690 = vadd.f32 %v680, 1e-20
      %v691 = vadd.f32 %v683, 1e-20
      %v692 = vadd.f32 %v686, 1e-20
      %v693 = vadd.f32 %v689, 1e-20
      %v694 = vrcp.pop %v690
      %v695 = vrcp.pop %v691
      %v696 = vrcp.pop %v692
      %v697 = vrcp.pop %v693
      %v698 = vmul.f32 %v674, %v694
      %v699 = vmul.f32 %v675, %v695
      %v700 = vmul.f32 %v676, %v696
      %v701 = vmul.f32 %v677, %v697
      %v702 = vpack.c.bf16 %v699, %v698
      %v703 = vpack.c.bf16 %v701, %v700
      %708 = vrot.lane.b32.xlu0 %v407, 120
      %v709 = vpop.permute.xlu0 %708
      %710 = vrot.lane.b32.xlu0 %v408, 120
      %v711 = vpop.permute.xlu0 %710
      %712 = vrot.lane.b32.xlu0 %v409, 120
      %v713 = vpop.permute.xlu0 %712
      %714 = vrot.lane.b32.xlu0 %v410, 120
      %v715 = vpop.permute.xlu0 %714
      %720 = vrot.lane.b32.xlu0 %v577, 120
      %v721 = vpop.permute.xlu0 %720
      %v724 = vsel %vm521, %v702, 0
      %v727 = vsel %vm521, %v703, 0
      %729 = vmatpush.bf16.msra.mxu0 0
      %730 = vmatpush.bf16.msra.mxu0 0
      %731 = vmatpush.bf16.msra.mxu0 0
      %732 = vmatpush.bf16.msra.mxu0 0
      %733 = vmatpush.bf16.msra.mxu0 %v715
      %734 = vmatpush.bf16.msra.mxu0 %v713
      %735 = vmatpush.bf16.msra.mxu0 %v711
      %736 = vmatpush.bf16.msra.mxu0 %v709
      %737 = vmatmul.bf16.gmra.mxu0 %v724
      %v738 = vpop.f32.mrf.mxu0
      %v739 = vadd.f32 %v721, %v738
      %v740 = vpop.f32.mrf.mxu0
      %v741 = vadd.f32 %v721, %v740
      %742 = vmatmul.bf16.gmra.mxu0 %v727
      %v743 = vpop.f32.mrf.mxu0
      %v744 = vadd.f32 %v721, %v743
      %v745 = vpop.f32.mrf.mxu0
      %v746 = vadd.f32 %v721, %v745
      %747 = vdwg.mxu0
      %v748 = vmax.f32 %v739, 0.0
      %v749 = vmax.f32 %v741, 0.0
      %v750 = vmax.f32 %v744, 0.0
      %v751 = vmax.f32 %v746, 0.0
      %756 = vrot.lane.b32.xlu0 %v748, 8
      %v757 = vpop.permute.xlu0 %756
      %758 = vrot.lane.b32.xlu0 %v749, 8
      %v759 = vpop.permute.xlu0 %758
      %760 = vrot.lane.b32.xlu0 %v750, 8
      %v761 = vpop.permute.xlu0 %760
      %762 = vrot.lane.b32.xlu0 %v751, 8
      %v763 = vpop.permute.xlu0 %762
      %vm768 = vcmask 130112
      %769 = vst.msk [vmem:[%s302] sm:$0xff] %vm768, %v757
      %770 = vst.msk [vmem:[%s302 + $0x8] sm:$0xff] %vm768, %v759
      %771 = vst.msk [vmem:[%s302 + $0x10] sm:$0xff] %vm768, %v761
      %772 = vst.msk [vmem:[%s302 + $0x18] sm:$0xff] %vm768, %v763
      %773 = vset.pattern.permute.xlu0 2
      %774 = vperm.xlu0 %773, %v459
      %v775 = vpop.permute.xlu0 %774
      %777 = vset.pattern.permute.xlu0 2
      %778 = vperm.xlu0 %777, %v461
      %v779 = vpop.permute.xlu0 %778
      %781 = vset.pattern.permute.xlu0 2
      %782 = vperm.xlu0 %781, %v464
      %v783 = vpop.permute.xlu0 %782
      %785 = vset.pattern.permute.xlu0 2
      %786 = vperm.xlu0 %785, %v466
      %v787 = vpop.permute.xlu0 %786
      %v789 = vperm.slane %v436, 2
      %v790 = vadd.f32 %v775, %v789
      %v791 = vadd.f32 %v779, %v789
      %v792 = vadd.f32 %v783, %v789
      %v793 = vadd.f32 %v787, %v789
      %vm794 = vcmp.ge.f32.partialorder %v790, 0.0
      %vm795 = vcmp.ge.f32.partialorder %v791, 0.0
      %vm796 = vcmp.ge.f32.partialorder %v792, 0.0
      %vm797 = vcmp.ge.f32.partialorder %v793, 0.0
      %v798 = vmul.f32 %v790, 0.2
      %v799 = vmul.f32 %v791, 0.2
      %v800 = vmul.f32 %v792, 0.2
      %v801 = vmul.f32 %v793, 0.2
      %v802 = vsel %vm794, %v790, %v798
      %v803 = vsel %vm795, %v791, %v799
      %v804 = vsel %vm796, %v792, %v800
      %v805 = vsel %vm797, %v793, %v801
      %v806 = vsel %vm468, %v802, -1e+30
      %v807 = vsel %vm469, %v803, -1e+30
      %v808 = vsel %vm470, %v804, -1e+30
      %v809 = vsel %vm471, %v805, -1e+30
      %v810 = vsel %vm521, %v806, -inf
      %811 = vmax.xlane.f32.xlu0 %v810
      %v812 = vpop.xlane.xlu0 %811
      %v813 = vsel %vm521, %v807, -inf
      %814 = vmax.xlane.f32.xlu0 %v813
      %v815 = vpop.xlane.xlu0 %814
      %v816 = vsel %vm521, %v808, -inf
      %817 = vmax.xlane.f32.xlu0 %v816
      %v818 = vpop.xlane.xlu0 %817
      %v819 = vsel %vm521, %v809, -inf
      %820 = vmax.xlane.f32.xlu0 %v819
      %v821 = vpop.xlane.xlu0 %820
      %v822 = vsub.f32 %v806, %v812
      %v823 = vsub.f32 %v807, %v815
      %v824 = vsub.f32 %v808, %v818
      %v825 = vsub.f32 %v809, %v821
      %v826 = vmul.f32 %v822, 1.442695
      %v827 = vpow.pop %v826
      %v828 = vmul.f32 %v823, 1.442695
      %v829 = vpow.pop %v828
      %v830 = vmul.f32 %v824, 1.442695
      %v831 = vpow.pop %v830
      %v832 = vmul.f32 %v825, 1.442695
      %v833 = vpow.pop %v832
      %v834 = vmul.f32 %v827, %v476
      %v835 = vmul.f32 %v829, %v477
      %v836 = vmul.f32 %v831, %v478
      %v837 = vmul.f32 %v833, %v479
      %v838 = vsel %vm521, %v834, 0.0
      %839 = vadd.xlane.f32.xlu0 %v838
      %v840 = vpop.xlane.xlu0 %839
      %v841 = vsel %vm521, %v835, 0.0
      %842 = vadd.xlane.f32.xlu0 %v841
      %v843 = vpop.xlane.xlu0 %842
      %v844 = vsel %vm521, %v836, 0.0
      %845 = vadd.xlane.f32.xlu0 %v844
      %v846 = vpop.xlane.xlu0 %845
      %v847 = vsel %vm521, %v837, 0.0
      %848 = vadd.xlane.f32.xlu0 %v847
      %v849 = vpop.xlane.xlu0 %848
      %v850 = vadd.f32 %v840, 1e-20
      %v851 = vadd.f32 %v843, 1e-20
      %v852 = vadd.f32 %v846, 1e-20
      %v853 = vadd.f32 %v849, 1e-20
      %v854 = vrcp.pop %v850
      %v855 = vrcp.pop %v851
      %v856 = vrcp.pop %v852
      %v857 = vrcp.pop %v853
      %v858 = vmul.f32 %v834, %v854
      %v859 = vmul.f32 %v835, %v855
      %v860 = vmul.f32 %v836, %v856
      %v861 = vmul.f32 %v837, %v857
      %v862 = vpack.c.bf16 %v859, %v858
      %v863 = vpack.c.bf16 %v861, %v860
      %864 = vrot.lane.b32.xlu0 %v407, 112
      %v865 = vpop.permute.xlu0 %864
      %866 = vrot.lane.b32.xlu0 %v408, 112
      %v867 = vpop.permute.xlu0 %866
      %868 = vrot.lane.b32.xlu0 %v409, 112
      %v869 = vpop.permute.xlu0 %868
      %870 = vrot.lane.b32.xlu0 %v410, 112
      %v871 = vpop.permute.xlu0 %870
      %876 = vrot.lane.b32.xlu0 %v577, 112
      %v877 = vpop.permute.xlu0 %876
      %v880 = vsel %vm521, %v862, 0
      %v883 = vsel %vm521, %v863, 0
      %885 = vmatpush.bf16.msra.mxu0 0
      %886 = vmatpush.bf16.msra.mxu0 0
      %887 = vmatpush.bf16.msra.mxu0 0
      %888 = vmatpush.bf16.msra.mxu0 0
      %889 = vmatpush.bf16.msra.mxu0 %v871
      %890 = vmatpush.bf16.msra.mxu0 %v869
      %891 = vmatpush.bf16.msra.mxu0 %v867
      %892 = vmatpush.bf16.msra.mxu0 %v865
      %893 = vmatmul.bf16.gmra.mxu0 %v880
      %v894 = vpop.f32.mrf.mxu0
      %v895 = vadd.f32 %v877, %v894
      %v896 = vpop.f32.mrf.mxu0
      %v897 = vadd.f32 %v877, %v896
      %898 = vmatmul.bf16.gmra.mxu0 %v883
      %v899 = vpop.f32.mrf.mxu0
      %v900 = vadd.f32 %v877, %v899
      %v901 = vpop.f32.mrf.mxu0
      %v902 = vadd.f32 %v877, %v901
      %903 = vdwg.mxu0
      %v904 = vmax.f32 %v895, 0.0
      %v905 = vmax.f32 %v897, 0.0
      %v906 = vmax.f32 %v900, 0.0
      %v907 = vmax.f32 %v902, 0.0
      %912 = vrot.lane.b32.xlu0 %v904, 16
      %v913 = vpop.permute.xlu0 %912
      %914 = vrot.lane.b32.xlu0 %v905, 16
      %v915 = vpop.permute.xlu0 %914
      %916 = vrot.lane.b32.xlu0 %v906, 16
      %v917 = vpop.permute.xlu0 %916
      %918 = vrot.lane.b32.xlu0 %v907, 16
      %v919 = vpop.permute.xlu0 %918
      %vm924 = vcmask 195712
      %925 = vst.msk [vmem:[%s302] sm:$0xff] %vm924, %v913
      %926 = vst.msk [vmem:[%s302 + $0x8] sm:$0xff] %vm924, %v915
      %927 = vst.msk [vmem:[%s302 + $0x10] sm:$0xff] %vm924, %v917
      %928 = vst.msk [vmem:[%s302 + $0x18] sm:$0xff] %vm924, %v919
      %929 = vset.pattern.permute.xlu0 3
      %930 = vperm.xlu0 %929, %v459
      %v931 = vpop.permute.xlu0 %930
      %933 = vset.pattern.permute.xlu0 3
      %934 = vperm.xlu0 %933, %v461
      %v935 = vpop.permute.xlu0 %934
      %937 = vset.pattern.permute.xlu0 3
      %938 = vperm.xlu0 %937, %v464
      %v939 = vpop.permute.xlu0 %938
      %941 = vset.pattern.permute.xlu0 3
      %942 = vperm.xlu0 %941, %v466
      %v943 = vpop.permute.xlu0 %942
      %v945 = vperm.slane %v436, 3
      %v946 = vadd.f32 %v931, %v945
      %v947 = vadd.f32 %v935, %v945
      %v948 = vadd.f32 %v939, %v945
      %v949 = vadd.f32 %v943, %v945
      %vm950 = vcmp.ge.f32.partialorder %v946, 0.0
      %vm951 = vcmp.ge.f32.partialorder %v947, 0.0
      %vm952 = vcmp.ge.f32.partialorder %v948, 0.0
      %vm953 = vcmp.ge.f32.partialorder %v949, 0.0
      %v954 = vmul.f32 %v946, 0.2
      %v955 = vmul.f32 %v947, 0.2
      %v956 = vmul.f32 %v948, 0.2
      %v957 = vmul.f32 %v949, 0.2
      %v958 = vsel %vm950, %v946, %v954
      %v959 = vsel %vm951, %v947, %v955
      %v960 = vsel %vm952, %v948, %v956
      %v961 = vsel %vm953, %v949, %v957
      %v962 = vsel %vm468, %v958, -1e+30
      %v963 = vsel %vm469, %v959, -1e+30
      %v964 = vsel %vm470, %v960, -1e+30
      %v965 = vsel %vm471, %v961, -1e+30
      %v966 = vsel %vm521, %v962, -inf
      %967 = vmax.xlane.f32.xlu0 %v966
      %v968 = vpop.xlane.xlu0 %967
      %v969 = vsel %vm521, %v963, -inf
      %970 = vmax.xlane.f32.xlu0 %v969
      %v971 = vpop.xlane.xlu0 %970
      %v972 = vsel %vm521, %v964, -inf
      %973 = vmax.xlane.f32.xlu0 %v972
      %v974 = vpop.xlane.xlu0 %973
      %v975 = vsel %vm521, %v965, -inf
      %976 = vmax.xlane.f32.xlu0 %v975
      %v977 = vpop.xlane.xlu0 %976
      %v978 = vsub.f32 %v962, %v968
      %v979 = vsub.f32 %v963, %v971
      %v980 = vsub.f32 %v964, %v974
      %v981 = vsub.f32 %v965, %v977
      %v982 = vmul.f32 %v978, 1.442695
      %v983 = vpow.pop %v982
      %v984 = vmul.f32 %v979, 1.442695
      %v985 = vpow.pop %v984
      %v986 = vmul.f32 %v980, 1.442695
      %v987 = vpow.pop %v986
      %v988 = vmul.f32 %v981, 1.442695
      %v989 = vpow.pop %v988
      %v990 = vmul.f32 %v983, %v476
      %v991 = vmul.f32 %v985, %v477
      %v992 = vmul.f32 %v987, %v478
      %v993 = vmul.f32 %v989, %v479
      %v994 = vsel %vm521, %v990, 0.0
      %995 = vadd.xlane.f32.xlu0 %v994
      %v996 = vpop.xlane.xlu0 %995
      %v997 = vsel %vm521, %v991, 0.0
      %998 = vadd.xlane.f32.xlu0 %v997
      %v999 = vpop.xlane.xlu0 %998
      %v1000 = vsel %vm521, %v992, 0.0
      %1001 = vadd.xlane.f32.xlu0 %v1000
      %v1002 = vpop.xlane.xlu0 %1001
      %v1003 = vsel %vm521, %v993, 0.0
      %1004 = vadd.xlane.f32.xlu0 %v1003
      %v1005 = vpop.xlane.xlu0 %1004
      %v1006 = vadd.f32 %v996, 1e-20
      %v1007 = vadd.f32 %v999, 1e-20
      %v1008 = vadd.f32 %v1002, 1e-20
      %v1009 = vadd.f32 %v1005, 1e-20
      %v1010 = vrcp.pop %v1006
      %v1011 = vrcp.pop %v1007
      %v1012 = vrcp.pop %v1008
      %v1013 = vrcp.pop %v1009
      %v1014 = vmul.f32 %v990, %v1010
      %v1015 = vmul.f32 %v991, %v1011
      %v1016 = vmul.f32 %v992, %v1012
      %v1017 = vmul.f32 %v993, %v1013
      %v1018 = vpack.c.bf16 %v1015, %v1014
      %v1019 = vpack.c.bf16 %v1017, %v1016
      %1020 = vrot.lane.b32.xlu0 %v407, 104
      %v1021 = vpop.permute.xlu0 %1020
      %1022 = vrot.lane.b32.xlu0 %v408, 104
      %v1023 = vpop.permute.xlu0 %1022
      %1024 = vrot.lane.b32.xlu0 %v409, 104
      %v1025 = vpop.permute.xlu0 %1024
      %1026 = vrot.lane.b32.xlu0 %v410, 104
      %v1027 = vpop.permute.xlu0 %1026
      %1032 = vrot.lane.b32.xlu0 %v577, 104
      %v1033 = vpop.permute.xlu0 %1032
      %v1036 = vsel %vm521, %v1018, 0
      %v1039 = vsel %vm521, %v1019, 0
      %1041 = vmatpush.bf16.msra.mxu0 0
      %1042 = vmatpush.bf16.msra.mxu0 0
      %1043 = vmatpush.bf16.msra.mxu0 0
      %1044 = vmatpush.bf16.msra.mxu0 0
      %1045 = vmatpush.bf16.msra.mxu0 %v1027
      %1046 = vmatpush.bf16.msra.mxu0 %v1025
      %1047 = vmatpush.bf16.msra.mxu0 %v1023
      %1048 = vmatpush.bf16.msra.mxu0 %v1021
      %1049 = vmatmul.bf16.gmra.mxu0 %v1036
      %v1050 = vpop.f32.mrf.mxu0
      %v1051 = vadd.f32 %v1033, %v1050
      %v1052 = vpop.f32.mrf.mxu0
      %v1053 = vadd.f32 %v1033, %v1052
      %1054 = vmatmul.bf16.gmra.mxu0 %v1039
      %v1055 = vpop.f32.mrf.mxu0
      %v1056 = vadd.f32 %v1033, %v1055
      %v1057 = vpop.f32.mrf.mxu0
      %v1058 = vadd.f32 %v1033, %v1057
      %1059 = vdwg.mxu0
      %v1060 = vmax.f32 %v1051, 0.0
      %v1061 = vmax.f32 %v1053, 0.0
      %v1062 = vmax.f32 %v1056, 0.0
      %v1063 = vmax.f32 %v1058, 0.0
      %1068 = vrot.lane.b32.xlu0 %v1060, 24
      %v1069 = vpop.permute.xlu0 %1068
      %1070 = vrot.lane.b32.xlu0 %v1061, 24
      %v1071 = vpop.permute.xlu0 %1070
      %1072 = vrot.lane.b32.xlu0 %v1062, 24
      %v1073 = vpop.permute.xlu0 %1072
      %1074 = vrot.lane.b32.xlu0 %v1063, 24
      %v1075 = vpop.permute.xlu0 %1074
      %vm1080 = vcmask 261312
      %1081 = vst.msk [vmem:[%s302] sm:$0xff] %vm1080, %v1069
      %1082 = vst.msk [vmem:[%s302 + $0x8] sm:$0xff] %vm1080, %v1071
      %1083 = vst.msk [vmem:[%s302 + $0x10] sm:$0xff] %vm1080, %v1073
      %1084 = vst.msk [vmem:[%s302 + $0x18] sm:$0xff] %vm1080, %v1075
      %s1085 = smul.u32 4, %s18
      %p1086 = scmp.lt.s32.totalorder %s1085, 7
      %s1087 = scalar_select %p1086, %s1085, 7
      %s1088 = smul.addr %s1087, 8
      %s1089 = scalar_lea.vmem %s7, %s1088
      // Predicated region
      $region49: #{gat_forward.5} parent=47 // pred_check
        %p1090 = pneg %p193
      $region50: #{gat_forward.5} parent=47 // pred_check_branch
        %1092 = sbr.rel (%p1090) target = $region52
      $region51: #{gat_forward.5} parent=47 // pred_region
        %s1093 = smul.u32 4, %s18
      $region52: #{gat_forward.5} parent=47 // pred_fallthru
        _
    $region48: #{gat_forward.5} parent=5 // pred_fallthru
      _
    %p1094 = scmp.le.s32.totalorder 2, %s13
    // Predicated region
    $region53: #{gat_forward.5} parent=5 // pred_check
      %p1095 = pneg %p1094
    $region54: #{gat_forward.5} parent=5 // pred_check_branch
      %1097 = sbr.rel (%p1095) target = $region56
    $region55: #{gat_forward.5} parent=5 // pred_region
      %s1098 = ssub.s32 %s13, 2
      // Predicated region
      $region57: #{gat_forward.5} parent=55 // pred_check
        %p1099 = pneg %p199
      $region58: #{gat_forward.5} parent=55 // pred_check_branch
        %1101 = sbr.rel (%p1099) target = $region60
      $region59: #{gat_forward.5} parent=55 // pred_region
        %s1102 = smul.u32 4, %s19
        %p1103 = scmp.lt.s32.totalorder %s1102, 7
        %s1104 = scalar_select %p1103, %s1102, 7
        %s1105 = smul.addr %s1104, 8
        %s1106 = scalar_lea.vmem %s7, %s1105
      $region60: #{gat_forward.5} parent=55 // pred_fallthru
        _
    $region56: #{gat_forward.5} parent=5 // pred_fallthru
      _
  $region6: #{gat_forward.5} parent=0 // loop_footer
    %s17 = sadd.s32 1, %s13
  $region7: #{gat_forward.5} parent=0 // loop_footer_branch
    %12 = sbr.rel target = $region3
  $region8: #{gat_forward.5} parent=0 // loop_exit
    _

</llo_original>
